<compile_context>
chip_gen: v5e
topology: v5e:2x2
jax: 0.10.0
libtpu: 0.0.40
codegen_flags: <defaults>
</compile_context>

<pallas_src>
import functools
import math

import jax
import jax.numpy as jnp
from jax.experimental import pallas as pl
from jax.experimental.pallas import tpu as pltpu

_LOG_2PI = math.log(2.0 * math.pi)


# ----------------------------------------------------------------------------
# Pallas kernel: fused conditional-affine flow step + logdet + prior log-prob
# ----------------------------------------------------------------------------
def _cond_affine_kernel(x_ref, c_ref, ws_ref, bs_ref, wt_ref, bt_ref,
                        y_ref, ld_ref, lp_ref, *, n_split):
    """One (batch, spatial-tile) step.

    x_ref : (1, C,  TS)  data   (channels on sublanes, spatial on lanes)
    c_ref : (1, Cc, TS)  conditioning
    ws/bs : (C, Cc)/(C,1) projection producing raw log-scale
    wt/bt : (C, Cc)/(C,1) projection producing shift
    y_ref : (1, C,  TS)  transformed output (lane-dense store)
    ld_ref: (1, 1, 1)    per-batch logdet accumulator (accumulated over s tiles)
    lp_ref: (1, 1, 1)    per-batch N(0,1) log-prob accumulator over the first
                         `n_split` channels of y (the h_split half)
    """
    s_idx = pl.program_id(1)

    x = x_ref[0]          # (C, TS)
    cond = c_ref[0]       # (Cc, TS)

    # 1x1-conv projections; spatial dim (large) is the MXU N / lane dimension.
    raw_s = jnp.dot(ws_ref[...], cond, preferred_element_type=jnp.float32) + bs_ref[...]
    shift = jnp.dot(wt_ref[...], cond, preferred_element_type=jnp.float32) + bt_ref[...]

    log_s = jnp.tanh(raw_s) * 0.5          # bounded log-scale (EUP), invertible
    y = x * jnp.exp(log_s) + shift
    y_ref[0] = y.astype(y_ref.dtype)

    # In-kernel reductions to per-batch scalars.
    ld_tile = jnp.sum(log_s)
    y_split = y[:n_split, :]
    ts = y.shape[1]
    lp_tile = -0.5 * jnp.sum(y_split * y_split) - 0.5 * _LOG_2PI * (n_split * ts)

    @pl.when(s_idx == 0)
    def _():
        ld_ref[...] = jnp.zeros_like(ld_ref)
        lp_ref[...] = jnp.zeros_like(lp_ref)

    ld_ref[...] += ld_tile
    lp_ref[...] += lp_tile


def _spatial_tile(s):
    """Largest lane-dense tile that divides S; otherwise take the full axis."""
    for t in (1024, 512, 256, 128):
        if s % t == 0 and s >= t:
            return t
    # TODO(synk): pad/mask path for large S not divisible by 128 (demo sizes fit).
    return s


def cond_affine_step(params, x_bcs, cond_bcs, n_split):
    """Fused flow step on (B, C, S) data / (B, Cc, S) conditioning.

    Returns (y (B,C,S), logdet (B,), logprob_of_first_n_split_channels (B,)).
    """
    B, C, S = x_bcs.shape
    Cc = cond_bcs.shape[1]
    TS = _spatial_tile(S)
    grid = (B, S // TS)

    cost = pl.CostEstimate(
        flops=B * S * (4 * C * Cc + 8 * C),
        transcendentals=2 * B * C * S,
        bytes_accessed=4 * (B * S * (2 * C + Cc) + 2 * C * (Cc + 1) + 2 * B),
    )

    y, ld, lp = pl.pallas_call(
        functools.partial(_cond_affine_kernel, n_split=n_split),
        out_shape=(
            jax.ShapeDtypeStruct((B, C, S), jnp.float32),
            jax.ShapeDtypeStruct((B, 1, 1), jnp.float32),
            jax.ShapeDtypeStruct((B, 1, 1), jnp.float32),
        ),
        grid=grid,
        in_specs=[
            pl.BlockSpec((1, C, TS), lambda b, s: (b, 0, s)),
            pl.BlockSpec((1, Cc, TS), lambda b, s: (b, 0, s)),
            pl.BlockSpec((C, Cc), lambda b, s: (0, 0)),
            pl.BlockSpec((C, 1), lambda b, s: (0, 0)),
            pl.BlockSpec((C, Cc), lambda b, s: (0, 0)),
            pl.BlockSpec((C, 1), lambda b, s: (0, 0)),
        ],
        out_specs=(
            pl.BlockSpec((1, C, TS), lambda b, s: (b, 0, s)),
            pl.BlockSpec((1, 1, 1), lambda b, s: (b, 0, 0)),   # logdet accumulator
            pl.BlockSpec((1, 1, 1), lambda b, s: (b, 0, 0)),   # logprob accumulator
        ),
        compiler_params=pltpu.CompilerParams(
            dimension_semantics=("parallel", "arbitrary")),
        cost_estimate=cost,
    )(x_bcs, cond_bcs, params["ws"], params["bs"], params["wt"], params["bt"])
    return y, ld.reshape(B), lp.reshape(B)


# ----------------------------------------------------------------------------
# Glue: squeeze and flow-step wrappers (all NCHW, no transposes)
# ----------------------------------------------------------------------------
def _squeeze2d(x):
    # (B, C, H, W) -> (B, 4C, H//2, W//2), same channel ordering as PyTorch ref.
    B, C, H, W = x.shape
    x = x.reshape(B, C, H // 2, 2, W // 2, 2)
    x = jnp.transpose(x, (0, 1, 3, 5, 2, 4))
    return x.reshape(B, C * 4, H // 2, W // 2)


def _flow_step(params, x_nchw, cond_nchw, n_split):
    B, C, H, W = x_nchw.shape
    Cc = cond_nchw.shape[1]
    y, ld, lp = cond_affine_step(
        params,
        x_nchw.reshape(B, C, H * W),          # metadata-only reshape
        cond_nchw.reshape(B, Cc, H * W),
        n_split)
    return y.reshape(B, C, H, W), ld, lp


def _encode_impl(scale_flows, L, D, logdet):
    scales = len(L)
    B = L[0].shape[0]
    logprob = jnp.zeros((B,), jnp.float32)
    logdet = jnp.asarray(logdet, jnp.float32) + jnp.zeros((B,), jnp.float32)
    z = []
    for i in range(scales):
        z_horizontal = []
        if i == scales - 1:
            C = L[i].shape[1]
            h_split, ld, lp = _flow_step(scale_flows[i][0], L[i], D[i], n_split=C)
            logdet = logdet + ld
            logprob = logprob + lp
            z_horizontal.append(h_split)
        else:
            C = L[i].shape[1]
            y, ld, lp = _flow_step(scale_flows[i][0], L[i], D[i], n_split=C // 2)
            logdet = logdet + ld
            logprob = logprob + lp
            h_split, h_pass = jnp.split(y, 2, axis=1)
            z_horizontal.append(h_split)
            for j in range(i + 1, scales):
                x = _squeeze2d(h_pass)
                cond = jnp.concatenate([L[j], D[j]], axis=1)
                Cx = x.shape[1]
                n_split = Cx if j == scales - 1 else Cx // 2
                y, ld, lp = _flow_step(scale_flows[i][j - i], x, cond, n_split)
                logdet = logdet + ld
                logprob = logprob + lp
                if j == scales - 1:
                    z_horizontal.append(y)
                else:
                    h_split, h_pass = jnp.split(y, 2, axis=1)
                    z_horizontal.append(h_split)
        z.append(z_horizontal)
    return z, logprob, logdet


# ----------------------------------------------------------------------------
# UnsharedConditionalFlow
# ----------------------------------------------------------------------------
class UnsharedConditionalFlow:
    def __init__(self, channels, dim, resolution, scales, key):
        self.dim = dim
        self.scales = scales
        self.top_channels = 2 ** (dim - 1) * channels
        self.top_resolution = [x // 2 for x in resolution]

        self.scale_flows = []
        for scale in range(scales):
            scale_flow = []
            gi_c = self.calculate_scale_channels(dim, scale, "g_I")
            key, sub = jax.random.split(key)
            # g_I: x channels = gi_c, cond channels = channels of D[scale] = gi_c
            scale_flow.append(self._make_affine_params(sub, gi_c, gi_c))
            if scale < scales - 1:
                for cs in range(scale + 1, scales):
                    gs_c = self.calculate_scale_channels(dim, cs, "g_S")
                    cond_c = 2 * self.calculate_scale_channels(dim, cs, "g_I")
                    key, sub = jax.random.split(key)
                    scale_flow.append(self._make_affine_params(sub, gs_c, cond_c))
            self.scale_flows.append(scale_flow)

        self._encode_jit = jax.jit(_encode_impl)

    @staticmethod
    def _make_affine_params(key, c_x, c_cond):
        ks, kbs, kt, kbt = jax.random.split(key, 4)
        return {
            "ws": 0.05 * jax.random.normal(ks, (c_x, c_cond), dtype=jnp.float32),
            "bs": 0.05 * jax.random.normal(kbs, (c_x, 1), dtype=jnp.float32),
            "wt": 0.05 * jax.random.normal(kt, (c_x, c_cond), dtype=jnp.float32),
            "bt": 0.05 * jax.random.normal(kbt, (c_x, 1), dtype=jnp.float32),
        }

    def calculate_scale_resolution(self, scale):
        return tuple(x // 2 ** scale for x in self.top_resolution)

    def calculate_scale_channels(self, dim, scale, flow_type="g_I"):
        if scale < self.scales - 1:
            return 2 ** ((dim - 1) * scale) * self.top_channels
        elif scale == self.scales - 1:
            if flow_type == "g_I":
                return 2 ** ((dim - 1) * (scale - 1)) * 2 ** dim * self.top_channels
            elif flow_type == "g_S":
                return 2 ** ((dim - 1) * scale) * self.top_channels

    def forward(self, L=(), z=(), D=(), logdet=0.0, reverse=False):
        if reverse:
            # TODO(synk): decode/reverse path not implemented (forward/encode only).
            raise NotImplementedError("reverse=True (decode) not implemented")
        return self.encode(L=L, D=D, logdet=logdet)

    def encode(self, L, D, logdet):
        return self._encode_jit(self.scale_flows, tuple(L), tuple(D), logdet)


# ----------------------------------------------------------------------------
# Demo
# ----------------------------------------------------------------------------
if __name__ == "__main__":
    B = 2
    channels = 2
    dim = 2
    resolution = (16, 16)
    scales = 3

    flow = UnsharedConditionalFlow(channels, dim, resolution, scales,
                                   key=jax.random.PRNGKey(42))

    # Build multi-scale inputs L[i], D[i] (NCHW), shapes implied by the module.
    key = jax.random.PRNGKey(0)
    L, D = [], []
    for s in range(scales):
        c = flow.calculate_scale_channels(dim, s, "g_I")
        h, w = flow.calculate_scale_resolution(s)
        key, k1, k2 = jax.random.split(key, 3)
        L.append(jax.random.normal(k1, (B, c, h, w), dtype=jnp.float32))
        D.append(jax.random.normal(k2, (B, c, h, w), dtype=jnp.float32))

    z, logprob, logdet = flow.forward(L=L, D=D,
                                      logdet=jnp.zeros((B,), jnp.float32),
                                      reverse=False)

    # Block on all results.
    for zh in z:
        for zz in zh:
            jax.block_until_ready(zz)
    jax.block_until_ready(logprob)
    jax.block_until_ready(logdet)

    assert logprob.shape == (B,) and logdet.shape == (B,)
    assert jnp.all(jnp.isfinite(logprob)) and jnp.all(jnp.isfinite(logdet))
    # Sanity: number of z tensors per scale matches the reference control flow.
    assert [len(zh) for zh in z] == [scales - i for i in range(scales)]
    print("KERNEL_OK")
</pallas_src>

<mosaic_0001>
module attributes {stable_mosaic.version = 11 : i64} {
  func.func @_cond_affine_kernel(%arg0: i32, %arg1: i32, %arg2: memref<1x4x64xf32, #tpu.memory_space<vmem>>, %arg3: memref<1x4x64xf32, #tpu.memory_space<vmem>>, %arg4: memref<4x4xf32, #tpu.memory_space<vmem>>, %arg5: memref<4x1xf32, #tpu.memory_space<vmem>>, %arg6: memref<4x4xf32, #tpu.memory_space<vmem>>, %arg7: memref<4x1xf32, #tpu.memory_space<vmem>>, %arg8: memref<1x4x64xf32, #tpu.memory_space<vmem>>, %arg9: memref<1x1x1xf32, #tpu.memory_space<vmem>>, %arg10: memref<1x1x1xf32, #tpu.memory_space<vmem>>) attributes {dimension_semantics = [#tpu.dimension_semantics<parallel>, #tpu.dimension_semantics<arbitrary>], iteration_bounds = array<i64: 2, 1>, scalar_prefetch = 0 : i64, scratch_operands = 0 : i64, tpu.core_type = #tpu.core_type<tc>, window_params = [{transform_indices = @transform_0, window_bounds = array<i64: 1, 4, 64>}, {transform_indices = @transform_1, window_bounds = array<i64: 1, 4, 64>}, {pipeline_mode = #tpu.pipeline_mode<synchronous>, transform_indices = @transform_2, window_bounds = array<i64: 4, 4>}, {pipeline_mode = #tpu.pipeline_mode<synchronous>, transform_indices = @transform_3, window_bounds = array<i64: 4, 1>}, {pipeline_mode = #tpu.pipeline_mode<synchronous>, transform_indices = @transform_4, window_bounds = array<i64: 4, 4>}, {pipeline_mode = #tpu.pipeline_mode<synchronous>, transform_indices = @transform_5, window_bounds = array<i64: 4, 1>}, {transform_indices = @transform_6, window_bounds = array<i64: 1, 4, 64>}, {transform_indices = @transform_7, window_bounds = array<i64: 1, 1, 1>}, {transform_indices = @transform_8, window_bounds = array<i64: 1, 1, 1>}]} {
    %c0 = arith.constant 0 : index
    %c0_0 = arith.constant 0 : index
    %c0_1 = arith.constant 0 : index
    %0 = vector.load %arg2[%c0, %c0_0, %c0_1] : memref<1x4x64xf32, #tpu.memory_space<vmem>>, vector<1x4x64xf32>
    %1 = vector.shape_cast %0 : vector<1x4x64xf32> to vector<4x64xf32>
    %c0_2 = arith.constant 0 : index
    %c0_3 = arith.constant 0 : index
    %c0_4 = arith.constant 0 : index
    %2 = vector.load %arg3[%c0_2, %c0_3, %c0_4] : memref<1x4x64xf32, #tpu.memory_space<vmem>>, vector<1x4x64xf32>
    %3 = vector.shape_cast %2 : vector<1x4x64xf32> to vector<4x64xf32>
    %c0_5 = arith.constant 0 : index
    %c0_6 = arith.constant 0 : index
    %4 = vector.load %arg4[%c0_5, %c0_6] : memref<4x4xf32, #tpu.memory_space<vmem>>, vector<4x4xf32>
    %cst = arith.constant dense<0.000000e+00> : vector<4x64xf32>
    %5 = tpu.matmul %4, %3, %cst {dimension_numbers = #tpu.dot_dimension_numbers<[1], [0], [0], [1], [0, 0, 1, 1], [], []>} : vector<4x4xf32>, vector<4x64xf32>, vector<4x64xf32> -> vector<4x64xf32>
    %c0_7 = arith.constant 0 : index
    %c0_8 = arith.constant 0 : index
    %6 = vector.load %arg5[%c0_7, %c0_8] : memref<4x1xf32, #tpu.memory_space<vmem>>, vector<4x1xf32>
    %7 = vector.broadcast %6 : vector<4x1xf32> to vector<4x64xf32>
    %8 = arith.addf %5, %7 : vector<4x64xf32>
    %c0_9 = arith.constant 0 : index
    %c0_10 = arith.constant 0 : index
    %9 = vector.load %arg6[%c0_9, %c0_10] : memref<4x4xf32, #tpu.memory_space<vmem>>, vector<4x4xf32>
    %cst_11 = arith.constant dense<0.000000e+00> : vector<4x64xf32>
    %10 = tpu.matmul %9, %3, %cst_11 {dimension_numbers = #tpu.dot_dimension_numbers<[1], [0], [0], [1], [0, 0, 1, 1], [], []>} : vector<4x4xf32>, vector<4x64xf32>, vector<4x64xf32> -> vector<4x64xf32>
    %c0_12 = arith.constant 0 : index
    %c0_13 = arith.constant 0 : index
    %11 = vector.load %arg7[%c0_12, %c0_13] : memref<4x1xf32, #tpu.memory_space<vmem>>, vector<4x1xf32>
    %12 = vector.broadcast %11 : vector<4x1xf32> to vector<4x64xf32>
    %13 = arith.addf %10, %12 : vector<4x64xf32>
    %14 = math.tanh %8 : vector<4x64xf32>
    %cst_14 = arith.constant 5.000000e-01 : f32
    %15 = vector.broadcast %cst_14 : f32 to vector<4x64xf32>
    %16 = arith.mulf %14, %15 : vector<4x64xf32>
    %17 = math.exp %16 : vector<4x64xf32>
    %18 = arith.mulf %1, %17 : vector<4x64xf32>
    %19 = arith.addf %18, %13 : vector<4x64xf32>
    %c0_15 = arith.constant 0 : index
    %c0_16 = arith.constant 0 : index
    %c0_17 = arith.constant 0 : index
    %20 = vector.load %arg8[%c0_15, %c0_16, %c0_17] : memref<1x4x64xf32, #tpu.memory_space<vmem>>, vector<1x4x64xf32>
    %21 = vector.shape_cast %20 : vector<1x4x64xf32> to vector<4x64xf32>
    %22 = vector.shape_cast %19 : vector<4x64xf32> to vector<1x4x64xf32>
    tpu.vector_store %arg8[%c0_15, %c0_16, %c0_17], %22 {strides = array<i32>} : memref<1x4x64xf32, #tpu.memory_space<vmem>>, vector<1x4x64xf32>,
    %23 = vector.shape_cast %16 : vector<4x64xf32> to vector<1x4x64xf32>
    %cst_18 = arith.constant dense<0.000000e+00> : vector<1xf32>
    %24 = vector.multi_reduction <add>, %23, %cst_18 [1, 2] : vector<1x4x64xf32> to vector<1xf32>
    %25 = vector.shape_cast %24 : vector<1xf32> to vector<1x1x1xf32>
    %26 = vector.extract %25[0, 0, 0] : f32 from vector<1x1x1xf32>
    %27 = vector.extract_strided_slice %19 {offsets = [0, 0], sizes = [2, 64], strides = [1, 1]} : vector<4x64xf32> to vector<2x64xf32>
    %28 = arith.mulf %27, %27 : vector<2x64xf32>
    %29 = vector.shape_cast %28 : vector<2x64xf32> to vector<1x2x64xf32>
    %cst_19 = arith.constant dense<0.000000e+00> : vector<1xf32>
    %30 = vector.multi_reduction <add>, %29, %cst_19 [1, 2] : vector<1x2x64xf32> to vector<1xf32>
    %31 = vector.shape_cast %30 : vector<1xf32> to vector<1x1x1xf32>
    %32 = vector.extract %31[0, 0, 0] : f32 from vector<1x1x1xf32>
    %cst_20 = arith.constant -5.000000e-01 : f32
    %33 = arith.mulf %cst_20, %32 : f32
    %cst_21 = arith.constant 117.62413 : f32
    %34 = arith.subf %33, %cst_21 : f32
    %c0_i32 = arith.constant 0 : i32
    %35 = arith.cmpi eq, %arg1, %c0_i32 : i32
    %36 = arith.extui %35 : i1 to i32
    %c0_i32_22 = arith.constant 0 : i32
    %37 = arith.cmpi ne, %36, %c0_i32_22 : i32
    scf.if %37 {
      %cst_35 = arith.constant 0.000000e+00 : f32
      %46 = vector.broadcast %cst_35 : f32 to vector<1x1x1xf32>
      %c0_36 = arith.constant 0 : index
      %c0_37 = arith.constant 0 : index
      %c0_38 = arith.constant 0 : index
      %47 = vector.load %arg9[%c0_36, %c0_37, %c0_38] : memref<1x1x1xf32, #tpu.memory_space<vmem>>, vector<1x1x1xf32>
      tpu.vector_store %arg9[%c0_36, %c0_37, %c0_38], %46 {strides = array<i32>} : memref<1x1x1xf32, #tpu.memory_space<vmem>>, vector<1x1x1xf32>,
      %cst_39 = arith.constant 0.000000e+00 : f32
      %48 = vector.broadcast %cst_39 : f32 to vector<1x1x1xf32>
      %c0_40 = arith.constant 0 : index
      %c0_41 = arith.constant 0 : index
      %c0_42 = arith.constant 0 : index
      %49 = vector.load %arg10[%c0_40, %c0_41, %c0_42] : memref<1x1x1xf32, #tpu.memory_space<vmem>>, vector<1x1x1xf32>
      tpu.vector_store %arg10[%c0_40, %c0_41, %c0_42], %48 {strides = array<i32>} : memref<1x1x1xf32, #tpu.memory_space<vmem>>, vector<1x1x1xf32>,
    } else {
    }
    %c0_23 = arith.constant 0 : index
    %c0_24 = arith.constant 0 : index
    %c0_25 = arith.constant 0 : index
    %38 = vector.load %arg9[%c0_23, %c0_24, %c0_25] : memref<1x1x1xf32, #tpu.memory_space<vmem>>, vector<1x1x1xf32>
    %39 = vector.broadcast %26 : f32 to vector<1x1x1xf32>
    %40 = arith.addf %38, %39 : vector<1x1x1xf32>
    %c0_26 = arith.constant 0 : index
    %c0_27 = arith.constant 0 : index
    %c0_28 = arith.constant 0 : index
    %41 = vector.load %arg9[%c0_26, %c0_27, %c0_28] : memref<1x1x1xf32, #tpu.memory_space<vmem>>, vector<1x1x1xf32>
    tpu.vector_store %arg9[%c0_26, %c0_27, %c0_28], %40 {strides = array<i32>} : memref<1x1x1xf32, #tpu.memory_space<vmem>>, vector<1x1x1xf32>,
    %c0_29 = arith.constant 0 : index
    %c0_30 = arith.constant 0 : index
    %c0_31 = arith.constant 0 : index
    %42 = vector.load %arg10[%c0_29, %c0_30, %c0_31] : memref<1x1x1xf32, #tpu.memory_space<vmem>>, vector<1x1x1xf32>
    %43 = vector.broadcast %34 : f32 to vector<1x1x1xf32>
    %44 = arith.addf %42, %43 : vector<1x1x1xf32>
    %c0_32 = arith.constant 0 : index
    %c0_33 = arith.constant 0 : index
    %c0_34 = arith.constant 0 : index
    %45 = vector.load %arg10[%c0_32, %c0_33, %c0_34] : memref<1x1x1xf32, #tpu.memory_space<vmem>>, vector<1x1x1xf32>
    tpu.vector_store %arg10[%c0_32, %c0_33, %c0_34], %44 {strides = array<i32>} : memref<1x1x1xf32, #tpu.memory_space<vmem>>, vector<1x1x1xf32>,
    return
  }
  func.func @transform_0(%arg0: i32, %arg1: i32) -> (i32, i32, i32) {
    %c0_i32 = arith.constant 0 : i32
    %c0_i32_0 = arith.constant 0 : i32
    return %arg0, %c0_i32, %arg1 : i32, i32, i32
  }
  func.func @transform_1(%arg0: i32, %arg1: i32) -> (i32, i32, i32) {
    %c0_i32 = arith.constant 0 : i32
    %c0_i32_0 = arith.constant 0 : i32
    return %arg0, %c0_i32, %arg1 : i32, i32, i32
  }
  func.func @transform_2(%arg0: i32, %arg1: i32) -> (i32, i32) {
    %c0_i32 = arith.constant 0 : i32
    %c0_i32_0 = arith.constant 0 : i32
    %c0_i32_1 = arith.constant 0 : i32
    return %c0_i32, %c0_i32_0 : i32, i32
  }
  func.func @transform_3(%arg0: i32, %arg1: i32) -> (i32, i32) {
    %c0_i32 = arith.constant 0 : i32
    %c0_i32_0 = arith.constant 0 : i32
    %c0_i32_1 = arith.constant 0 : i32
    return %c0_i32, %c0_i32_0 : i32, i32
  }
  func.func @transform_4(%arg0: i32, %arg1: i32) -> (i32, i32) {
    %c0_i32 = arith.constant 0 : i32
    %c0_i32_0 = arith.constant 0 : i32
    %c0_i32_1 = arith.constant 0 : i32
    return %c0_i32, %c0_i32_0 : i32, i32
  }
  func.func @transform_5(%arg0: i32, %arg1: i32) -> (i32, i32) {
    %c0_i32 = arith.constant 0 : i32
    %c0_i32_0 = arith.constant 0 : i32
    %c0_i32_1 = arith.constant 0 : i32
    return %c0_i32, %c0_i32_0 : i32, i32
  }
  func.func @transform_6(%arg0: i32, %arg1: i32) -> (i32, i32, i32) {
    %c0_i32 = arith.constant 0 : i32
    %c0_i32_0 = arith.constant 0 : i32
    return %arg0, %c0_i32, %arg1 : i32, i32, i32
  }
  func.func @transform_7(%arg0: i32, %arg1: i32) -> (i32, i32, i32) {
    %c0_i32 = arith.constant 0 : i32
    %c0_i32_0 = arith.constant 0 : i32
    %c0_i32_1 = arith.constant 0 : i32
    return %arg0, %c0_i32, %c0_i32_0 : i32, i32, i32
  }
  func.func @transform_8(%arg0: i32, %arg1: i32) -> (i32, i32, i32) {
    %c0_i32 = arith.constant 0 : i32
    %c0_i32_0 = arith.constant 0 : i32
    %c0_i32_1 = arith.constant 0 : i32
    return %arg0, %c0_i32, %c0_i32_0 : i32, i32, i32
  }
}

module attributes {stable_mosaic.version = 11 : i64} {
  func.func @_cond_affine_kernel(%arg0: i32, %arg1: i32, %arg2: memref<1x8x16xf32, #tpu.memory_space<vmem>>, %arg3: memref<1x16x16xf32, #tpu.memory_space<vmem>>, %arg4: memref<8x16xf32, #tpu.memory_space<vmem>>, %arg5: memref<8x1xf32, #tpu.memory_space<vmem>>, %arg6: memref<8x16xf32, #tpu.memory_space<vmem>>, %arg7: memref<8x1xf32, #tpu.memory_space<vmem>>, %arg8: memref<1x8x16xf32, #tpu.memory_space<vmem>>, %arg9: memref<1x1x1xf32, #tpu.memory_space<vmem>>, %arg10: memref<1x1x1xf32, #tpu.memory_space<vmem>>) attributes {dimension_semantics = [#tpu.dimension_semantics<parallel>, #tpu.dimension_semantics<arbitrary>], iteration_bounds = array<i64: 2, 1>, scalar_prefetch = 0 : i64, scratch_operands = 0 : i64, tpu.core_type = #tpu.core_type<tc>, window_params = [{transform_indices = @transform_0, window_bounds = array<i64: 1, 8, 16>}, {transform_indices = @transform_1, window_bounds = array<i64: 1, 16, 16>}, {pipeline_mode = #tpu.pipeline_mode<synchronous>, transform_indices = @transform_2, window_bounds = array<i64: 8, 16>}, {pipeline_mode = #tpu.pipeline_mode<synchronous>, transform_indices = @transform_3, window_bounds = array<i64: 8, 1>}, {pipeline_mode = #tpu.pipeline_mode<synchronous>, transform_indices = @transform_4, window_bounds = array<i64: 8, 16>}, {pipeline_mode = #tpu.pipeline_mode<synchronous>, transform_indices = @transform_5, window_bounds = array<i64: 8, 1>}, {transform_indices = @transform_6, window_bounds = array<i64: 1, 8, 16>}, {transform_indices = @transform_7, window_bounds = array<i64: 1, 1, 1>}, {transform_indices = @transform_8, window_bounds = array<i64: 1, 1, 1>}]} {
    %c0 = arith.constant 0 : index
    %c0_0 = arith.constant 0 : index
    %c0_1 = arith.constant 0 : index
    %0 = vector.load %arg2[%c0, %c0_0, %c0_1] : memref<1x8x16xf32, #tpu.memory_space<vmem>>, vector<1x8x16xf32>
    %1 = vector.shape_cast %0 : vector<1x8x16xf32> to vector<8x16xf32>
    %c0_2 = arith.constant 0 : index
    %c0_3 = arith.constant 0 : index
    %c0_4 = arith.constant 0 : index
    %2 = vector.load %arg3[%c0_2, %c0_3, %c0_4] : memref<1x16x16xf32, #tpu.memory_space<vmem>>, vector<1x16x16xf32>
    %3 = vector.shape_cast %2 : vector<1x16x16xf32> to vector<16x16xf32>
    %c0_5 = arith.constant 0 : index
    %c0_6 = arith.constant 0 : index
    %4 = vector.load %arg4[%c0_5, %c0_6] : memref<8x16xf32, #tpu.memory_space<vmem>>, vector<8x16xf32>
    %cst = arith.constant dense<0.000000e+00> : vector<8x16xf32>
    %5 = tpu.matmul %4, %3, %cst {dimension_numbers = #tpu.dot_dimension_numbers<[1], [0], [0], [1], [0, 0, 1, 1], [], []>} : vector<8x16xf32>, vector<16x16xf32>, vector<8x16xf32> -> vector<8x16xf32>
    %c0_7 = arith.constant 0 : index
    %c0_8 = arith.constant 0 : index
    %6 = vector.load %arg5[%c0_7, %c0_8] : memref<8x1xf32, #tpu.memory_space<vmem>>, vector<8x1xf32>
    %7 = vector.broadcast %6 : vector<8x1xf32> to vector<8x16xf32>
    %8 = arith.addf %5, %7 : vector<8x16xf32>
    %c0_9 = arith.constant 0 : index
    %c0_10 = arith.constant 0 : index
    %9 = vector.load %arg6[%c0_9, %c0_10] : memref<8x16xf32, #tpu.memory_space<vmem>>, vector<8x16xf32>
    %cst_11 = arith.constant dense<0.000000e+00> : vector<8x16xf32>
    %10 = tpu.matmul %9, %3, %cst_11 {dimension_numbers = #tpu.dot_dimension_numbers<[1], [0], [0], [1], [0, 0, 1, 1], [], []>} : vector<8x16xf32>, vector<16x16xf32>, vector<8x16xf32> -> vector<8x16xf32>
    %c0_12 = arith.constant 0 : index
    %c0_13 = arith.constant 0 : index
    %11 = vector.load %arg7[%c0_12, %c0_13] : memref<8x1xf32, #tpu.memory_space<vmem>>, vector<8x1xf32>
    %12 = vector.broadcast %11 : vector<8x1xf32> to vector<8x16xf32>
    %13 = arith.addf %10, %12 : vector<8x16xf32>
    %14 = math.tanh %8 : vector<8x16xf32>
    %cst_14 = arith.constant 5.000000e-01 : f32
    %15 = vector.broadcast %cst_14 : f32 to vector<8x16xf32>
    %16 = arith.mulf %14, %15 : vector<8x16xf32>
    %17 = math.exp %16 : vector<8x16xf32>
    %18 = arith.mulf %1, %17 : vector<8x16xf32>
    %19 = arith.addf %18, %13 : vector<8x16xf32>
    %c0_15 = arith.constant 0 : index
    %c0_16 = arith.constant 0 : index
    %c0_17 = arith.constant 0 : index
    %20 = vector.load %arg8[%c0_15, %c0_16, %c0_17] : memref<1x8x16xf32, #tpu.memory_space<vmem>>, vector<1x8x16xf32>
    %21 = vector.shape_cast %20 : vector<1x8x16xf32> to vector<8x16xf32>
    %22 = vector.shape_cast %19 : vector<8x16xf32> to vector<1x8x16xf32>
    tpu.vector_store %arg8[%c0_15, %c0_16, %c0_17], %22 {strides = array<i32>} : memref<1x8x16xf32, #tpu.memory_space<vmem>>, vector<1x8x16xf32>,
    %23 = vector.shape_cast %16 : vector<8x16xf32> to vector<1x8x16xf32>
    %cst_18 = arith.constant dense<0.000000e+00> : vector<1xf32>
    %24 = vector.multi_reduction <add>, %23, %cst_18 [1, 2] : vector<1x8x16xf32> to vector<1xf32>
    %25 = vector.shape_cast %24 : vector<1xf32> to vector<1x1x1xf32>
    %26 = vector.extract %25[0, 0, 0] : f32 from vector<1x1x1xf32>
    %27 = vector.extract_strided_slice %19 {offsets = [0, 0], sizes = [4, 16], strides = [1, 1]} : vector<8x16xf32> to vector<4x16xf32>
    %28 = arith.mulf %27, %27 : vector<4x16xf32>
    %29 = vector.shape_cast %28 : vector<4x16xf32> to vector<1x4x16xf32>
    %cst_19 = arith.constant dense<0.000000e+00> : vector<1xf32>
    %30 = vector.multi_reduction <add>, %29, %cst_19 [1, 2] : vector<1x4x16xf32> to vector<1xf32>
    %31 = vector.shape_cast %30 : vector<1xf32> to vector<1x1x1xf32>
    %32 = vector.extract %31[0, 0, 0] : f32 from vector<1x1x1xf32>
    %cst_20 = arith.constant -5.000000e-01 : f32
    %33 = arith.mulf %cst_20, %32 : f32
    %cst_21 = arith.constant 58.8120651 : f32
    %34 = arith.subf %33, %cst_21 : f32
    %c0_i32 = arith.constant 0 : i32
    %35 = arith.cmpi eq, %arg1, %c0_i32 : i32
    %36 = arith.extui %35 : i1 to i32
    %c0_i32_22 = arith.constant 0 : i32
    %37 = arith.cmpi ne, %36, %c0_i32_22 : i32
    scf.if %37 {
      %cst_35 = arith.constant 0.000000e+00 : f32
      %46 = vector.broadcast %cst_35 : f32 to vector<1x1x1xf32>
      %c0_36 = arith.constant 0 : index
      %c0_37 = arith.constant 0 : index
      %c0_38 = arith.constant 0 : index
      %47 = vector.load %arg9[%c0_36, %c0_37, %c0_38] : memref<1x1x1xf32, #tpu.memory_space<vmem>>, vector<1x1x1xf32>
      tpu.vector_store %arg9[%c0_36, %c0_37, %c0_38], %46 {strides = array<i32>} : memref<1x1x1xf32, #tpu.memory_space<vmem>>, vector<1x1x1xf32>,
      %cst_39 = arith.constant 0.000000e+00 : f32
      %48 = vector.broadcast %cst_39 : f32 to vector<1x1x1xf32>
      %c0_40 = arith.constant 0 : index
      %c0_41 = arith.constant 0 : index
      %c0_42 = arith.constant 0 : index
      %49 = vector.load %arg10[%c0_40, %c0_41, %c0_42] : memref<1x1x1xf32, #tpu.memory_space<vmem>>, vector<1x1x1xf32>
      tpu.vector_store %arg10[%c0_40, %c0_41, %c0_42], %48 {strides = array<i32>} : memref<1x1x1xf32, #tpu.memory_space<vmem>>, vector<1x1x1xf32>,
    } else {
    }
    %c0_23 = arith.constant 0 : index
    %c0_24 = arith.constant 0 : index
    %c0_25 = arith.constant 0 : index
    %38 = vector.load %arg9[%c0_23, %c0_24, %c0_25] : memref<1x1x1xf32, #tpu.memory_space<vmem>>, vector<1x1x1xf32>
    %39 = vector.broadcast %26 : f32 to vector<1x1x1xf32>
    %40 = arith.addf %38, %39 : vector<1x1x1xf32>
    %c0_26 = arith.constant 0 : index
    %c0_27 = arith.constant 0 : index
    %c0_28 = arith.constant 0 : index
    %41 = vector.load %arg9[%c0_26, %c0_27, %c0_28] : memref<1x1x1xf32, #tpu.memory_space<vmem>>, vector<1x1x1xf32>
    tpu.vector_store %arg9[%c0_26, %c0_27, %c0_28], %40 {strides = array<i32>} : memref<1x1x1xf32, #tpu.memory_space<vmem>>, vector<1x1x1xf32>,
    %c0_29 = arith.constant 0 : index
    %c0_30 = arith.constant 0 : index
    %c0_31 = arith.constant 0 : index
    %42 = vector.load %arg10[%c0_29, %c0_30, %c0_31] : memref<1x1x1xf32, #tpu.memory_space<vmem>>, vector<1x1x1xf32>
    %43 = vector.broadcast %34 : f32 to vector<1x1x1xf32>
    %44 = arith.addf %42, %43 : vector<1x1x1xf32>
    %c0_32 = arith.constant 0 : index
    %c0_33 = arith.constant 0 : index
    %c0_34 = arith.constant 0 : index
    %45 = vector.load %arg10[%c0_32, %c0_33, %c0_34] : memref<1x1x1xf32, #tpu.memory_space<vmem>>, vector<1x1x1xf32>
    tpu.vector_store %arg10[%c0_32, %c0_33, %c0_34], %44 {strides = array<i32>} : memref<1x1x1xf32, #tpu.memory_space<vmem>>, vector<1x1x1xf32>,
    return
  }
  func.func @transform_0(%arg0: i32, %arg1: i32) -> (i32, i32, i32) {
    %c0_i32 = arith.constant 0 : i32
    %c0_i32_0 = arith.constant 0 : i32
    return %arg0, %c0_i32, %arg1 : i32, i32, i32
  }
  func.func @transform_1(%arg0: i32, %arg1: i32) -> (i32, i32, i32) {
    %c0_i32 = arith.constant 0 : i32
    %c0_i32_0 = arith.constant 0 : i32
    return %arg0, %c0_i32, %arg1 : i32, i32, i32
  }
  func.func @transform_2(%arg0: i32, %arg1: i32) -> (i32, i32) {
    %c0_i32 = arith.constant 0 : i32
    %c0_i32_0 = arith.constant 0 : i32
    %c0_i32_1 = arith.constant 0 : i32
    return %c0_i32, %c0_i32_0 : i32, i32
  }
  func.func @transform_3(%arg0: i32, %arg1: i32) -> (i32, i32) {
    %c0_i32 = arith.constant 0 : i32
    %c0_i32_0 = arith.constant 0 : i32
    %c0_i32_1 = arith.constant 0 : i32
    return %c0_i32, %c0_i32_0 : i32, i32
  }
  func.func @transform_4(%arg0: i32, %arg1: i32) -> (i32, i32) {
    %c0_i32 = arith.constant 0 : i32
    %c0_i32_0 = arith.constant 0 : i32
    %c0_i32_1 = arith.constant 0 : i32
    return %c0_i32, %c0_i32_0 : i32, i32
  }
  func.func @transform_5(%arg0: i32, %arg1: i32) -> (i32, i32) {
    %c0_i32 = arith.constant 0 : i32
    %c0_i32_0 = arith.constant 0 : i32
    %c0_i32_1 = arith.constant 0 : i32
    return %c0_i32, %c0_i32_0 : i32, i32
  }
  func.func @transform_6(%arg0: i32, %arg1: i32) -> (i32, i32, i32) {
    %c0_i32 = arith.constant 0 : i32
    %c0_i32_0 = arith.constant 0 : i32
    return %arg0, %c0_i32, %arg1 : i32, i32, i32
  }
  func.func @transform_7(%arg0: i32, %arg1: i32) -> (i32, i32, i32) {
    %c0_i32 = arith.constant 0 : i32
    %c0_i32_0 = arith.constant 0 : i32
    %c0_i32_1 = arith.constant 0 : i32
    return %arg0, %c0_i32, %c0_i32_0 : i32, i32, i32
  }
  func.func @transform_8(%arg0: i32, %arg1: i32) -> (i32, i32, i32) {
    %c0_i32 = arith.constant 0 : i32
    %c0_i32_0 = arith.constant 0 : i32
    %c0_i32_1 = arith.constant 0 : i32
    return %arg0, %c0_i32, %c0_i32_0 : i32, i32, i32
  }
}

module attributes {stable_mosaic.version = 11 : i64} {
  func.func @_cond_affine_kernel(%arg0: i32, %arg1: i32, %arg2: memref<1x8x16xf32, #tpu.memory_space<vmem>>, %arg3: memref<1x8x16xf32, #tpu.memory_space<vmem>>, %arg4: memref<8x8xf32, #tpu.memory_space<vmem>>, %arg5: memref<8x1xf32, #tpu.memory_space<vmem>>, %arg6: memref<8x8xf32, #tpu.memory_space<vmem>>, %arg7: memref<8x1xf32, #tpu.memory_space<vmem>>, %arg8: memref<1x8x16xf32, #tpu.memory_space<vmem>>, %arg9: memref<1x1x1xf32, #tpu.memory_space<vmem>>, %arg10: memref<1x1x1xf32, #tpu.memory_space<vmem>>) attributes {dimension_semantics = [#tpu.dimension_semantics<parallel>, #tpu.dimension_semantics<arbitrary>], iteration_bounds = array<i64: 2, 1>, scalar_prefetch = 0 : i64, scratch_operands = 0 : i64, tpu.core_type = #tpu.core_type<tc>, window_params = [{transform_indices = @transform_0, window_bounds = array<i64: 1, 8, 16>}, {transform_indices = @transform_1, window_bounds = array<i64: 1, 8, 16>}, {pipeline_mode = #tpu.pipeline_mode<synchronous>, transform_indices = @transform_2, window_bounds = array<i64: 8, 8>}, {pipeline_mode = #tpu.pipeline_mode<synchronous>, transform_indices = @transform_3, window_bounds = array<i64: 8, 1>}, {pipeline_mode = #tpu.pipeline_mode<synchronous>, transform_indices = @transform_4, window_bounds = array<i64: 8, 8>}, {pipeline_mode = #tpu.pipeline_mode<synchronous>, transform_indices = @transform_5, window_bounds = array<i64: 8, 1>}, {transform_indices = @transform_6, window_bounds = array<i64: 1, 8, 16>}, {transform_indices = @transform_7, window_bounds = array<i64: 1, 1, 1>}, {transform_indices = @transform_8, window_bounds = array<i64: 1, 1, 1>}]} {
    %c0 = arith.constant 0 : index
    %c0_0 = arith.constant 0 : index
    %c0_1 = arith.constant 0 : index
    %0 = vector.load %arg2[%c0, %c0_0, %c0_1] : memref<1x8x16xf32, #tpu.memory_space<vmem>>, vector<1x8x16xf32>
    %1 = vector.shape_cast %0 : vector<1x8x16xf32> to vector<8x16xf32>
    %c0_2 = arith.constant 0 : index
    %c0_3 = arith.constant 0 : index
    %c0_4 = arith.constant 0 : index
    %2 = vector.load %arg3[%c0_2, %c0_3, %c0_4] : memref<1x8x16xf32, #tpu.memory_space<vmem>>, vector<1x8x16xf32>
    %3 = vector.shape_cast %2 : vector<1x8x16xf32> to vector<8x16xf32>
    %c0_5 = arith.constant 0 : index
    %c0_6 = arith.constant 0 : index
    %4 = vector.load %arg4[%c0_5, %c0_6] : memref<8x8xf32, #tpu.memory_space<vmem>>, vector<8x8xf32>
    %cst = arith.constant dense<0.000000e+00> : vector<8x16xf32>
    %5 = tpu.matmul %4, %3, %cst {dimension_numbers = #tpu.dot_dimension_numbers<[1], [0], [0], [1], [0, 0, 1, 1], [], []>} : vector<8x8xf32>, vector<8x16xf32>, vector<8x16xf32> -> vector<8x16xf32>
    %c0_7 = arith.constant 0 : index
    %c0_8 = arith.constant 0 : index
    %6 = vector.load %arg5[%c0_7, %c0_8] : memref<8x1xf32, #tpu.memory_space<vmem>>, vector<8x1xf32>
    %7 = vector.broadcast %6 : vector<8x1xf32> to vector<8x16xf32>
    %8 = arith.addf %5, %7 : vector<8x16xf32>
    %c0_9 = arith.constant 0 : index
    %c0_10 = arith.constant 0 : index
    %9 = vector.load %arg6[%c0_9, %c0_10] : memref<8x8xf32, #tpu.memory_space<vmem>>, vector<8x8xf32>
    %cst_11 = arith.constant dense<0.000000e+00> : vector<8x16xf32>
    %10 = tpu.matmul %9, %3, %cst_11 {dimension_numbers = #tpu.dot_dimension_numbers<[1], [0], [0], [1], [0, 0, 1, 1], [], []>} : vector<8x8xf32>, vector<8x16xf32>, vector<8x16xf32> -> vector<8x16xf32>
    %c0_12 = arith.constant 0 : index
    %c0_13 = arith.constant 0 : index
    %11 = vector.load %arg7[%c0_12, %c0_13] : memref<8x1xf32, #tpu.memory_space<vmem>>, vector<8x1xf32>
    %12 = vector.broadcast %11 : vector<8x1xf32> to vector<8x16xf32>
    %13 = arith.addf %10, %12 : vector<8x16xf32>
    %14 = math.tanh %8 : vector<8x16xf32>
    %cst_14 = arith.constant 5.000000e-01 : f32
    %15 = vector.broadcast %cst_14 : f32 to vector<8x16xf32>
    %16 = arith.mulf %14, %15 : vector<8x16xf32>
    %17 = math.exp %16 : vector<8x16xf32>
    %18 = arith.mulf %1, %17 : vector<8x16xf32>
    %19 = arith.addf %18, %13 : vector<8x16xf32>
    %c0_15 = arith.constant 0 : index
    %c0_16 = arith.constant 0 : index
    %c0_17 = arith.constant 0 : index
    %20 = vector.load %arg8[%c0_15, %c0_16, %c0_17] : memref<1x8x16xf32, #tpu.memory_space<vmem>>, vector<1x8x16xf32>
    %21 = vector.shape_cast %20 : vector<1x8x16xf32> to vector<8x16xf32>
    %22 = vector.shape_cast %19 : vector<8x16xf32> to vector<1x8x16xf32>
    tpu.vector_store %arg8[%c0_15, %c0_16, %c0_17], %22 {strides = array<i32>} : memref<1x8x16xf32, #tpu.memory_space<vmem>>, vector<1x8x16xf32>,
    %23 = vector.shape_cast %16 : vector<8x16xf32> to vector<1x8x16xf32>
    %cst_18 = arith.constant dense<0.000000e+00> : vector<1xf32>
    %24 = vector.multi_reduction <add>, %23, %cst_18 [1, 2] : vector<1x8x16xf32> to vector<1xf32>
    %25 = vector.shape_cast %24 : vector<1xf32> to vector<1x1x1xf32>
    %26 = vector.extract %25[0, 0, 0] : f32 from vector<1x1x1xf32>
    %27 = vector.extract_strided_slice %19 {offsets = [0, 0], sizes = [4, 16], strides = [1, 1]} : vector<8x16xf32> to vector<4x16xf32>
    %28 = arith.mulf %27, %27 : vector<4x16xf32>
    %29 = vector.shape_cast %28 : vector<4x16xf32> to vector<1x4x16xf32>
    %cst_19 = arith.constant dense<0.000000e+00> : vector<1xf32>
    %30 = vector.multi_reduction <add>, %29, %cst_19 [1, 2] : vector<1x4x16xf32> to vector<1xf32>
    %31 = vector.shape_cast %30 : vector<1xf32> to vector<1x1x1xf32>
    %32 = vector.extract %31[0, 0, 0] : f32 from vector<1x1x1xf32>
    %cst_20 = arith.constant -5.000000e-01 : f32
    %33 = arith.mulf %cst_20, %32 : f32
    %cst_21 = arith.constant 58.8120651 : f32
    %34 = arith.subf %33, %cst_21 : f32
    %c0_i32 = arith.constant 0 : i32
    %35 = arith.cmpi eq, %arg1, %c0_i32 : i32
    %36 = arith.extui %35 : i1 to i32
    %c0_i32_22 = arith.constant 0 : i32
    %37 = arith.cmpi ne, %36, %c0_i32_22 : i32
    scf.if %37 {
      %cst_35 = arith.constant 0.000000e+00 : f32
      %46 = vector.broadcast %cst_35 : f32 to vector<1x1x1xf32>
      %c0_36 = arith.constant 0 : index
      %c0_37 = arith.constant 0 : index
      %c0_38 = arith.constant 0 : index
      %47 = vector.load %arg9[%c0_36, %c0_37, %c0_38] : memref<1x1x1xf32, #tpu.memory_space<vmem>>, vector<1x1x1xf32>
      tpu.vector_store %arg9[%c0_36, %c0_37, %c0_38], %46 {strides = array<i32>} : memref<1x1x1xf32, #tpu.memory_space<vmem>>, vector<1x1x1xf32>,
      %cst_39 = arith.constant 0.000000e+00 : f32
      %48 = vector.broadcast %cst_39 : f32 to vector<1x1x1xf32>
      %c0_40 = arith.constant 0 : index
      %c0_41 = arith.constant 0 : index
      %c0_42 = arith.constant 0 : index
      %49 = vector.load %arg10[%c0_40, %c0_41, %c0_42] : memref<1x1x1xf32, #tpu.memory_space<vmem>>, vector<1x1x1xf32>
      tpu.vector_store %arg10[%c0_40, %c0_41, %c0_42], %48 {strides = array<i32>} : memref<1x1x1xf32, #tpu.memory_space<vmem>>, vector<1x1x1xf32>,
    } else {
    }
    %c0_23 = arith.constant 0 : index
    %c0_24 = arith.constant 0 : index
    %c0_25 = arith.constant 0 : index
    %38 = vector.load %arg9[%c0_23, %c0_24, %c0_25] : memref<1x1x1xf32, #tpu.memory_space<vmem>>, vector<1x1x1xf32>
    %39 = vector.broadcast %26 : f32 to vector<1x1x1xf32>
    %40 = arith.addf %38, %39 : vector<1x1x1xf32>
    %c0_26 = arith.constant 0 : index
    %c0_27 = arith.constant 0 : index
    %c0_28 = arith.constant 0 : index
    %41 = vector.load %arg9[%c0_26, %c0_27, %c0_28] : memref<1x1x1xf32, #tpu.memory_space<vmem>>, vector<1x1x1xf32>
    tpu.vector_store %arg9[%c0_26, %c0_27, %c0_28], %40 {strides = array<i32>} : memref<1x1x1xf32, #tpu.memory_space<vmem>>, vector<1x1x1xf32>,
    %c0_29 = arith.constant 0 : index
    %c0_30 = arith.constant 0 : index
    %c0_31 = arith.constant 0 : index
    %42 = vector.load %arg10[%c0_29, %c0_30, %c0_31] : memref<1x1x1xf32, #tpu.memory_space<vmem>>, vector<1x1x1xf32>
    %43 = vector.broadcast %34 : f32 to vector<1x1x1xf32>
    %44 = arith.addf %42, %43 : vector<1x1x1xf32>
    %c0_32 = arith.constant 0 : index
    %c0_33 = arith.constant 0 : index
    %c0_34 = arith.constant 0 : index
    %45 = vector.load %arg10[%c0_32, %c0_33, %c0_34] : memref<1x1x1xf32, #tpu.memory_space<vmem>>, vector<1x1x1xf32>
    tpu.vector_store %arg10[%c0_32, %c0_33, %c0_34], %44 {strides = array<i32>} : memref<1x1x1xf32, #tpu.memory_space<vmem>>, vector<1x1x1xf32>,
    return
  }
  func.func @transform_0(%arg0: i32, %arg1: i32) -> (i32, i32, i32) {
    %c0_i32 = arith.constant 0 : i32
    %c0_i32_0 = arith.constant 0 : i32
    return %arg0, %c0_i32, %arg1 : i32, i32, i32
  }
  func.func @transform_1(%arg0: i32, %arg1: i32) -> (i32, i32, i32) {
    %c0_i32 = arith.constant 0 : i32
    %c0_i32_0 = arith.constant 0 : i32
    return %arg0, %c0_i32, %arg1 : i32, i32, i32
  }
  func.func @transform_2(%arg0: i32, %arg1: i32) -> (i32, i32) {
    %c0_i32 = arith.constant 0 : i32
    %c0_i32_0 = arith.constant 0 : i32
    %c0_i32_1 = arith.constant 0 : i32
    return %c0_i32, %c0_i32_0 : i32, i32
  }
  func.func @transform_3(%arg0: i32, %arg1: i32) -> (i32, i32) {
    %c0_i32 = arith.constant 0 : i32
    %c0_i32_0 = arith.constant 0 : i32
    %c0_i32_1 = arith.constant 0 : i32
    return %c0_i32, %c0_i32_0 : i32, i32
  }
  func.func @transform_4(%arg0: i32, %arg1: i32) -> (i32, i32) {
    %c0_i32 = arith.constant 0 : i32
    %c0_i32_0 = arith.constant 0 : i32
    %c0_i32_1 = arith.constant 0 : i32
    return %c0_i32, %c0_i32_0 : i32, i32
  }
  func.func @transform_5(%arg0: i32, %arg1: i32) -> (i32, i32) {
    %c0_i32 = arith.constant 0 : i32
    %c0_i32_0 = arith.constant 0 : i32
    %c0_i32_1 = arith.constant 0 : i32
    return %c0_i32, %c0_i32_0 : i32, i32
  }
  func.func @transform_6(%arg0: i32, %arg1: i32) -> (i32, i32, i32) {
    %c0_i32 = arith.constant 0 : i32
    %c0_i32_0 = arith.constant 0 : i32
    return %arg0, %c0_i32, %arg1 : i32, i32, i32
  }
  func.func @transform_7(%arg0: i32, %arg1: i32) -> (i32, i32, i32) {
    %c0_i32 = arith.constant 0 : i32
    %c0_i32_0 = arith.constant 0 : i32
    %c0_i32_1 = arith.constant 0 : i32
    return %arg0, %c0_i32, %c0_i32_0 : i32, i32, i32
  }
  func.func @transform_8(%arg0: i32, %arg1: i32) -> (i32, i32, i32) {
    %c0_i32 = arith.constant 0 : i32
    %c0_i32_0 = arith.constant 0 : i32
    %c0_i32_1 = arith.constant 0 : i32
    return %arg0, %c0_i32, %c0_i32_0 : i32, i32, i32
  }
}

module attributes {stable_mosaic.version = 11 : i64} {
  func.func @_cond_affine_kernel(%arg0: i32, %arg1: i32, %arg2: memref<1x16x4xf32, #tpu.memory_space<vmem>>, %arg3: memref<1x64x4xf32, #tpu.memory_space<vmem>>, %arg4: memref<16x64xf32, #tpu.memory_space<vmem>>, %arg5: memref<16x1xf32, #tpu.memory_space<vmem>>, %arg6: memref<16x64xf32, #tpu.memory_space<vmem>>, %arg7: memref<16x1xf32, #tpu.memory_space<vmem>>, %arg8: memref<1x16x4xf32, #tpu.memory_space<vmem>>, %arg9: memref<1x1x1xf32, #tpu.memory_space<vmem>>, %arg10: memref<1x1x1xf32, #tpu.memory_space<vmem>>) attributes {dimension_semantics = [#tpu.dimension_semantics<parallel>, #tpu.dimension_semantics<arbitrary>], iteration_bounds = array<i64: 2, 1>, scalar_prefetch = 0 : i64, scratch_operands = 0 : i64, tpu.core_type = #tpu.core_type<tc>, window_params = [{transform_indices = @transform_0, window_bounds = array<i64: 1, 16, 4>}, {transform_indices = @transform_1, window_bounds = array<i64: 1, 64, 4>}, {pipeline_mode = #tpu.pipeline_mode<synchronous>, transform_indices = @transform_2, window_bounds = array<i64: 16, 64>}, {pipeline_mode = #tpu.pipeline_mode<synchronous>, transform_indices = @transform_3, window_bounds = array<i64: 16, 1>}, {pipeline_mode = #tpu.pipeline_mode<synchronous>, transform_indices = @transform_4, window_bounds = array<i64: 16, 64>}, {pipeline_mode = #tpu.pipeline_mode<synchronous>, transform_indices = @transform_5, window_bounds = array<i64: 16, 1>}, {transform_indices = @transform_6, window_bounds = array<i64: 1, 16, 4>}, {transform_indices = @transform_7, window_bounds = array<i64: 1, 1, 1>}, {transform_indices = @transform_8, window_bounds = array<i64: 1, 1, 1>}]} {
    %c0 = arith.constant 0 : index
    %c0_0 = arith.constant 0 : index
    %c0_1 = arith.constant 0 : index
    %0 = vector.load %arg2[%c0, %c0_0, %c0_1] : memref<1x16x4xf32, #tpu.memory_space<vmem>>, vector<1x16x4xf32>
    %1 = vector.shape_cast %0 : vector<1x16x4xf32> to vector<16x4xf32>
    %c0_2 = arith.constant 0 : index
    %c0_3 = arith.constant 0 : index
    %c0_4 = arith.constant 0 : index
    %2 = vector.load %arg3[%c0_2, %c0_3, %c0_4] : memref<1x64x4xf32, #tpu.memory_space<vmem>>, vector<1x64x4xf32>
    %3 = vector.shape_cast %2 : vector<1x64x4xf32> to vector<64x4xf32>
    %c0_5 = arith.constant 0 : index
    %c0_6 = arith.constant 0 : index
    %4 = vector.load %arg4[%c0_5, %c0_6] : memref<16x64xf32, #tpu.memory_space<vmem>>, vector<16x64xf32>
    %cst = arith.constant dense<0.000000e+00> : vector<16x4xf32>
    %5 = tpu.matmul %4, %3, %cst {dimension_numbers = #tpu.dot_dimension_numbers<[1], [0], [0], [1], [0, 0, 1, 1], [], []>} : vector<16x64xf32>, vector<64x4xf32>, vector<16x4xf32> -> vector<16x4xf32>
    %c0_7 = arith.constant 0 : index
    %c0_8 = arith.constant 0 : index
    %6 = vector.load %arg5[%c0_7, %c0_8] : memref<16x1xf32, #tpu.memory_space<vmem>>, vector<16x1xf32>
    %7 = vector.broadcast %6 : vector<16x1xf32> to vector<16x4xf32>
    %8 = arith.addf %5, %7 : vector<16x4xf32>
    %c0_9 = arith.constant 0 : index
    %c0_10 = arith.constant 0 : index
    %9 = vector.load %arg6[%c0_9, %c0_10] : memref<16x64xf32, #tpu.memory_space<vmem>>, vector<16x64xf32>
    %cst_11 = arith.constant dense<0.000000e+00> : vector<16x4xf32>
    %10 = tpu.matmul %9, %3, %cst_11 {dimension_numbers = #tpu.dot_dimension_numbers<[1], [0], [0], [1], [0, 0, 1, 1], [], []>} : vector<16x64xf32>, vector<64x4xf32>, vector<16x4xf32> -> vector<16x4xf32>
    %c0_12 = arith.constant 0 : index
    %c0_13 = arith.constant 0 : index
    %11 = vector.load %arg7[%c0_12, %c0_13] : memref<16x1xf32, #tpu.memory_space<vmem>>, vector<16x1xf32>
    %12 = vector.broadcast %11 : vector<16x1xf32> to vector<16x4xf32>
    %13 = arith.addf %10, %12 : vector<16x4xf32>
    %14 = math.tanh %8 : vector<16x4xf32>
    %cst_14 = arith.constant 5.000000e-01 : f32
    %15 = vector.broadcast %cst_14 : f32 to vector<16x4xf32>
    %16 = arith.mulf %14, %15 : vector<16x4xf32>
    %17 = math.exp %16 : vector<16x4xf32>
    %18 = arith.mulf %1, %17 : vector<16x4xf32>
    %19 = arith.addf %18, %13 : vector<16x4xf32>
    %c0_15 = arith.constant 0 : index
    %c0_16 = arith.constant 0 : index
    %c0_17 = arith.constant 0 : index
    %20 = vector.load %arg8[%c0_15, %c0_16, %c0_17] : memref<1x16x4xf32, #tpu.memory_space<vmem>>, vector<1x16x4xf32>
    %21 = vector.shape_cast %20 : vector<1x16x4xf32> to vector<16x4xf32>
    %22 = vector.shape_cast %19 : vector<16x4xf32> to vector<1x16x4xf32>
    tpu.vector_store %arg8[%c0_15, %c0_16, %c0_17], %22 {strides = array<i32>} : memref<1x16x4xf32, #tpu.memory_space<vmem>>, vector<1x16x4xf32>,
    %23 = vector.shape_cast %16 : vector<16x4xf32> to vector<1x16x4xf32>
    %cst_18 = arith.constant dense<0.000000e+00> : vector<1xf32>
    %24 = vector.multi_reduction <add>, %23, %cst_18 [1, 2] : vector<1x16x4xf32> to vector<1xf32>
    %25 = vector.shape_cast %24 : vector<1xf32> to vector<1x1x1xf32>
    %26 = vector.extract %25[0, 0, 0] : f32 from vector<1x1x1xf32>
    %27 = arith.mulf %19, %19 : vector<16x4xf32>
    %28 = vector.shape_cast %27 : vector<16x4xf32> to vector<1x16x4xf32>
    %cst_19 = arith.constant dense<0.000000e+00> : vector<1xf32>
    %29 = vector.multi_reduction <add>, %28, %cst_19 [1, 2] : vector<1x16x4xf32> to vector<1xf32>
    %30 = vector.shape_cast %29 : vector<1xf32> to vector<1x1x1xf32>
    %31 = vector.extract %30[0, 0, 0] : f32 from vector<1x1x1xf32>
    %cst_20 = arith.constant -5.000000e-01 : f32
    %32 = arith.mulf %cst_20, %31 : f32
    %cst_21 = arith.constant 58.8120651 : f32
    %33 = arith.subf %32, %cst_21 : f32
    %c0_i32 = arith.constant 0 : i32
    %34 = arith.cmpi eq, %arg1, %c0_i32 : i32
    %35 = arith.extui %34 : i1 to i32
    %c0_i32_22 = arith.constant 0 : i32
    %36 = arith.cmpi ne, %35, %c0_i32_22 : i32
    scf.if %36 {
      %cst_35 = arith.constant 0.000000e+00 : f32
      %45 = vector.broadcast %cst_35 : f32 to vector<1x1x1xf32>
      %c0_36 = arith.constant 0 : index
      %c0_37 = arith.constant 0 : index
      %c0_38 = arith.constant 0 : index
      %46 = vector.load %arg9[%c0_36, %c0_37, %c0_38] : memref<1x1x1xf32, #tpu.memory_space<vmem>>, vector<1x1x1xf32>
      tpu.vector_store %arg9[%c0_36, %c0_37, %c0_38], %45 {strides = array<i32>} : memref<1x1x1xf32, #tpu.memory_space<vmem>>, vector<1x1x1xf32>,
      %cst_39 = arith.constant 0.000000e+00 : f32
      %47 = vector.broadcast %cst_39 : f32 to vector<1x1x1xf32>
      %c0_40 = arith.constant 0 : index
      %c0_41 = arith.constant 0 : index
      %c0_42 = arith.constant 0 : index
      %48 = vector.load %arg10[%c0_40, %c0_41, %c0_42] : memref<1x1x1xf32, #tpu.memory_space<vmem>>, vector<1x1x1xf32>
      tpu.vector_store %arg10[%c0_40, %c0_41, %c0_42], %47 {strides = array<i32>} : memref<1x1x1xf32, #tpu.memory_space<vmem>>, vector<1x1x1xf32>,
    } else {
    }
    %c0_23 = arith.constant 0 : index
    %c0_24 = arith.constant 0 : index
    %c0_25 = arith.constant 0 : index
    %37 = vector.load %arg9[%c0_23, %c0_24, %c0_25] : memref<1x1x1xf32, #tpu.memory_space<vmem>>, vector<1x1x1xf32>
    %38 = vector.broadcast %26 : f32 to vector<1x1x1xf32>
    %39 = arith.addf %37, %38 : vector<1x1x1xf32>
    %c0_26 = arith.constant 0 : index
    %c0_27 = arith.constant 0 : index
    %c0_28 = arith.constant 0 : index
    %40 = vector.load %arg9[%c0_26, %c0_27, %c0_28] : memref<1x1x1xf32, #tpu.memory_space<vmem>>, vector<1x1x1xf32>
    tpu.vector_store %arg9[%c0_26, %c0_27, %c0_28], %39 {strides = array<i32>} : memref<1x1x1xf32, #tpu.memory_space<vmem>>, vector<1x1x1xf32>,
    %c0_29 = arith.constant 0 : index
    %c0_30 = arith.constant 0 : index
    %c0_31 = arith.constant 0 : index
    %41 = vector.load %arg10[%c0_29, %c0_30, %c0_31] : memref<1x1x1xf32, #tpu.memory_space<vmem>>, vector<1x1x1xf32>
    %42 = vector.broadcast %33 : f32 to vector<1x1x1xf32>
    %43 = arith.addf %41, %42 : vector<1x1x1xf32>
    %c0_32 = arith.constant 0 : index
    %c0_33 = arith.constant 0 : index
    %c0_34 = arith.constant 0 : index
    %44 = vector.load %arg10[%c0_32, %c0_33, %c0_34] : memref<1x1x1xf32, #tpu.memory_space<vmem>>, vector<1x1x1xf32>
    tpu.vector_store %arg10[%c0_32, %c0_33, %c0_34], %43 {strides = array<i32>} : memref<1x1x1xf32, #tpu.memory_space<vmem>>, vector<1x1x1xf32>,
    return
  }
  func.func @transform_0(%arg0: i32, %arg1: i32) -> (i32, i32, i32) {
    %c0_i32 = arith.constant 0 : i32
    %c0_i32_0 = arith.constant 0 : i32
    return %arg0, %c0_i32, %arg1 : i32, i32, i32
  }
  func.func @transform_1(%arg0: i32, %arg1: i32) -> (i32, i32, i32) {
    %c0_i32 = arith.constant 0 : i32
    %c0_i32_0 = arith.constant 0 : i32
    return %arg0, %c0_i32, %arg1 : i32, i32, i32
  }
  func.func @transform_2(%arg0: i32, %arg1: i32) -> (i32, i32) {
    %c0_i32 = arith.constant 0 : i32
    %c0_i32_0 = arith.constant 0 : i32
    %c0_i32_1 = arith.constant 0 : i32
    return %c0_i32, %c0_i32_0 : i32, i32
  }
  func.func @transform_3(%arg0: i32, %arg1: i32) -> (i32, i32) {
    %c0_i32 = arith.constant 0 : i32
    %c0_i32_0 = arith.constant 0 : i32
    %c0_i32_1 = arith.constant 0 : i32
    return %c0_i32, %c0_i32_0 : i32, i32
  }
  func.func @transform_4(%arg0: i32, %arg1: i32) -> (i32, i32) {
    %c0_i32 = arith.constant 0 : i32
    %c0_i32_0 = arith.constant 0 : i32
    %c0_i32_1 = arith.constant 0 : i32
    return %c0_i32, %c0_i32_0 : i32, i32
  }
  func.func @transform_5(%arg0: i32, %arg1: i32) -> (i32, i32) {
    %c0_i32 = arith.constant 0 : i32
    %c0_i32_0 = arith.constant 0 : i32
    %c0_i32_1 = arith.constant 0 : i32
    return %c0_i32, %c0_i32_0 : i32, i32
  }
  func.func @transform_6(%arg0: i32, %arg1: i32) -> (i32, i32, i32) {
    %c0_i32 = arith.constant 0 : i32
    %c0_i32_0 = arith.constant 0 : i32
    return %arg0, %c0_i32, %arg1 : i32, i32, i32
  }
  func.func @transform_7(%arg0: i32, %arg1: i32) -> (i32, i32, i32) {
    %c0_i32 = arith.constant 0 : i32
    %c0_i32_0 = arith.constant 0 : i32
    %c0_i32_1 = arith.constant 0 : i32
    return %arg0, %c0_i32, %c0_i32_0 : i32, i32, i32
  }
  func.func @transform_8(%arg0: i32, %arg1: i32) -> (i32, i32, i32) {
    %c0_i32 = arith.constant 0 : i32
    %c0_i32_0 = arith.constant 0 : i32
    %c0_i32_1 = arith.constant 0 : i32
    return %arg0, %c0_i32, %c0_i32_0 : i32, i32, i32
  }
}

module attributes {stable_mosaic.version = 11 : i64} {
  func.func @_cond_affine_kernel(%arg0: i32, %arg1: i32, %arg2: memref<1x32x4xf32, #tpu.memory_space<vmem>>, %arg3: memref<1x32x4xf32, #tpu.memory_space<vmem>>, %arg4: memref<32x32xf32, #tpu.memory_space<vmem>>, %arg5: memref<32x1xf32, #tpu.memory_space<vmem>>, %arg6: memref<32x32xf32, #tpu.memory_space<vmem>>, %arg7: memref<32x1xf32, #tpu.memory_space<vmem>>, %arg8: memref<1x32x4xf32, #tpu.memory_space<vmem>>, %arg9: memref<1x1x1xf32, #tpu.memory_space<vmem>>, %arg10: memref<1x1x1xf32, #tpu.memory_space<vmem>>) attributes {dimension_semantics = [#tpu.dimension_semantics<parallel>, #tpu.dimension_semantics<arbitrary>], iteration_bounds = array<i64: 2, 1>, scalar_prefetch = 0 : i64, scratch_operands = 0 : i64, tpu.core_type = #tpu.core_type<tc>, window_params = [{transform_indices = @transform_0, window_bounds = array<i64: 1, 32, 4>}, {transform_indices = @transform_1, window_bounds = array<i64: 1, 32, 4>}, {pipeline_mode = #tpu.pipeline_mode<synchronous>, transform_indices = @transform_2, window_bounds = array<i64: 32, 32>}, {pipeline_mode = #tpu.pipeline_mode<synchronous>, transform_indices = @transform_3, window_bounds = array<i64: 32, 1>}, {pipeline_mode = #tpu.pipeline_mode<synchronous>, transform_indices = @transform_4, window_bounds = array<i64: 32, 32>}, {pipeline_mode = #tpu.pipeline_mode<synchronous>, transform_indices = @transform_5, window_bounds = array<i64: 32, 1>}, {transform_indices = @transform_6, window_bounds = array<i64: 1, 32, 4>}, {transform_indices = @transform_7, window_bounds = array<i64: 1, 1, 1>}, {transform_indices = @transform_8, window_bounds = array<i64: 1, 1, 1>}]} {
    %c0 = arith.constant 0 : index
    %c0_0 = arith.constant 0 : index
    %c0_1 = arith.constant 0 : index
    %0 = vector.load %arg2[%c0, %c0_0, %c0_1] : memref<1x32x4xf32, #tpu.memory_space<vmem>>, vector<1x32x4xf32>
    %1 = vector.shape_cast %0 : vector<1x32x4xf32> to vector<32x4xf32>
    %c0_2 = arith.constant 0 : index
    %c0_3 = arith.constant 0 : index
    %c0_4 = arith.constant 0 : index
    %2 = vector.load %arg3[%c0_2, %c0_3, %c0_4] : memref<1x32x4xf32, #tpu.memory_space<vmem>>, vector<1x32x4xf32>
    %3 = vector.shape_cast %2 : vector<1x32x4xf32> to vector<32x4xf32>
    %c0_5 = arith.constant 0 : index
    %c0_6 = arith.constant 0 : index
    %4 = vector.load %arg4[%c0_5, %c0_6] : memref<32x32xf32, #tpu.memory_space<vmem>>, vector<32x32xf32>
    %cst = arith.constant dense<0.000000e+00> : vector<32x4xf32>
    %5 = tpu.matmul %4, %3, %cst {dimension_numbers = #tpu.dot_dimension_numbers<[1], [0], [0], [1], [0, 0, 1, 1], [], []>} : vector<32x32xf32>, vector<32x4xf32>, vector<32x4xf32> -> vector<32x4xf32>
    %c0_7 = arith.constant 0 : index
    %c0_8 = arith.constant 0 : index
    %6 = vector.load %arg5[%c0_7, %c0_8] : memref<32x1xf32, #tpu.memory_space<vmem>>, vector<32x1xf32>
    %7 = vector.broadcast %6 : vector<32x1xf32> to vector<32x4xf32>
    %8 = arith.addf %5, %7 : vector<32x4xf32>
    %c0_9 = arith.constant 0 : index
    %c0_10 = arith.constant 0 : index
    %9 = vector.load %arg6[%c0_9, %c0_10] : memref<32x32xf32, #tpu.memory_space<vmem>>, vector<32x32xf32>
    %cst_11 = arith.constant dense<0.000000e+00> : vector<32x4xf32>
    %10 = tpu.matmul %9, %3, %cst_11 {dimension_numbers = #tpu.dot_dimension_numbers<[1], [0], [0], [1], [0, 0, 1, 1], [], []>} : vector<32x32xf32>, vector<32x4xf32>, vector<32x4xf32> -> vector<32x4xf32>
    %c0_12 = arith.constant 0 : index
    %c0_13 = arith.constant 0 : index
    %11 = vector.load %arg7[%c0_12, %c0_13] : memref<32x1xf32, #tpu.memory_space<vmem>>, vector<32x1xf32>
    %12 = vector.broadcast %11 : vector<32x1xf32> to vector<32x4xf32>
    %13 = arith.addf %10, %12 : vector<32x4xf32>
    %14 = math.tanh %8 : vector<32x4xf32>
    %cst_14 = arith.constant 5.000000e-01 : f32
    %15 = vector.broadcast %cst_14 : f32 to vector<32x4xf32>
    %16 = arith.mulf %14, %15 : vector<32x4xf32>
    %17 = math.exp %16 : vector<32x4xf32>
    %18 = arith.mulf %1, %17 : vector<32x4xf32>
    %19 = arith.addf %18, %13 : vector<32x4xf32>
    %c0_15 = arith.constant 0 : index
    %c0_16 = arith.constant 0 : index
    %c0_17 = arith.constant 0 : index
    %20 = vector.load %arg8[%c0_15, %c0_16, %c0_17] : memref<1x32x4xf32, #tpu.memory_space<vmem>>, vector<1x32x4xf32>
    %21 = vector.shape_cast %20 : vector<1x32x4xf32> to vector<32x4xf32>
    %22 = vector.shape_cast %19 : vector<32x4xf32> to vector<1x32x4xf32>
    tpu.vector_store %arg8[%c0_15, %c0_16, %c0_17], %22 {strides = array<i32>} : memref<1x32x4xf32, #tpu.memory_space<vmem>>, vector<1x32x4xf32>,
    %23 = vector.shape_cast %16 : vector<32x4xf32> to vector<1x32x4xf32>
    %cst_18 = arith.constant dense<0.000000e+00> : vector<1xf32>
    %24 = vector.multi_reduction <add>, %23, %cst_18 [1, 2] : vector<1x32x4xf32> to vector<1xf32>
    %25 = vector.shape_cast %24 : vector<1xf32> to vector<1x1x1xf32>
    %26 = vector.extract %25[0, 0, 0] : f32 from vector<1x1x1xf32>
    %27 = arith.mulf %19, %19 : vector<32x4xf32>
    %28 = vector.shape_cast %27 : vector<32x4xf32> to vector<1x32x4xf32>
    %cst_19 = arith.constant dense<0.000000e+00> : vector<1xf32>
    %29 = vector.multi_reduction <add>, %28, %cst_19 [1, 2] : vector<1x32x4xf32> to vector<1xf32>
    %30 = vector.shape_cast %29 : vector<1xf32> to vector<1x1x1xf32>
    %31 = vector.extract %30[0, 0, 0] : f32 from vector<1x1x1xf32>
    %cst_20 = arith.constant -5.000000e-01 : f32
    %32 = arith.mulf %cst_20, %31 : f32
    %cst_21 = arith.constant 117.62413 : f32
    %33 = arith.subf %32, %cst_21 : f32
    %c0_i32 = arith.constant 0 : i32
    %34 = arith.cmpi eq, %arg1, %c0_i32 : i32
    %35 = arith.extui %34 : i1 to i32
    %c0_i32_22 = arith.constant 0 : i32
    %36 = arith.cmpi ne, %35, %c0_i32_22 : i32
    scf.if %36 {
      %cst_35 = arith.constant 0.000000e+00 : f32
      %45 = vector.broadcast %cst_35 : f32 to vector<1x1x1xf32>
      %c0_36 = arith.constant 0 : index
      %c0_37 = arith.constant 0 : index
      %c0_38 = arith.constant 0 : index
      %46 = vector.load %arg9[%c0_36, %c0_37, %c0_38] : memref<1x1x1xf32, #tpu.memory_space<vmem>>, vector<1x1x1xf32>
      tpu.vector_store %arg9[%c0_36, %c0_37, %c0_38], %45 {strides = array<i32>} : memref<1x1x1xf32, #tpu.memory_space<vmem>>, vector<1x1x1xf32>,
      %cst_39 = arith.constant 0.000000e+00 : f32
      %47 = vector.broadcast %cst_39 : f32 to vector<1x1x1xf32>
      %c0_40 = arith.constant 0 : index
      %c0_41 = arith.constant 0 : index
      %c0_42 = arith.constant 0 : index
      %48 = vector.load %arg10[%c0_40, %c0_41, %c0_42] : memref<1x1x1xf32, #tpu.memory_space<vmem>>, vector<1x1x1xf32>
      tpu.vector_store %arg10[%c0_40, %c0_41, %c0_42], %47 {strides = array<i32>} : memref<1x1x1xf32, #tpu.memory_space<vmem>>, vector<1x1x1xf32>,
    } else {
    }
    %c0_23 = arith.constant 0 : index
    %c0_24 = arith.constant 0 : index
    %c0_25 = arith.constant 0 : index
    %37 = vector.load %arg9[%c0_23, %c0_24, %c0_25] : memref<1x1x1xf32, #tpu.memory_space<vmem>>, vector<1x1x1xf32>
    %38 = vector.broadcast %26 : f32 to vector<1x1x1xf32>
    %39 = arith.addf %37, %38 : vector<1x1x1xf32>
    %c0_26 = arith.constant 0 : index
    %c0_27 = arith.constant 0 : index
    %c0_28 = arith.constant 0 : index
    %40 = vector.load %arg9[%c0_26, %c0_27, %c0_28] : memref<1x1x1xf32, #tpu.memory_space<vmem>>, vector<1x1x1xf32>
    tpu.vector_store %arg9[%c0_26, %c0_27, %c0_28], %39 {strides = array<i32>} : memref<1x1x1xf32, #tpu.memory_space<vmem>>, vector<1x1x1xf32>,
    %c0_29 = arith.constant 0 : index
    %c0_30 = arith.constant 0 : index
    %c0_31 = arith.constant 0 : index
    %41 = vector.load %arg10[%c0_29, %c0_30, %c0_31] : memref<1x1x1xf32, #tpu.memory_space<vmem>>, vector<1x1x1xf32>
    %42 = vector.broadcast %33 : f32 to vector<1x1x1xf32>
    %43 = arith.addf %41, %42 : vector<1x1x1xf32>
    %c0_32 = arith.constant 0 : index
    %c0_33 = arith.constant 0 : index
    %c0_34 = arith.constant 0 : index
    %44 = vector.load %arg10[%c0_32, %c0_33, %c0_34] : memref<1x1x1xf32, #tpu.memory_space<vmem>>, vector<1x1x1xf32>
    tpu.vector_store %arg10[%c0_32, %c0_33, %c0_34], %43 {strides = array<i32>} : memref<1x1x1xf32, #tpu.memory_space<vmem>>, vector<1x1x1xf32>,
    return
  }
  func.func @transform_0(%arg0: i32, %arg1: i32) -> (i32, i32, i32) {
    %c0_i32 = arith.constant 0 : i32
    %c0_i32_0 = arith.constant 0 : i32
    return %arg0, %c0_i32, %arg1 : i32, i32, i32
  }
  func.func @transform_1(%arg0: i32, %arg1: i32) -> (i32, i32, i32) {
    %c0_i32 = arith.constant 0 : i32
    %c0_i32_0 = arith.constant 0 : i32
    return %arg0, %c0_i32, %arg1 : i32, i32, i32
  }
  func.func @transform_2(%arg0: i32, %arg1: i32) -> (i32, i32) {
    %c0_i32 = arith.constant 0 : i32
    %c0_i32_0 = arith.constant 0 : i32
    %c0_i32_1 = arith.constant 0 : i32
    return %c0_i32, %c0_i32_0 : i32, i32
  }
  func.func @transform_3(%arg0: i32, %arg1: i32) -> (i32, i32) {
    %c0_i32 = arith.constant 0 : i32
    %c0_i32_0 = arith.constant 0 : i32
    %c0_i32_1 = arith.constant 0 : i32
    return %c0_i32, %c0_i32_0 : i32, i32
  }
  func.func @transform_4(%arg0: i32, %arg1: i32) -> (i32, i32) {
    %c0_i32 = arith.constant 0 : i32
    %c0_i32_0 = arith.constant 0 : i32
    %c0_i32_1 = arith.constant 0 : i32
    return %c0_i32, %c0_i32_0 : i32, i32
  }
  func.func @transform_5(%arg0: i32, %arg1: i32) -> (i32, i32) {
    %c0_i32 = arith.constant 0 : i32
    %c0_i32_0 = arith.constant 0 : i32
    %c0_i32_1 = arith.constant 0 : i32
    return %c0_i32, %c0_i32_0 : i32, i32
  }
  func.func @transform_6(%arg0: i32, %arg1: i32) -> (i32, i32, i32) {
    %c0_i32 = arith.constant 0 : i32
    %c0_i32_0 = arith.constant 0 : i32
    return %arg0, %c0_i32, %arg1 : i32, i32, i32
  }
  func.func @transform_7(%arg0: i32, %arg1: i32) -> (i32, i32, i32) {
    %c0_i32 = arith.constant 0 : i32
    %c0_i32_0 = arith.constant 0 : i32
    %c0_i32_1 = arith.constant 0 : i32
    return %arg0, %c0_i32, %c0_i32_0 : i32, i32, i32
  }
  func.func @transform_8(%arg0: i32, %arg1: i32) -> (i32, i32, i32) {
    %c0_i32 = arith.constant 0 : i32
    %c0_i32_0 = arith.constant 0 : i32
    %c0_i32_1 = arith.constant 0 : i32
    return %arg0, %c0_i32, %c0_i32_0 : i32, i32, i32
  }
}

</mosaic_0001>

<llo_original>
// kernel: _encode_impl.6
$region0: #{_encode_impl.6}
  #allocation0 [shape = 'u32[]', space=smem, size = 0x4, offset = 0x4, fixed_abs, tag = 'smem constant byte address 0x4 - core index']
  #allocation1 [shape = 'u32[72,128]{1,0:T(1,128)}', space=vmem, size = 0x9000, scoped, tag = 'internal scratch']
  %s0 = inlined_call_operand.vmem [shape: f32[2,4,64], index: 0, kind: input, shape index: {}]
  %s1 = inlined_call_operand.vmem [shape: f32[2,4,64], index: 1, kind: input, shape index: {}]
  %s2 = inlined_call_operand.vmem [shape: f32[4,4], index: 2, kind: input, shape index: {}]
  %s3 = inlined_call_operand.vmem [shape: f32[4,1], index: 3, kind: input, shape index: {}]
  %s4 = inlined_call_operand.vmem [shape: f32[4,4], index: 4, kind: input, shape index: {}]
  %s5 = inlined_call_operand.vmem [shape: f32[4,1], index: 5, kind: input, shape index: {}]
  %s6 = inlined_call_operand.vmem [shape: f32[2,4,64], index: 6, kind: output, shape index: {0}]
  %s7 = inlined_call_operand.vmem [shape: f32[2,1,1], index: 7, kind: output, shape index: {1}]
  %s8 = inlined_call_operand.vmem [shape: f32[2,1,1], index: 8, kind: output, shape index: {2}]
  %9 = xla_tuple %s6, %s7, %s8
  %s10 = sld [smem:[#allocation0]]
  $region77: #{_encode_impl.6} parent=0
    _
  %s12 = ssub.s32 1, %s10
  %s13 = scalar_select 0, %s12, %s10
  loop: start=0, step=1, limit=4
  $region2: #{_encode_impl.6} parent=0 // loop_pre_header
    _
  $region3: #{_encode_impl.6} parent=0 // loop_header
    %s15 = sphi 0, %s19
    %p16 = scmp.ge.s32.totalorder %s15, 4
    %s22 = sphi 0, %s34
    %s23 = sphi 0, %s30
    %s24 = sphi 0, %s22
    %s25 = sphi 0, %s23
    %s26 = sphi 0, %s24
    %s27 = sphi 0, %s25
    %s39 = sphi 0, %s41
    %s42 = sphi 0, %s39
    %s43 = sphi 0, %s42
    %s59 = sphi 0, %s43
    %s67 = sphi 0, %s69
    %s70 = sphi 0, %s67
    %s71 = sphi 0, %s70
    %s87 = sphi 0, %s71
    %s91 = sphi 0, %s91
    %s93 = sphi 0, %s91
    %s94 = sphi 0, %s93
    %s108 = sphi 0, %s94
    %s112 = sphi 0, %s112
    %s114 = sphi 0, %s112
    %s115 = sphi 0, %s114
    %s129 = sphi 0, %s115
    %s133 = sphi 0, %s133
    %s135 = sphi 0, %s133
    %s136 = sphi 0, %s135
    %s150 = sphi 0, %s136
    %s154 = sphi 0, %s154
    %s156 = sphi 0, %s154
    %s157 = sphi 0, %s156
    %s171 = sphi 0, %s157
    %s179 = sphi 0, %s181
    %s182 = sphi 0, %s179
    %s183 = sphi 0, %s182
    %s199 = sphi 0, %s183
    %s205 = sphi 0, %s207
    %s208 = sphi 0, %s205
    %s209 = sphi 0, %s208
    %s225 = sphi 0, %s209
    %s231 = sphi 0, %s233
    %s234 = sphi 0, %s231
    %s235 = sphi 0, %s234
    %s251 = sphi 0, %s235
  $region4: #{_encode_impl.6} parent=0 // loop_header_branch
    %18 = sbr.rel (%p16) target = $region8
  $region5: #{_encode_impl.6} parent=0 // loop_body
    %s20 = ssub.s32 %s15, 1
    %s21 = ssub.s32 %s15, 2
    %s28 = sadd.s32 1, %s23
    %p29 = scmp.ge.s32.totalorder %s28, 1
    %s30 = scalar_select %p29, 0, %s28
    %s31 = sadd.s32 1, %s22
    %s32 = scalar_select %p29, %s31, %s22
    %p33 = scmp.ge.s32.totalorder %s32, 2
    %s34 = scalar_select %p33, 0, %s32
    %s35 = ssub.s32 %s22, %s34
    %s36 = ssub.s32 %s23, %s30
    %s37 = sor.u32 %s35, %s36
    %p38 = scmp.eq.s32.totalorder %s37, 0
    %s40 = sadd.s32 %s39, 1
    %s41 = scalar_select %p38, %s39, %s40
    %p44 = pneg %p38
    %p45 = scmp.eq.s32.totalorder %s15, 1
    %p46 = por %p44, %p45
    %p47 = scmp.ne.s32.totalorder %s39, %s42
    %p48 = scmp.eq.s32.totalorder %s15, 0
    %p49 = por %p47, %p48
    %p50 = scmp.ne.s32.totalorder %s39, %s42
    %p51 = scmp.eq.s32.totalorder %s20, 1
    %p52 = por %p50, %p51
    %p53 = scmp.ne.s32.totalorder %s42, %s43
    %p54 = scmp.eq.s32.totalorder %s20, 0
    %p55 = por %p53, %p54
    %p56 = scmp.ne.s32.totalorder %s42, %s43
    %p57 = scmp.eq.s32.totalorder %s21, 1
    %p58 = por %p56, %p57
    %p60 = scmp.ne.s32.totalorder %s43, %s59
    %p61 = scmp.eq.s32.totalorder %s21, 0
    %p62 = por %p60, %p61
    %s63 = ssub.s32 %s22, %s34
    %s64 = ssub.s32 %s23, %s30
    %s65 = sor.u32 %s63, %s64
    %p66 = scmp.eq.s32.totalorder %s65, 0
    %s68 = sadd.s32 %s67, 1
    %s69 = scalar_select %p66, %s67, %s68
    %p72 = pneg %p66
    %p73 = scmp.eq.s32.totalorder %s15, 1
    %p74 = por %p72, %p73
    %p75 = scmp.ne.s32.totalorder %s67, %s70
    %p76 = scmp.eq.s32.totalorder %s15, 0
    %p77 = por %p75, %p76
    %p78 = scmp.ne.s32.totalorder %s67, %s70
    %p79 = scmp.eq.s32.totalorder %s20, 1
    %p80 = por %p78, %p79
    %p81 = scmp.ne.s32.totalorder %s70, %s71
    %p82 = scmp.eq.s32.totalorder %s20, 0
    %p83 = por %p81, %p82
    %p84 = scmp.ne.s32.totalorder %s70, %s71
    %p85 = scmp.eq.s32.totalorder %s21, 1
    %p86 = por %p84, %p85
    %p88 = scmp.ne.s32.totalorder %s71, %s87
    %p89 = scmp.eq.s32.totalorder %s21, 0
    %p90 = por %p88, %p89
    %s92 = sadd.s32 %s91, 1
    %p95 = scmp.eq.s32.totalorder %s15, 1
    %p96 = scmp.ne.s32.totalorder %s91, %s93
    %p97 = scmp.eq.s32.totalorder %s15, 0
    %p98 = por %p96, %p97
    %p99 = scmp.ne.s32.totalorder %s91, %s93
    %p100 = scmp.eq.s32.totalorder %s20, 1
    %p101 = por %p99, %p100
    %p102 = scmp.ne.s32.totalorder %s93, %s94
    %p103 = scmp.eq.s32.totalorder %s20, 0
    %p104 = por %p102, %p103
    %p105 = scmp.ne.s32.totalorder %s93, %s94
    %p106 = scmp.eq.s32.totalorder %s21, 1
    %p107 = por %p105, %p106
    %p109 = scmp.ne.s32.totalorder %s94, %s108
    %p110 = scmp.eq.s32.totalorder %s21, 0
    %p111 = por %p109, %p110
    %s113 = sadd.s32 %s112, 1
    %p116 = scmp.eq.s32.totalorder %s15, 1
    %p117 = scmp.ne.s32.totalorder %s112, %s114
    %p118 = scmp.eq.s32.totalorder %s15, 0
    %p119 = por %p117, %p118
    %p120 = scmp.ne.s32.totalorder %s112, %s114
    %p121 = scmp.eq.s32.totalorder %s20, 1
    %p122 = por %p120, %p121
    %p123 = scmp.ne.s32.totalorder %s114, %s115
    %p124 = scmp.eq.s32.totalorder %s20, 0
    %p125 = por %p123, %p124
    %p126 = scmp.ne.s32.totalorder %s114, %s115
    %p127 = scmp.eq.s32.totalorder %s21, 1
    %p128 = por %p126, %p127
    %p130 = scmp.ne.s32.totalorder %s115, %s129
    %p131 = scmp.eq.s32.totalorder %s21, 0
    %p132 = por %p130, %p131
    %s134 = sadd.s32 %s133, 1
    %p137 = scmp.eq.s32.totalorder %s15, 1
    %p138 = scmp.ne.s32.totalorder %s133, %s135
    %p139 = scmp.eq.s32.totalorder %s15, 0
    %p140 = por %p138, %p139
    %p141 = scmp.ne.s32.totalorder %s133, %s135
    %p142 = scmp.eq.s32.totalorder %s20, 1
    %p143 = por %p141, %p142
    %p144 = scmp.ne.s32.totalorder %s135, %s136
    %p145 = scmp.eq.s32.totalorder %s20, 0
    %p146 = por %p144, %p145
    %p147 = scmp.ne.s32.totalorder %s135, %s136
    %p148 = scmp.eq.s32.totalorder %s21, 1
    %p149 = por %p147, %p148
    %p151 = scmp.ne.s32.totalorder %s136, %s150
    %p152 = scmp.eq.s32.totalorder %s21, 0
    %p153 = por %p151, %p152
    %s155 = sadd.s32 %s154, 1
    %p158 = scmp.eq.s32.totalorder %s15, 1
    %p159 = scmp.ne.s32.totalorder %s154, %s156
    %p160 = scmp.eq.s32.totalorder %s15, 0
    %p161 = por %p159, %p160
    %p162 = scmp.ne.s32.totalorder %s154, %s156
    %p163 = scmp.eq.s32.totalorder %s20, 1
    %p164 = por %p162, %p163
    %p165 = scmp.ne.s32.totalorder %s156, %s157
    %p166 = scmp.eq.s32.totalorder %s20, 0
    %p167 = por %p165, %p166
    %p168 = scmp.ne.s32.totalorder %s156, %s157
    %p169 = scmp.eq.s32.totalorder %s21, 1
    %p170 = por %p168, %p169
    %p172 = scmp.ne.s32.totalorder %s157, %s171
    %p173 = scmp.eq.s32.totalorder %s21, 0
    %p174 = por %p172, %p173
    %s175 = ssub.s32 %s22, %s34
    %s176 = ssub.s32 %s23, %s30
    %s177 = sor.u32 %s175, %s176
    %p178 = scmp.eq.s32.totalorder %s177, 0
    %s180 = sadd.s32 %s179, 1
    %s181 = scalar_select %p178, %s179, %s180
    %p184 = pneg %p178
    %p185 = scmp.eq.s32.totalorder %s15, 1
    %p186 = por %p184, %p185
    %p187 = scmp.ne.s32.totalorder %s179, %s182
    %p188 = scmp.eq.s32.totalorder %s15, 0
    %p189 = por %p187, %p188
    %p190 = scmp.ne.s32.totalorder %s179, %s182
    %p191 = scmp.eq.s32.totalorder %s20, 1
    %p192 = por %p190, %p191
    %p193 = scmp.ne.s32.totalorder %s182, %s183
    %p194 = scmp.eq.s32.totalorder %s20, 0
    %p195 = por %p193, %p194
    %p196 = scmp.ne.s32.totalorder %s182, %s183
    %p197 = scmp.eq.s32.totalorder %s21, 1
    %p198 = por %p196, %p197
    %p200 = scmp.ne.s32.totalorder %s183, %s199
    %p201 = scmp.eq.s32.totalorder %s21, 0
    %p202 = por %p200, %p201
    %s203 = ssub.s32 %s22, %s34
    %p204 = scmp.eq.s32.totalorder %s203, 0
    %s206 = sadd.s32 %s205, 1
    %s207 = scalar_select %p204, %s205, %s206
    %p210 = pneg %p204
    %p211 = scmp.eq.s32.totalorder %s15, 1
    %p212 = por %p210, %p211
    %p213 = scmp.ne.s32.totalorder %s205, %s208
    %p214 = scmp.eq.s32.totalorder %s15, 0
    %p215 = por %p213, %p214
    %p216 = scmp.ne.s32.totalorder %s205, %s208
    %p217 = scmp.eq.s32.totalorder %s20, 1
    %p218 = por %p216, %p217
    %p219 = scmp.ne.s32.totalorder %s208, %s209
    %p220 = scmp.eq.s32.totalorder %s20, 0
    %p221 = por %p219, %p220
    %p222 = scmp.ne.s32.totalorder %s208, %s209
    %p223 = scmp.eq.s32.totalorder %s21, 1
    %p224 = por %p222, %p223
    %p226 = scmp.ne.s32.totalorder %s209, %s225
    %p227 = scmp.eq.s32.totalorder %s21, 0
    %p228 = por %p226, %p227
    %s229 = ssub.s32 %s22, %s34
    %p230 = scmp.eq.s32.totalorder %s229, 0
    %s232 = sadd.s32 %s231, 1
    %s233 = scalar_select %p230, %s231, %s232
    %p236 = pneg %p230
    %p237 = scmp.eq.s32.totalorder %s15, 1
    %p238 = por %p236, %p237
    %p239 = scmp.ne.s32.totalorder %s231, %s234
    %p240 = scmp.eq.s32.totalorder %s15, 0
    %p241 = por %p239, %p240
    %p242 = scmp.ne.s32.totalorder %s231, %s234
    %p243 = scmp.eq.s32.totalorder %s20, 1
    %p244 = por %p242, %p243
    %p245 = scmp.ne.s32.totalorder %s234, %s235
    %p246 = scmp.eq.s32.totalorder %s20, 0
    %p247 = por %p245, %p246
    %p248 = scmp.ne.s32.totalorder %s234, %s235
    %p249 = scmp.eq.s32.totalorder %s21, 1
    %p250 = por %p248, %p249
    %p252 = scmp.ne.s32.totalorder %s235, %s251
    %p253 = scmp.eq.s32.totalorder %s21, 0
    %p254 = por %p252, %p253
    %p255 = scmp.le.s32.totalorder 1, %s15
    %p256 = scmp.lt.s32.totalorder %s15, 3
    %p257 = pnand %p255, %p256
    %p258 = pneg %p257
    // Predicated region
    $region9: #{_encode_impl.6} parent=5 // pred_check
      _
    $region10: #{_encode_impl.6} parent=5 // pred_check_branch
      %260 = sbr.rel (%p257) target = $region12
    $region11: #{_encode_impl.6} parent=5 // pred_region
      %s261 = ssub.s32 %s15, 1
      // Predicated region
      $region13: #{_encode_impl.6} parent=11 // pred_check
        %p262 = pneg %p104
      $region14: #{_encode_impl.6} parent=11 // pred_check_branch
        %264 = sbr.rel (%p262) target = $region16
      $region15: #{_encode_impl.6} parent=11 // pred_region
        _
      $region16: #{_encode_impl.6} parent=11 // pred_fallthru
        _
      // Predicated region
      $region17: #{_encode_impl.6} parent=11 // pred_check
        %p265 = pneg %p125
      $region18: #{_encode_impl.6} parent=11 // pred_check_branch
        %267 = sbr.rel (%p265) target = $region20
      $region19: #{_encode_impl.6} parent=11 // pred_region
        _
      $region20: #{_encode_impl.6} parent=11 // pred_fallthru
        _
      // Predicated region
      $region21: #{_encode_impl.6} parent=11 // pred_check
        %p268 = pneg %p146
      $region22: #{_encode_impl.6} parent=11 // pred_check_branch
        %270 = sbr.rel (%p268) target = $region24
      $region23: #{_encode_impl.6} parent=11 // pred_region
        _
      $region24: #{_encode_impl.6} parent=11 // pred_fallthru
        _
      // Predicated region
      $region25: #{_encode_impl.6} parent=11 // pred_check
        %p271 = pneg %p167
      $region26: #{_encode_impl.6} parent=11 // pred_check_branch
        %273 = sbr.rel (%p271) target = $region28
      $region27: #{_encode_impl.6} parent=11 // pred_region
        _
      $region28: #{_encode_impl.6} parent=11 // pred_fallthru
        _
    $region12: #{_encode_impl.6} parent=5 // pred_fallthru
      _
    %p274 = scmp.lt.s32.totalorder %s15, 2
    // Predicated region
    $region29: #{_encode_impl.6} parent=5 // pred_check
      %p275 = pneg %p274
    $region30: #{_encode_impl.6} parent=5 // pred_check_branch
      %277 = sbr.rel (%p275) target = $region32
    $region31: #{_encode_impl.6} parent=5 // pred_region
      // Predicated region
      $region33: #{_encode_impl.6} parent=31 // pred_check
        %p278 = pneg %p49
      $region34: #{_encode_impl.6} parent=31 // pred_check_branch
        %280 = sbr.rel (%p278) target = $region36
      $region35: #{_encode_impl.6} parent=31 // pred_region
        %p281 = scmp.lt.s32.totalorder %s22, 1
        %s282 = scalar_select %p281, %s22, 1
        %p283 = scmp.lt.s32.totalorder %s23, 0
        %s284 = scalar_select %p283, %s23, 0
        %s285 = sadd.s32 %s284, %s282
        %s286 = smul.addr %s285, 4
        %s287 = scalar_lea.vmem %s0, %s286
      $region36: #{_encode_impl.6} parent=31 // pred_fallthru
        _
      // Predicated region
      $region37: #{_encode_impl.6} parent=31 // pred_check
        %p288 = pneg %p77
      $region38: #{_encode_impl.6} parent=31 // pred_check_branch
        %290 = sbr.rel (%p288) target = $region40
      $region39: #{_encode_impl.6} parent=31 // pred_region
        %p291 = scmp.lt.s32.totalorder %s22, 1
        %s292 = scalar_select %p291, %s22, 1
        %p293 = scmp.lt.s32.totalorder %s23, 0
        %s294 = scalar_select %p293, %s23, 0
        %s295 = sadd.s32 %s294, %s292
        %s296 = smul.addr %s295, 4
        %s297 = scalar_lea.vmem %s1, %s296
      $region40: #{_encode_impl.6} parent=31 // pred_fallthru
        _
    $region32: #{_encode_impl.6} parent=5 // pred_fallthru
      _
    %p298 = scmp.le.s32.totalorder 1, %s15
    %p299 = scmp.lt.s32.totalorder %s15, 3
    %p300 = pnand %p298, %p299
    %p301 = pneg %p300
    // Predicated region
    $region41: #{_encode_impl.6} parent=5 // pred_check
      _
    $region42: #{_encode_impl.6} parent=5 // pred_check_branch
      %303 = sbr.rel (%p300) target = $region44
    $region43: #{_encode_impl.6} parent=5 // pred_region
      %s304 = ssub.s32 %s15, 1
      %p305 = scmp.lt.s32.totalorder %s24, 1
      %s306 = scalar_select %p305, %s24, 1
      %p307 = scmp.lt.s32.totalorder %s25, 0
      %s308 = scalar_select %p307, %s25, 0
      %s309 = sadd.s32 %s308, %s306
      %s310 = smul.addr %s309, 4
      %s311 = scalar_lea.vmem %s0, %s310
      %p312 = pneg %p55
      %p313 = pneg %p52
      %p314 = scmp.lt.s32.totalorder %s24, 1
      %s315 = scalar_select %p314, %s24, 1
      %p316 = scmp.lt.s32.totalorder %s25, 0
      %s317 = scalar_select %p316, %s25, 0
      %s318 = sadd.s32 %s317, %s315
      %s319 = smul.addr %s318, 4
      %s320 = scalar_lea.vmem %s1, %s319
      %p321 = pneg %p83
      %p322 = pneg %p80
      %p323 = pneg %p104
      %p324 = pneg %p101
      %p325 = pneg %p125
      %p326 = pneg %p122
      %p327 = pneg %p146
      %p328 = pneg %p143
      %p329 = pneg %p167
      %p330 = pneg %p164
      %p331 = pneg %p195
      %p332 = pneg %p192
      %p333 = scmp.lt.s32.totalorder %s24, 1
      %s334 = scalar_select %p333, %s24, 1
      %p335 = scmp.lt.s32.totalorder %s25, 0
      %s336 = scalar_select %p335, %s25, 0
      %s337 = sadd.s32 %s336, %s334
      %s338 = smul.addr %s337, 4
      %s339 = scalar_lea.vmem %s6, %s338
      %p340 = pneg %p221
      %p341 = pneg %p218
      %p342 = scmp.lt.s32.totalorder %s24, 1
      %s343 = scalar_select %p342, %s24, 1
      %s344 = scalar_lea.vmem %s7, %s343
      %p345 = pneg %p247
      %p346 = pneg %p244
      %p347 = scmp.lt.s32.totalorder %s24, 1
      %s348 = scalar_select %p347, %s24, 1
      %s349 = scalar_lea.vmem %s8, %s348
      %p350 = scmp.lt.s32.totalorder %s24, 1
      %s351 = scalar_select %p350, %s24, 1
      %p352 = scmp.lt.s32.totalorder %s25, 0
      %s353 = scalar_select %p352, %s25, 0
      %s354 = sadd.s32 %s353, %s351
      %s355 = smul.addr %s354, 4
      %s356 = scalar_lea.vmem %s0, %s355
      %p357 = scmp.lt.s32.totalorder %s24, 1
      %s358 = scalar_select %p357, %s24, 1
      %p359 = scmp.lt.s32.totalorder %s25, 0
      %s360 = scalar_select %p359, %s25, 0
      %s361 = sadd.s32 %s360, %s358
      %s362 = smul.addr %s361, 4
      %s363 = scalar_lea.vmem %s1, %s362
      %p364 = scmp.lt.s32.totalorder %s24, 1
      %s365 = scalar_select %p364, %s24, 1
      %p366 = scmp.lt.s32.totalorder %s25, 0
      %s367 = scalar_select %p366, %s25, 0
      %s368 = sadd.s32 %s367, %s365
      %s369 = smul.addr %s368, 4
      %s370 = scalar_lea.vmem %s6, %s369
      %p371 = scmp.lt.s32.totalorder %s24, 1
      %s372 = scalar_select %p371, %s24, 1
      %s373 = scalar_lea.vmem %s7, %s372
      %p374 = scmp.lt.s32.totalorder %s24, 1
      %s375 = scalar_select %p374, %s24, 1
      %s376 = scalar_lea.vmem %s8, %s375
      %v377 = vld [vmem:[%s356] sm:$0xf]
      %v378 = vld [vmem:[%s363] sm:$0xf]
      %v379 = vld [vmem:[%s2] sm:$0xf]
      %v380 = vld [vmem:[%s3] sm:$0xf]
      %382 = vset.pattern.permute.xlu0 0
      %383 = vperm.xlu0 %382, %v380
      %v384 = vpop.permute.xlu0 %383
      %vm386 = vcmask 31744
      %v388 = vsel %vm386, %v379, 0
      %vm390 = vcmask 1043456
      %v392 = vsel %vm390, %v378, 0
      %394 = vmatpush.msra.mxu0 0.0
      %395 = vmatpush.msra.mxu0 0.0
      %396 = vmatpush.msra.mxu0 0.0
      %397 = vmatpush.msra.mxu0 0.0
      %398 = vmatpush.msra.mxu0 0.0
      %399 = vmatpush.msra.mxu0 0.0
      %400 = vmatpush.msra.mxu0 0.0
      %401 = vmatpush.msra.mxu0 0.0
      %402 = vmatpush.msra.mxu0 0.0
      %403 = vmatpush.msra.mxu0 0.0
      %404 = vmatpush.msra.mxu0 0.0
      %405 = vmatpush.msra.mxu0 0.0
      %406 = vmatpush.msra.mxu0 0.0
      %407 = vmatpush.msra.mxu0 0.0
      %408 = vmatpush.msra.mxu0 0.0
      %409 = vmatpush.msra.mxu0 %v392
      %410 = vmatmul.f32.gmra.mxu0 %v388
      %v411 = vpop.f32.mrf.mxu0
      %v412 = vadd.f32 %v384, %v411
      %413 = vdwg.mxu0
      %v414 = vld [vmem:[%s4] sm:$0xf]
      %v415 = vld [vmem:[%s5] sm:$0xf]
      %417 = vset.pattern.permute.xlu0 0
      %418 = vperm.xlu0 %417, %v415
      %v419 = vpop.permute.xlu0 %418
      %v422 = vsel %vm386, %v414, 0
      %424 = vmatpush.msra.mxu0 0.0
      %425 = vmatpush.msra.mxu0 0.0
      %426 = vmatpush.msra.mxu0 0.0
      %427 = vmatpush.msra.mxu0 0.0
      %428 = vmatpush.msra.mxu0 0.0
      %429 = vmatpush.msra.mxu0 0.0
      %430 = vmatpush.msra.mxu0 0.0
      %431 = vmatpush.msra.mxu0 0.0
      %432 = vmatpush.msra.mxu0 0.0
      %433 = vmatpush.msra.mxu0 0.0
      %434 = vmatpush.msra.mxu0 0.0
      %435 = vmatpush.msra.mxu0 0.0
      %436 = vmatpush.msra.mxu0 0.0
      %437 = vmatpush.msra.mxu0 0.0
      %438 = vmatpush.msra.mxu0 0.0
      %439 = vmatpush.msra.mxu0 %v392
      %440 = vmatmul.f32.gmra.mxu0 %v422
      %v441 = vpop.f32.mrf.mxu0
      %v442 = vadd.f32 %v419, %v441
      %443 = vdwg.mxu0
      %v444 = vtanh.pop %v412
      %v445 = vmul.f32 %v444, 0.5
      %v446 = vmul.f32 %v445, 1.442695
      %v447 = vpow.pop %v446
      %v448 = vmul.f32 %v377, %v447
      %v449 = vadd.f32 %v448, %v442
      %vm450 = vcmask 519168
      %451 = vst.msk [vmem:[%s370] sm:$0xf] %vm450, %v449
      %v452 = vsel %vm450, %v445, 0.0
      %453 = vadd.xlane.f32.xlu0 %v452
      %v454 = vpop.xlane.xlu0 %453
      %v455 = vrot.slane %v454, 4
      %v456 = vadd.f32 %v454, %v455
      %v457 = vrot.slane %v456, 2
      %v458 = vadd.f32 %v456, %v457
      %v459 = vrot.slane %v458, 1
      %v460 = vadd.f32 %v458, %v459
      %s461 = vtos %v460
      %v462 = vmul.f32 %v449, %v449
      %vm463 = vcmask 517120
      %v464 = vsel %vm463, %v462, 0.0
      %465 = vadd.xlane.f32.xlu0 %v464
      %v466 = vpop.xlane.xlu0 %465
      %v467 = vrot.slane %v466, 4
      %v468 = vadd.f32 %v466, %v467
      %v469 = vrot.slane %v468, 2
      %v470 = vadd.f32 %v468, %v469
      %v471 = vrot.slane %v470, 1
      %v472 = vadd.f32 %v470, %v471
      %s473 = vtos %v472
      %s474 = smul.f32 %s473, -0.5
      %s475 = ssub.f32 %s474, 117.62413
      %p476 = scmp.eq.s32.totalorder %s25, 0
      // Predicated region
      $region45: #{_encode_impl.6} parent=43 // pred_check
        %p477 = pneg %p476
      $region46: #{_encode_impl.6} parent=43 // pred_check_branch
        %479 = sbr.rel (%p477) target = $region48
      $region47: #{_encode_impl.6} parent=43 // pred_region
        %vm480 = vcmask 0
        %481 = vst.msk [vmem:[%s373] sm:$0x1] %vm480, 0.0
        %482 = vst.msk [vmem:[%s376] sm:$0x1] %vm480, 0.0
      $region48: #{_encode_impl.6} parent=43 // pred_fallthru
        _
      %v483 = vld [vmem:[%s373] sm:$0x1]
      %v484 = vstv %s461
      %v485 = vadd.f32 %v483, %v484
      %vm486 = vcmask 0
      %487 = vst.msk [vmem:[%s373] sm:$0x1] %vm486, %v485
      %v488 = vld [vmem:[%s376] sm:$0x1]
      %v489 = vstv %s475
      %v490 = vadd.f32 %v488, %v489
      %491 = vst.msk [vmem:[%s376] sm:$0x1] %vm486, %v490
      %p492 = scmp.lt.s32.totalorder %s24, 1
      %s493 = scalar_select %p492, %s24, 1
      %p494 = scmp.lt.s32.totalorder %s25, 0
      %s495 = scalar_select %p494, %s25, 0
      %s496 = sadd.s32 %s495, %s493
      %s497 = smul.addr %s496, 4
      %s498 = scalar_lea.vmem %s6, %s497
      %p499 = scmp.lt.s32.totalorder %s24, 1
      %s500 = scalar_select %p499, %s24, 1
      %s501 = scalar_lea.vmem %s7, %s500
      %p502 = scmp.lt.s32.totalorder %s24, 1
      %s503 = scalar_select %p502, %s24, 1
      %s504 = scalar_lea.vmem %s8, %s503
      // Predicated region
      $region49: #{_encode_impl.6} parent=43 // pred_check
        %p505 = pneg %p192
      $region50: #{_encode_impl.6} parent=43 // pred_check_branch
        %507 = sbr.rel (%p505) target = $region52
      $region51: #{_encode_impl.6} parent=43 // pred_region
        _
      $region52: #{_encode_impl.6} parent=43 // pred_fallthru
        _
      // Predicated region
      $region53: #{_encode_impl.6} parent=43 // pred_check
        %p508 = pneg %p218
      $region54: #{_encode_impl.6} parent=43 // pred_check_branch
        %510 = sbr.rel (%p508) target = $region56
      $region55: #{_encode_impl.6} parent=43 // pred_region
        _
      $region56: #{_encode_impl.6} parent=43 // pred_fallthru
        _
      // Predicated region
      $region57: #{_encode_impl.6} parent=43 // pred_check
        %p511 = pneg %p244
      $region58: #{_encode_impl.6} parent=43 // pred_check_branch
        %513 = sbr.rel (%p511) target = $region60
      $region59: #{_encode_impl.6} parent=43 // pred_region
        _
      $region60: #{_encode_impl.6} parent=43 // pred_fallthru
        _
    $region44: #{_encode_impl.6} parent=5 // pred_fallthru
      _
    %p514 = scmp.le.s32.totalorder 2, %s15
    // Predicated region
    $region61: #{_encode_impl.6} parent=5 // pred_check
      %p515 = pneg %p514
    $region62: #{_encode_impl.6} parent=5 // pred_check_branch
      %517 = sbr.rel (%p515) target = $region64
    $region63: #{_encode_impl.6} parent=5 // pred_region
      %s518 = ssub.s32 %s15, 2
      // Predicated region
      $region65: #{_encode_impl.6} parent=63 // pred_check
        %p519 = pneg %p198
      $region66: #{_encode_impl.6} parent=63 // pred_check_branch
        %521 = sbr.rel (%p519) target = $region68
      $region67: #{_encode_impl.6} parent=63 // pred_region
        %p522 = scmp.lt.s32.totalorder %s26, 1
        %s523 = scalar_select %p522, %s26, 1
        %p524 = scmp.lt.s32.totalorder %s27, 0
        %s525 = scalar_select %p524, %s27, 0
        %s526 = sadd.s32 %s525, %s523
        %s527 = smul.addr %s526, 4
        %s528 = scalar_lea.vmem %s6, %s527
      $region68: #{_encode_impl.6} parent=63 // pred_fallthru
        _
      // Predicated region
      $region69: #{_encode_impl.6} parent=63 // pred_check
        %p529 = pneg %p224
      $region70: #{_encode_impl.6} parent=63 // pred_check_branch
        %531 = sbr.rel (%p529) target = $region72
      $region71: #{_encode_impl.6} parent=63 // pred_region
        %p532 = scmp.lt.s32.totalorder %s26, 1
        %s533 = scalar_select %p532, %s26, 1
        %s534 = scalar_lea.vmem %s7, %s533
      $region72: #{_encode_impl.6} parent=63 // pred_fallthru
        _
      // Predicated region
      $region73: #{_encode_impl.6} parent=63 // pred_check
        %p535 = pneg %p250
      $region74: #{_encode_impl.6} parent=63 // pred_check_branch
        %537 = sbr.rel (%p535) target = $region76
      $region75: #{_encode_impl.6} parent=63 // pred_region
        %p538 = scmp.lt.s32.totalorder %s26, 1
        %s539 = scalar_select %p538, %s26, 1
        %s540 = scalar_lea.vmem %s8, %s539
      $region76: #{_encode_impl.6} parent=63 // pred_fallthru
        _
    $region64: #{_encode_impl.6} parent=5 // pred_fallthru
      _
  $region6: #{_encode_impl.6} parent=0 // loop_footer
    %s19 = sadd.s32 1, %s15
  $region7: #{_encode_impl.6} parent=0 // loop_footer_branch
    %14 = sbr.rel target = $region3
  $region8: #{_encode_impl.6} parent=0 // loop_exit
    _

// kernel: _encode_impl.7
$region0: #{_encode_impl.7}
  #allocation0 [shape = 'u32[]', space=smem, size = 0x4, offset = 0x4, fixed_abs, tag = 'smem constant byte address 0x4 - core index']
  #allocation1 [shape = 'u32[72,128]{1,0:T(1,128)}', space=vmem, size = 0x9000, scoped, tag = 'internal scratch']
  %s0 = inlined_call_operand.vmem [shape: f32[2,8,16], index: 0, kind: input, shape index: {}]
  %s1 = inlined_call_operand.vmem [shape: f32[2,16,16], index: 1, kind: input, shape index: {}]
  %s2 = inlined_call_operand.vmem [shape: f32[8,16], index: 2, kind: input, shape index: {}]
  %s3 = inlined_call_operand.vmem [shape: f32[8,1], index: 3, kind: input, shape index: {}]
  %s4 = inlined_call_operand.vmem [shape: f32[8,16], index: 4, kind: input, shape index: {}]
  %s5 = inlined_call_operand.vmem [shape: f32[8,1], index: 5, kind: input, shape index: {}]
  %s6 = inlined_call_operand.vmem [shape: f32[2,8,16], index: 6, kind: output, shape index: {0}]
  %s7 = inlined_call_operand.vmem [shape: f32[2,1,1], index: 7, kind: output, shape index: {1}]
  %s8 = inlined_call_operand.vmem [shape: f32[2,1,1], index: 8, kind: output, shape index: {2}]
  %9 = xla_tuple %s6, %s7, %s8
  %s10 = sld [smem:[#allocation0]]
  $region77: #{_encode_impl.7} parent=0
    _
  %s12 = ssub.s32 1, %s10
  %s13 = scalar_select 0, %s12, %s10
  loop: start=0, step=1, limit=4
  $region2: #{_encode_impl.7} parent=0 // loop_pre_header
    _
  $region3: #{_encode_impl.7} parent=0 // loop_header
    %s15 = sphi 0, %s19
    %p16 = scmp.ge.s32.totalorder %s15, 4
    %s22 = sphi 0, %s34
    %s23 = sphi 0, %s30
    %s24 = sphi 0, %s22
    %s25 = sphi 0, %s23
    %s26 = sphi 0, %s24
    %s27 = sphi 0, %s25
    %s39 = sphi 0, %s41
    %s42 = sphi 0, %s39
    %s43 = sphi 0, %s42
    %s59 = sphi 0, %s43
    %s67 = sphi 0, %s69
    %s70 = sphi 0, %s67
    %s71 = sphi 0, %s70
    %s87 = sphi 0, %s71
    %s91 = sphi 0, %s91
    %s93 = sphi 0, %s91
    %s94 = sphi 0, %s93
    %s108 = sphi 0, %s94
    %s112 = sphi 0, %s112
    %s114 = sphi 0, %s112
    %s115 = sphi 0, %s114
    %s129 = sphi 0, %s115
    %s133 = sphi 0, %s133
    %s135 = sphi 0, %s133
    %s136 = sphi 0, %s135
    %s150 = sphi 0, %s136
    %s154 = sphi 0, %s154
    %s156 = sphi 0, %s154
    %s157 = sphi 0, %s156
    %s171 = sphi 0, %s157
    %s179 = sphi 0, %s181
    %s182 = sphi 0, %s179
    %s183 = sphi 0, %s182
    %s199 = sphi 0, %s183
    %s205 = sphi 0, %s207
    %s208 = sphi 0, %s205
    %s209 = sphi 0, %s208
    %s225 = sphi 0, %s209
    %s231 = sphi 0, %s233
    %s234 = sphi 0, %s231
    %s235 = sphi 0, %s234
    %s251 = sphi 0, %s235
  $region4: #{_encode_impl.7} parent=0 // loop_header_branch
    %18 = sbr.rel (%p16) target = $region8
  $region5: #{_encode_impl.7} parent=0 // loop_body
    %s20 = ssub.s32 %s15, 1
    %s21 = ssub.s32 %s15, 2
    %s28 = sadd.s32 1, %s23
    %p29 = scmp.ge.s32.totalorder %s28, 1
    %s30 = scalar_select %p29, 0, %s28
    %s31 = sadd.s32 1, %s22
    %s32 = scalar_select %p29, %s31, %s22
    %p33 = scmp.ge.s32.totalorder %s32, 2
    %s34 = scalar_select %p33, 0, %s32
    %s35 = ssub.s32 %s22, %s34
    %s36 = ssub.s32 %s23, %s30
    %s37 = sor.u32 %s35, %s36
    %p38 = scmp.eq.s32.totalorder %s37, 0
    %s40 = sadd.s32 %s39, 1
    %s41 = scalar_select %p38, %s39, %s40
    %p44 = pneg %p38
    %p45 = scmp.eq.s32.totalorder %s15, 1
    %p46 = por %p44, %p45
    %p47 = scmp.ne.s32.totalorder %s39, %s42
    %p48 = scmp.eq.s32.totalorder %s15, 0
    %p49 = por %p47, %p48
    %p50 = scmp.ne.s32.totalorder %s39, %s42
    %p51 = scmp.eq.s32.totalorder %s20, 1
    %p52 = por %p50, %p51
    %p53 = scmp.ne.s32.totalorder %s42, %s43
    %p54 = scmp.eq.s32.totalorder %s20, 0
    %p55 = por %p53, %p54
    %p56 = scmp.ne.s32.totalorder %s42, %s43
    %p57 = scmp.eq.s32.totalorder %s21, 1
    %p58 = por %p56, %p57
    %p60 = scmp.ne.s32.totalorder %s43, %s59
    %p61 = scmp.eq.s32.totalorder %s21, 0
    %p62 = por %p60, %p61
    %s63 = ssub.s32 %s22, %s34
    %s64 = ssub.s32 %s23, %s30
    %s65 = sor.u32 %s63, %s64
    %p66 = scmp.eq.s32.totalorder %s65, 0
    %s68 = sadd.s32 %s67, 1
    %s69 = scalar_select %p66, %s67, %s68
    %p72 = pneg %p66
    %p73 = scmp.eq.s32.totalorder %s15, 1
    %p74 = por %p72, %p73
    %p75 = scmp.ne.s32.totalorder %s67, %s70
    %p76 = scmp.eq.s32.totalorder %s15, 0
    %p77 = por %p75, %p76
    %p78 = scmp.ne.s32.totalorder %s67, %s70
    %p79 = scmp.eq.s32.totalorder %s20, 1
    %p80 = por %p78, %p79
    %p81 = scmp.ne.s32.totalorder %s70, %s71
    %p82 = scmp.eq.s32.totalorder %s20, 0
    %p83 = por %p81, %p82
    %p84 = scmp.ne.s32.totalorder %s70, %s71
    %p85 = scmp.eq.s32.totalorder %s21, 1
    %p86 = por %p84, %p85
    %p88 = scmp.ne.s32.totalorder %s71, %s87
    %p89 = scmp.eq.s32.totalorder %s21, 0
    %p90 = por %p88, %p89
    %s92 = sadd.s32 %s91, 1
    %p95 = scmp.eq.s32.totalorder %s15, 1
    %p96 = scmp.ne.s32.totalorder %s91, %s93
    %p97 = scmp.eq.s32.totalorder %s15, 0
    %p98 = por %p96, %p97
    %p99 = scmp.ne.s32.totalorder %s91, %s93
    %p100 = scmp.eq.s32.totalorder %s20, 1
    %p101 = por %p99, %p100
    %p102 = scmp.ne.s32.totalorder %s93, %s94
    %p103 = scmp.eq.s32.totalorder %s20, 0
    %p104 = por %p102, %p103
    %p105 = scmp.ne.s32.totalorder %s93, %s94
    %p106 = scmp.eq.s32.totalorder %s21, 1
    %p107 = por %p105, %p106
    %p109 = scmp.ne.s32.totalorder %s94, %s108
    %p110 = scmp.eq.s32.totalorder %s21, 0
    %p111 = por %p109, %p110
    %s113 = sadd.s32 %s112, 1
    %p116 = scmp.eq.s32.totalorder %s15, 1
    %p117 = scmp.ne.s32.totalorder %s112, %s114
    %p118 = scmp.eq.s32.totalorder %s15, 0
    %p119 = por %p117, %p118
    %p120 = scmp.ne.s32.totalorder %s112, %s114
    %p121 = scmp.eq.s32.totalorder %s20, 1
    %p122 = por %p120, %p121
    %p123 = scmp.ne.s32.totalorder %s114, %s115
    %p124 = scmp.eq.s32.totalorder %s20, 0
    %p125 = por %p123, %p124
    %p126 = scmp.ne.s32.totalorder %s114, %s115
    %p127 = scmp.eq.s32.totalorder %s21, 1
    %p128 = por %p126, %p127
    %p130 = scmp.ne.s32.totalorder %s115, %s129
    %p131 = scmp.eq.s32.totalorder %s21, 0
    %p132 = por %p130, %p131
    %s134 = sadd.s32 %s133, 1
    %p137 = scmp.eq.s32.totalorder %s15, 1
    %p138 = scmp.ne.s32.totalorder %s133, %s135
    %p139 = scmp.eq.s32.totalorder %s15, 0
    %p140 = por %p138, %p139
    %p141 = scmp.ne.s32.totalorder %s133, %s135
    %p142 = scmp.eq.s32.totalorder %s20, 1
    %p143 = por %p141, %p142
    %p144 = scmp.ne.s32.totalorder %s135, %s136
    %p145 = scmp.eq.s32.totalorder %s20, 0
    %p146 = por %p144, %p145
    %p147 = scmp.ne.s32.totalorder %s135, %s136
    %p148 = scmp.eq.s32.totalorder %s21, 1
    %p149 = por %p147, %p148
    %p151 = scmp.ne.s32.totalorder %s136, %s150
    %p152 = scmp.eq.s32.totalorder %s21, 0
    %p153 = por %p151, %p152
    %s155 = sadd.s32 %s154, 1
    %p158 = scmp.eq.s32.totalorder %s15, 1
    %p159 = scmp.ne.s32.totalorder %s154, %s156
    %p160 = scmp.eq.s32.totalorder %s15, 0
    %p161 = por %p159, %p160
    %p162 = scmp.ne.s32.totalorder %s154, %s156
    %p163 = scmp.eq.s32.totalorder %s20, 1
    %p164 = por %p162, %p163
    %p165 = scmp.ne.s32.totalorder %s156, %s157
    %p166 = scmp.eq.s32.totalorder %s20, 0
    %p167 = por %p165, %p166
    %p168 = scmp.ne.s32.totalorder %s156, %s157
    %p169 = scmp.eq.s32.totalorder %s21, 1
    %p170 = por %p168, %p169
    %p172 = scmp.ne.s32.totalorder %s157, %s171
    %p173 = scmp.eq.s32.totalorder %s21, 0
    %p174 = por %p172, %p173
    %s175 = ssub.s32 %s22, %s34
    %s176 = ssub.s32 %s23, %s30
    %s177 = sor.u32 %s175, %s176
    %p178 = scmp.eq.s32.totalorder %s177, 0
    %s180 = sadd.s32 %s179, 1
    %s181 = scalar_select %p178, %s179, %s180
    %p184 = pneg %p178
    %p185 = scmp.eq.s32.totalorder %s15, 1
    %p186 = por %p184, %p185
    %p187 = scmp.ne.s32.totalorder %s179, %s182
    %p188 = scmp.eq.s32.totalorder %s15, 0
    %p189 = por %p187, %p188
    %p190 = scmp.ne.s32.totalorder %s179, %s182
    %p191 = scmp.eq.s32.totalorder %s20, 1
    %p192 = por %p190, %p191
    %p193 = scmp.ne.s32.totalorder %s182, %s183
    %p194 = scmp.eq.s32.totalorder %s20, 0
    %p195 = por %p193, %p194
    %p196 = scmp.ne.s32.totalorder %s182, %s183
    %p197 = scmp.eq.s32.totalorder %s21, 1
    %p198 = por %p196, %p197
    %p200 = scmp.ne.s32.totalorder %s183, %s199
    %p201 = scmp.eq.s32.totalorder %s21, 0
    %p202 = por %p200, %p201
    %s203 = ssub.s32 %s22, %s34
    %p204 = scmp.eq.s32.totalorder %s203, 0
    %s206 = sadd.s32 %s205, 1
    %s207 = scalar_select %p204, %s205, %s206
    %p210 = pneg %p204
    %p211 = scmp.eq.s32.totalorder %s15, 1
    %p212 = por %p210, %p211
    %p213 = scmp.ne.s32.totalorder %s205, %s208
    %p214 = scmp.eq.s32.totalorder %s15, 0
    %p215 = por %p213, %p214
    %p216 = scmp.ne.s32.totalorder %s205, %s208
    %p217 = scmp.eq.s32.totalorder %s20, 1
    %p218 = por %p216, %p217
    %p219 = scmp.ne.s32.totalorder %s208, %s209
    %p220 = scmp.eq.s32.totalorder %s20, 0
    %p221 = por %p219, %p220
    %p222 = scmp.ne.s32.totalorder %s208, %s209
    %p223 = scmp.eq.s32.totalorder %s21, 1
    %p224 = por %p222, %p223
    %p226 = scmp.ne.s32.totalorder %s209, %s225
    %p227 = scmp.eq.s32.totalorder %s21, 0
    %p228 = por %p226, %p227
    %s229 = ssub.s32 %s22, %s34
    %p230 = scmp.eq.s32.totalorder %s229, 0
    %s232 = sadd.s32 %s231, 1
    %s233 = scalar_select %p230, %s231, %s232
    %p236 = pneg %p230
    %p237 = scmp.eq.s32.totalorder %s15, 1
    %p238 = por %p236, %p237
    %p239 = scmp.ne.s32.totalorder %s231, %s234
    %p240 = scmp.eq.s32.totalorder %s15, 0
    %p241 = por %p239, %p240
    %p242 = scmp.ne.s32.totalorder %s231, %s234
    %p243 = scmp.eq.s32.totalorder %s20, 1
    %p244 = por %p242, %p243
    %p245 = scmp.ne.s32.totalorder %s234, %s235
    %p246 = scmp.eq.s32.totalorder %s20, 0
    %p247 = por %p245, %p246
    %p248 = scmp.ne.s32.totalorder %s234, %s235
    %p249 = scmp.eq.s32.totalorder %s21, 1
    %p250 = por %p248, %p249
    %p252 = scmp.ne.s32.totalorder %s235, %s251
    %p253 = scmp.eq.s32.totalorder %s21, 0
    %p254 = por %p252, %p253
    %p255 = scmp.le.s32.totalorder 1, %s15
    %p256 = scmp.lt.s32.totalorder %s15, 3
    %p257 = pnand %p255, %p256
    %p258 = pneg %p257
    // Predicated region
    $region9: #{_encode_impl.7} parent=5 // pred_check
      _
    $region10: #{_encode_impl.7} parent=5 // pred_check_branch
      %260 = sbr.rel (%p257) target = $region12
    $region11: #{_encode_impl.7} parent=5 // pred_region
      %s261 = ssub.s32 %s15, 1
      // Predicated region
      $region13: #{_encode_impl.7} parent=11 // pred_check
        %p262 = pneg %p104
      $region14: #{_encode_impl.7} parent=11 // pred_check_branch
        %264 = sbr.rel (%p262) target = $region16
      $region15: #{_encode_impl.7} parent=11 // pred_region
        _
      $region16: #{_encode_impl.7} parent=11 // pred_fallthru
        _
      // Predicated region
      $region17: #{_encode_impl.7} parent=11 // pred_check
        %p265 = pneg %p125
      $region18: #{_encode_impl.7} parent=11 // pred_check_branch
        %267 = sbr.rel (%p265) target = $region20
      $region19: #{_encode_impl.7} parent=11 // pred_region
        _
      $region20: #{_encode_impl.7} parent=11 // pred_fallthru
        _
      // Predicated region
      $region21: #{_encode_impl.7} parent=11 // pred_check
        %p268 = pneg %p146
      $region22: #{_encode_impl.7} parent=11 // pred_check_branch
        %270 = sbr.rel (%p268) target = $region24
      $region23: #{_encode_impl.7} parent=11 // pred_region
        _
      $region24: #{_encode_impl.7} parent=11 // pred_fallthru
        _
      // Predicated region
      $region25: #{_encode_impl.7} parent=11 // pred_check
        %p271 = pneg %p167
      $region26: #{_encode_impl.7} parent=11 // pred_check_branch
        %273 = sbr.rel (%p271) target = $region28
      $region27: #{_encode_impl.7} parent=11 // pred_region
        _
      $region28: #{_encode_impl.7} parent=11 // pred_fallthru
        _
    $region12: #{_encode_impl.7} parent=5 // pred_fallthru
      _
    %p274 = scmp.lt.s32.totalorder %s15, 2
    // Predicated region
    $region29: #{_encode_impl.7} parent=5 // pred_check
      %p275 = pneg %p274
    $region30: #{_encode_impl.7} parent=5 // pred_check_branch
      %277 = sbr.rel (%p275) target = $region32
    $region31: #{_encode_impl.7} parent=5 // pred_region
      // Predicated region
      $region33: #{_encode_impl.7} parent=31 // pred_check
        %p278 = pneg %p49
      $region34: #{_encode_impl.7} parent=31 // pred_check_branch
        %280 = sbr.rel (%p278) target = $region36
      $region35: #{_encode_impl.7} parent=31 // pred_region
        %p281 = scmp.lt.s32.totalorder %s22, 1
        %s282 = scalar_select %p281, %s22, 1
        %p283 = scmp.lt.s32.totalorder %s23, 0
        %s284 = scalar_select %p283, %s23, 0
        %s285 = sadd.s32 %s284, %s282
        %s286 = smul.addr %s285, 8
        %s287 = scalar_lea.vmem %s0, %s286
      $region36: #{_encode_impl.7} parent=31 // pred_fallthru
        _
      // Predicated region
      $region37: #{_encode_impl.7} parent=31 // pred_check
        %p288 = pneg %p77
      $region38: #{_encode_impl.7} parent=31 // pred_check_branch
        %290 = sbr.rel (%p288) target = $region40
      $region39: #{_encode_impl.7} parent=31 // pred_region
        %p291 = scmp.lt.s32.totalorder %s22, 1
        %s292 = scalar_select %p291, %s22, 1
        %p293 = scmp.lt.s32.totalorder %s23, 0
        %s294 = scalar_select %p293, %s23, 0
        %s295 = smul.addr %s292, 2
        %s296 = sadd.s32 %s294, %s295
        %s297 = smul.addr %s296, 8
        %s298 = scalar_lea.vmem %s1, %s297
      $region40: #{_encode_impl.7} parent=31 // pred_fallthru
        _
    $region32: #{_encode_impl.7} parent=5 // pred_fallthru
      _
    %p299 = scmp.le.s32.totalorder 1, %s15
    %p300 = scmp.lt.s32.totalorder %s15, 3
    %p301 = pnand %p299, %p300
    %p302 = pneg %p301
    // Predicated region
    $region41: #{_encode_impl.7} parent=5 // pred_check
      _
    $region42: #{_encode_impl.7} parent=5 // pred_check_branch
      %304 = sbr.rel (%p301) target = $region44
    $region43: #{_encode_impl.7} parent=5 // pred_region
      %s305 = ssub.s32 %s15, 1
      %p306 = scmp.lt.s32.totalorder %s24, 1
      %s307 = scalar_select %p306, %s24, 1
      %p308 = scmp.lt.s32.totalorder %s25, 0
      %s309 = scalar_select %p308, %s25, 0
      %s310 = sadd.s32 %s309, %s307
      %s311 = smul.addr %s310, 8
      %s312 = scalar_lea.vmem %s0, %s311
      %p313 = pneg %p55
      %p314 = pneg %p52
      %p315 = scmp.lt.s32.totalorder %s24, 1
      %s316 = scalar_select %p315, %s24, 1
      %p317 = scmp.lt.s32.totalorder %s25, 0
      %s318 = scalar_select %p317, %s25, 0
      %s319 = smul.addr %s316, 2
      %s320 = sadd.s32 %s318, %s319
      %s321 = smul.addr %s320, 8
      %s322 = scalar_lea.vmem %s1, %s321
      %p323 = pneg %p83
      %p324 = pneg %p80
      %p325 = pneg %p104
      %p326 = pneg %p101
      %p327 = pneg %p125
      %p328 = pneg %p122
      %p329 = pneg %p146
      %p330 = pneg %p143
      %p331 = pneg %p167
      %p332 = pneg %p164
      %p333 = pneg %p195
      %p334 = pneg %p192
      %p335 = scmp.lt.s32.totalorder %s24, 1
      %s336 = scalar_select %p335, %s24, 1
      %p337 = scmp.lt.s32.totalorder %s25, 0
      %s338 = scalar_select %p337, %s25, 0
      %s339 = sadd.s32 %s338, %s336
      %s340 = smul.addr %s339, 8
      %s341 = scalar_lea.vmem %s6, %s340
      %p342 = pneg %p221
      %p343 = pneg %p218
      %p344 = scmp.lt.s32.totalorder %s24, 1
      %s345 = scalar_select %p344, %s24, 1
      %s346 = scalar_lea.vmem %s7, %s345
      %p347 = pneg %p247
      %p348 = pneg %p244
      %p349 = scmp.lt.s32.totalorder %s24, 1
      %s350 = scalar_select %p349, %s24, 1
      %s351 = scalar_lea.vmem %s8, %s350
      %p352 = scmp.lt.s32.totalorder %s24, 1
      %s353 = scalar_select %p352, %s24, 1
      %p354 = scmp.lt.s32.totalorder %s25, 0
      %s355 = scalar_select %p354, %s25, 0
      %s356 = sadd.s32 %s355, %s353
      %s357 = smul.addr %s356, 8
      %s358 = scalar_lea.vmem %s0, %s357
      %p359 = scmp.lt.s32.totalorder %s24, 1
      %s360 = scalar_select %p359, %s24, 1
      %p361 = scmp.lt.s32.totalorder %s25, 0
      %s362 = scalar_select %p361, %s25, 0
      %s363 = smul.addr %s360, 2
      %s364 = sadd.s32 %s362, %s363
      %s365 = smul.addr %s364, 8
      %s366 = scalar_lea.vmem %s1, %s365
      %p367 = scmp.lt.s32.totalorder %s24, 1
      %s368 = scalar_select %p367, %s24, 1
      %p369 = scmp.lt.s32.totalorder %s25, 0
      %s370 = scalar_select %p369, %s25, 0
      %s371 = sadd.s32 %s370, %s368
      %s372 = smul.addr %s371, 8
      %s373 = scalar_lea.vmem %s6, %s372
      %p374 = scmp.lt.s32.totalorder %s24, 1
      %s375 = scalar_select %p374, %s24, 1
      %s376 = scalar_lea.vmem %s7, %s375
      %p377 = scmp.lt.s32.totalorder %s24, 1
      %s378 = scalar_select %p377, %s24, 1
      %s379 = scalar_lea.vmem %s8, %s378
      %v380 = vld [vmem:[%s358] sm:$0xff]
      %v381 = vld [vmem:[%s366] sm:$0xff]
      %v382 = vld [vmem:[%s366 + $0x8] sm:$0xff]
      %v383 = vld [vmem:[%s2] sm:$0xff]
      %v384 = vld [vmem:[%s3] sm:$0xff]
      %386 = vset.pattern.permute.xlu0 0
      %387 = vperm.xlu0 %386, %v384
      %v388 = vpop.permute.xlu0 %387
      %vm390 = vcmask 130048
      %v392 = vsel %vm390, %v383, 0
      %394 = vmatpush.msra.mxu0 0.0
      %395 = vmatpush.msra.mxu0 0.0
      %396 = vmatpush.msra.mxu0 0.0
      %397 = vmatpush.msra.mxu0 0.0
      %398 = vmatpush.msra.mxu0 0.0
      %399 = vmatpush.msra.mxu0 0.0
      %400 = vmatpush.msra.mxu0 0.0
      %401 = vmatpush.msra.mxu0 0.0
      %402 = vmatpush.msra.mxu0 0.0
      %403 = vmatpush.msra.mxu0 0.0
      %404 = vmatpush.msra.mxu0 0.0
      %405 = vmatpush.msra.mxu0 0.0
      %406 = vmatpush.msra.mxu0 0.0
      %407 = vmatpush.msra.mxu0 0.0
      %408 = vmatpush.msra.mxu0 %v382
      %409 = vmatpush.msra.mxu0 %v381
      %410 = vmatmul.f32.gmra.mxu0 %v392
      %v411 = vpop.f32.mrf.mxu0
      %v412 = vadd.f32 %v388, %v411
      %413 = vdwg.mxu0
      %v414 = vld [vmem:[%s4] sm:$0xff]
      %v415 = vld [vmem:[%s5] sm:$0xff]
      %417 = vset.pattern.permute.xlu0 0
      %418 = vperm.xlu0 %417, %v415
      %v419 = vpop.permute.xlu0 %418
      %v422 = vsel %vm390, %v414, 0
      %424 = vmatpush.msra.mxu0 0.0
      %425 = vmatpush.msra.mxu0 0.0
      %426 = vmatpush.msra.mxu0 0.0
      %427 = vmatpush.msra.mxu0 0.0
      %428 = vmatpush.msra.mxu0 0.0
      %429 = vmatpush.msra.mxu0 0.0
      %430 = vmatpush.msra.mxu0 0.0
      %431 = vmatpush.msra.mxu0 0.0
      %432 = vmatpush.msra.mxu0 0.0
      %433 = vmatpush.msra.mxu0 0.0
      %434 = vmatpush.msra.mxu0 0.0
      %435 = vmatpush.msra.mxu0 0.0
      %436 = vmatpush.msra.mxu0 0.0
      %437 = vmatpush.msra.mxu0 0.0
      %438 = vmatpush.msra.mxu0 %v382
      %439 = vmatpush.msra.mxu0 %v381
      %440 = vmatmul.f32.gmra.mxu0 %v422
      %v441 = vpop.f32.mrf.mxu0
      %v442 = vadd.f32 %v419, %v441
      %443 = vdwg.mxu0
      %v444 = vtanh.pop %v412
      %v445 = vmul.f32 %v444, 0.5
      %v446 = vmul.f32 %v445, 1.442695
      %v447 = vpow.pop %v446
      %v448 = vmul.f32 %v380, %v447
      %v449 = vadd.f32 %v448, %v442
      %450 = vst.msk [vmem:[%s373] sm:$0xff] %vm390, %v449
      %v451 = vsel %vm390, %v445, 0.0
      %452 = vadd.xlane.f32.xlu0 %v451
      %v453 = vpop.xlane.xlu0 %452
      %v454 = vrot.slane %v453, 4
      %v455 = vadd.f32 %v453, %v454
      %v456 = vrot.slane %v455, 2
      %v457 = vadd.f32 %v455, %v456
      %v458 = vrot.slane %v457, 1
      %v459 = vadd.f32 %v457, %v458
      %s460 = vtos %v459
      %v461 = vmul.f32 %v449, %v449
      %vm462 = vcmask 125952
      %v463 = vsel %vm462, %v461, 0.0
      %464 = vadd.xlane.f32.xlu0 %v463
      %v465 = vpop.xlane.xlu0 %464
      %v466 = vrot.slane %v465, 4
      %v467 = vadd.f32 %v465, %v466
      %v468 = vrot.slane %v467, 2
      %v469 = vadd.f32 %v467, %v468
      %v470 = vrot.slane %v469, 1
      %v471 = vadd.f32 %v469, %v470
      %s472 = vtos %v471
      %s473 = smul.f32 %s472, -0.5
      %s474 = ssub.f32 %s473, 58.812065
      %p475 = scmp.eq.s32.totalorder %s25, 0
      // Predicated region
      $region45: #{_encode_impl.7} parent=43 // pred_check
        %p476 = pneg %p475
      $region46: #{_encode_impl.7} parent=43 // pred_check_branch
        %478 = sbr.rel (%p476) target = $region48
      $region47: #{_encode_impl.7} parent=43 // pred_region
        %vm479 = vcmask 0
        %480 = vst.msk [vmem:[%s376] sm:$0x1] %vm479, 0.0
        %481 = vst.msk [vmem:[%s379] sm:$0x1] %vm479, 0.0
      $region48: #{_encode_impl.7} parent=43 // pred_fallthru
        _
      %v482 = vld [vmem:[%s376] sm:$0x1]
      %v483 = vstv %s460
      %v484 = vadd.f32 %v482, %v483
      %vm485 = vcmask 0
      %486 = vst.msk [vmem:[%s376] sm:$0x1] %vm485, %v484
      %v487 = vld [vmem:[%s379] sm:$0x1]
      %v488 = vstv %s474
      %v489 = vadd.f32 %v487, %v488
      %490 = vst.msk [vmem:[%s379] sm:$0x1] %vm485, %v489
      %p491 = scmp.lt.s32.totalorder %s24, 1
      %s492 = scalar_select %p491, %s24, 1
      %p493 = scmp.lt.s32.totalorder %s25, 0
      %s494 = scalar_select %p493, %s25, 0
      %s495 = sadd.s32 %s494, %s492
      %s496 = smul.addr %s495, 8
      %s497 = scalar_lea.vmem %s6, %s496
      %p498 = scmp.lt.s32.totalorder %s24, 1
      %s499 = scalar_select %p498, %s24, 1
      %s500 = scalar_lea.vmem %s7, %s499
      %p501 = scmp.lt.s32.totalorder %s24, 1
      %s502 = scalar_select %p501, %s24, 1
      %s503 = scalar_lea.vmem %s8, %s502
      // Predicated region
      $region49: #{_encode_impl.7} parent=43 // pred_check
        %p504 = pneg %p192
      $region50: #{_encode_impl.7} parent=43 // pred_check_branch
        %506 = sbr.rel (%p504) target = $region52
      $region51: #{_encode_impl.7} parent=43 // pred_region
        _
      $region52: #{_encode_impl.7} parent=43 // pred_fallthru
        _
      // Predicated region
      $region53: #{_encode_impl.7} parent=43 // pred_check
        %p507 = pneg %p218
      $region54: #{_encode_impl.7} parent=43 // pred_check_branch
        %509 = sbr.rel (%p507) target = $region56
      $region55: #{_encode_impl.7} parent=43 // pred_region
        _
      $region56: #{_encode_impl.7} parent=43 // pred_fallthru
        _
      // Predicated region
      $region57: #{_encode_impl.7} parent=43 // pred_check
        %p510 = pneg %p244
      $region58: #{_encode_impl.7} parent=43 // pred_check_branch
        %512 = sbr.rel (%p510) target = $region60
      $region59: #{_encode_impl.7} parent=43 // pred_region
        _
      $region60: #{_encode_impl.7} parent=43 // pred_fallthru
        _
    $region44: #{_encode_impl.7} parent=5 // pred_fallthru
      _
    %p513 = scmp.le.s32.totalorder 2, %s15
    // Predicated region
    $region61: #{_encode_impl.7} parent=5 // pred_check
      %p514 = pneg %p513
    $region62: #{_encode_impl.7} parent=5 // pred_check_branch
      %516 = sbr.rel (%p514) target = $region64
    $region63: #{_encode_impl.7} parent=5 // pred_region
      %s517 = ssub.s32 %s15, 2
      // Predicated region
      $region65: #{_encode_impl.7} parent=63 // pred_check
        %p518 = pneg %p198
      $region66: #{_encode_impl.7} parent=63 // pred_check_branch
        %520 = sbr.rel (%p518) target = $region68
      $region67: #{_encode_impl.7} parent=63 // pred_region
        %p521 = scmp.lt.s32.totalorder %s26, 1
        %s522 = scalar_select %p521, %s26, 1
        %p523 = scmp.lt.s32.totalorder %s27, 0
        %s524 = scalar_select %p523, %s27, 0
        %s525 = sadd.s32 %s524, %s522
        %s526 = smul.addr %s525, 8
        %s527 = scalar_lea.vmem %s6, %s526
      $region68: #{_encode_impl.7} parent=63 // pred_fallthru
        _
      // Predicated region
      $region69: #{_encode_impl.7} parent=63 // pred_check
        %p528 = pneg %p224
      $region70: #{_encode_impl.7} parent=63 // pred_check_branch
        %530 = sbr.rel (%p528) target = $region72
      $region71: #{_encode_impl.7} parent=63 // pred_region
        %p531 = scmp.lt.s32.totalorder %s26, 1
        %s532 = scalar_select %p531, %s26, 1
        %s533 = scalar_lea.vmem %s7, %s532
      $region72: #{_encode_impl.7} parent=63 // pred_fallthru
        _
      // Predicated region
      $region73: #{_encode_impl.7} parent=63 // pred_check
        %p534 = pneg %p250
      $region74: #{_encode_impl.7} parent=63 // pred_check_branch
        %536 = sbr.rel (%p534) target = $region76
      $region75: #{_encode_impl.7} parent=63 // pred_region
        %p537 = scmp.lt.s32.totalorder %s26, 1
        %s538 = scalar_select %p537, %s26, 1
        %s539 = scalar_lea.vmem %s8, %s538
      $region76: #{_encode_impl.7} parent=63 // pred_fallthru
        _
    $region64: #{_encode_impl.7} parent=5 // pred_fallthru
      _
  $region6: #{_encode_impl.7} parent=0 // loop_footer
    %s19 = sadd.s32 1, %s15
  $region7: #{_encode_impl.7} parent=0 // loop_footer_branch
    %14 = sbr.rel target = $region3
  $region8: #{_encode_impl.7} parent=0 // loop_exit
    _

// kernel: _encode_impl.9
$region0: #{_encode_impl.9}
  #allocation0 [shape = 'u32[]', space=smem, size = 0x4, offset = 0x4, fixed_abs, tag = 'smem constant byte address 0x4 - core index']
  #allocation1 [shape = 'u32[72,128]{1,0:T(1,128)}', space=vmem, size = 0x9000, scoped, tag = 'internal scratch']
  %s0 = inlined_call_operand.vmem [shape: f32[2,8,16], index: 0, kind: input, shape index: {}]
  %s1 = inlined_call_operand.vmem [shape: f32[2,8,16], index: 1, kind: input, shape index: {}]
  %s2 = inlined_call_operand.vmem [shape: f32[8,8], index: 2, kind: input, shape index: {}]
  %s3 = inlined_call_operand.vmem [shape: f32[8,1], index: 3, kind: input, shape index: {}]
  %s4 = inlined_call_operand.vmem [shape: f32[8,8], index: 4, kind: input, shape index: {}]
  %s5 = inlined_call_operand.vmem [shape: f32[8,1], index: 5, kind: input, shape index: {}]
  %s6 = inlined_call_operand.vmem [shape: f32[2,8,16], index: 6, kind: output, shape index: {0}]
  %s7 = inlined_call_operand.vmem [shape: f32[2,1,1], index: 7, kind: output, shape index: {1}]
  %s8 = inlined_call_operand.vmem [shape: f32[2,1,1], index: 8, kind: output, shape index: {2}]
  %9 = xla_tuple %s6, %s7, %s8
  %s10 = sld [smem:[#allocation0]]
  $region77: #{_encode_impl.9} parent=0
    _
  %s12 = ssub.s32 1, %s10
  %s13 = scalar_select 0, %s12, %s10
  loop: start=0, step=1, limit=4
  $region2: #{_encode_impl.9} parent=0 // loop_pre_header
    _
  $region3: #{_encode_impl.9} parent=0 // loop_header
    %s15 = sphi 0, %s19
    %p16 = scmp.ge.s32.totalorder %s15, 4
    %s22 = sphi 0, %s34
    %s23 = sphi 0, %s30
    %s24 = sphi 0, %s22
    %s25 = sphi 0, %s23
    %s26 = sphi 0, %s24
    %s27 = sphi 0, %s25
    %s39 = sphi 0, %s41
    %s42 = sphi 0, %s39
    %s43 = sphi 0, %s42
    %s59 = sphi 0, %s43
    %s67 = sphi 0, %s69
    %s70 = sphi 0, %s67
    %s71 = sphi 0, %s70
    %s87 = sphi 0, %s71
    %s91 = sphi 0, %s91
    %s93 = sphi 0, %s91
    %s94 = sphi 0, %s93
    %s108 = sphi 0, %s94
    %s112 = sphi 0, %s112
    %s114 = sphi 0, %s112
    %s115 = sphi 0, %s114
    %s129 = sphi 0, %s115
    %s133 = sphi 0, %s133
    %s135 = sphi 0, %s133
    %s136 = sphi 0, %s135
    %s150 = sphi 0, %s136
    %s154 = sphi 0, %s154
    %s156 = sphi 0, %s154
    %s157 = sphi 0, %s156
    %s171 = sphi 0, %s157
    %s179 = sphi 0, %s181
    %s182 = sphi 0, %s179
    %s183 = sphi 0, %s182
    %s199 = sphi 0, %s183
    %s205 = sphi 0, %s207
    %s208 = sphi 0, %s205
    %s209 = sphi 0, %s208
    %s225 = sphi 0, %s209
    %s231 = sphi 0, %s233
    %s234 = sphi 0, %s231
    %s235 = sphi 0, %s234
    %s251 = sphi 0, %s235
  $region4: #{_encode_impl.9} parent=0 // loop_header_branch
    %18 = sbr.rel (%p16) target = $region8
  $region5: #{_encode_impl.9} parent=0 // loop_body
    %s20 = ssub.s32 %s15, 1
    %s21 = ssub.s32 %s15, 2
    %s28 = sadd.s32 1, %s23
    %p29 = scmp.ge.s32.totalorder %s28, 1
    %s30 = scalar_select %p29, 0, %s28
    %s31 = sadd.s32 1, %s22
    %s32 = scalar_select %p29, %s31, %s22
    %p33 = scmp.ge.s32.totalorder %s32, 2
    %s34 = scalar_select %p33, 0, %s32
    %s35 = ssub.s32 %s22, %s34
    %s36 = ssub.s32 %s23, %s30
    %s37 = sor.u32 %s35, %s36
    %p38 = scmp.eq.s32.totalorder %s37, 0
    %s40 = sadd.s32 %s39, 1
    %s41 = scalar_select %p38, %s39, %s40
    %p44 = pneg %p38
    %p45 = scmp.eq.s32.totalorder %s15, 1
    %p46 = por %p44, %p45
    %p47 = scmp.ne.s32.totalorder %s39, %s42
    %p48 = scmp.eq.s32.totalorder %s15, 0
    %p49 = por %p47, %p48
    %p50 = scmp.ne.s32.totalorder %s39, %s42
    %p51 = scmp.eq.s32.totalorder %s20, 1
    %p52 = por %p50, %p51
    %p53 = scmp.ne.s32.totalorder %s42, %s43
    %p54 = scmp.eq.s32.totalorder %s20, 0
    %p55 = por %p53, %p54
    %p56 = scmp.ne.s32.totalorder %s42, %s43
    %p57 = scmp.eq.s32.totalorder %s21, 1
    %p58 = por %p56, %p57
    %p60 = scmp.ne.s32.totalorder %s43, %s59
    %p61 = scmp.eq.s32.totalorder %s21, 0
    %p62 = por %p60, %p61
    %s63 = ssub.s32 %s22, %s34
    %s64 = ssub.s32 %s23, %s30
    %s65 = sor.u32 %s63, %s64
    %p66 = scmp.eq.s32.totalorder %s65, 0
    %s68 = sadd.s32 %s67, 1
    %s69 = scalar_select %p66, %s67, %s68
    %p72 = pneg %p66
    %p73 = scmp.eq.s32.totalorder %s15, 1
    %p74 = por %p72, %p73
    %p75 = scmp.ne.s32.totalorder %s67, %s70
    %p76 = scmp.eq.s32.totalorder %s15, 0
    %p77 = por %p75, %p76
    %p78 = scmp.ne.s32.totalorder %s67, %s70
    %p79 = scmp.eq.s32.totalorder %s20, 1
    %p80 = por %p78, %p79
    %p81 = scmp.ne.s32.totalorder %s70, %s71
    %p82 = scmp.eq.s32.totalorder %s20, 0
    %p83 = por %p81, %p82
    %p84 = scmp.ne.s32.totalorder %s70, %s71
    %p85 = scmp.eq.s32.totalorder %s21, 1
    %p86 = por %p84, %p85
    %p88 = scmp.ne.s32.totalorder %s71, %s87
    %p89 = scmp.eq.s32.totalorder %s21, 0
    %p90 = por %p88, %p89
    %s92 = sadd.s32 %s91, 1
    %p95 = scmp.eq.s32.totalorder %s15, 1
    %p96 = scmp.ne.s32.totalorder %s91, %s93
    %p97 = scmp.eq.s32.totalorder %s15, 0
    %p98 = por %p96, %p97
    %p99 = scmp.ne.s32.totalorder %s91, %s93
    %p100 = scmp.eq.s32.totalorder %s20, 1
    %p101 = por %p99, %p100
    %p102 = scmp.ne.s32.totalorder %s93, %s94
    %p103 = scmp.eq.s32.totalorder %s20, 0
    %p104 = por %p102, %p103
    %p105 = scmp.ne.s32.totalorder %s93, %s94
    %p106 = scmp.eq.s32.totalorder %s21, 1
    %p107 = por %p105, %p106
    %p109 = scmp.ne.s32.totalorder %s94, %s108
    %p110 = scmp.eq.s32.totalorder %s21, 0
    %p111 = por %p109, %p110
    %s113 = sadd.s32 %s112, 1
    %p116 = scmp.eq.s32.totalorder %s15, 1
    %p117 = scmp.ne.s32.totalorder %s112, %s114
    %p118 = scmp.eq.s32.totalorder %s15, 0
    %p119 = por %p117, %p118
    %p120 = scmp.ne.s32.totalorder %s112, %s114
    %p121 = scmp.eq.s32.totalorder %s20, 1
    %p122 = por %p120, %p121
    %p123 = scmp.ne.s32.totalorder %s114, %s115
    %p124 = scmp.eq.s32.totalorder %s20, 0
    %p125 = por %p123, %p124
    %p126 = scmp.ne.s32.totalorder %s114, %s115
    %p127 = scmp.eq.s32.totalorder %s21, 1
    %p128 = por %p126, %p127
    %p130 = scmp.ne.s32.totalorder %s115, %s129
    %p131 = scmp.eq.s32.totalorder %s21, 0
    %p132 = por %p130, %p131
    %s134 = sadd.s32 %s133, 1
    %p137 = scmp.eq.s32.totalorder %s15, 1
    %p138 = scmp.ne.s32.totalorder %s133, %s135
    %p139 = scmp.eq.s32.totalorder %s15, 0
    %p140 = por %p138, %p139
    %p141 = scmp.ne.s32.totalorder %s133, %s135
    %p142 = scmp.eq.s32.totalorder %s20, 1
    %p143 = por %p141, %p142
    %p144 = scmp.ne.s32.totalorder %s135, %s136
    %p145 = scmp.eq.s32.totalorder %s20, 0
    %p146 = por %p144, %p145
    %p147 = scmp.ne.s32.totalorder %s135, %s136
    %p148 = scmp.eq.s32.totalorder %s21, 1
    %p149 = por %p147, %p148
    %p151 = scmp.ne.s32.totalorder %s136, %s150
    %p152 = scmp.eq.s32.totalorder %s21, 0
    %p153 = por %p151, %p152
    %s155 = sadd.s32 %s154, 1
    %p158 = scmp.eq.s32.totalorder %s15, 1
    %p159 = scmp.ne.s32.totalorder %s154, %s156
    %p160 = scmp.eq.s32.totalorder %s15, 0
    %p161 = por %p159, %p160
    %p162 = scmp.ne.s32.totalorder %s154, %s156
    %p163 = scmp.eq.s32.totalorder %s20, 1
    %p164 = por %p162, %p163
    %p165 = scmp.ne.s32.totalorder %s156, %s157
    %p166 = scmp.eq.s32.totalorder %s20, 0
    %p167 = por %p165, %p166
    %p168 = scmp.ne.s32.totalorder %s156, %s157
    %p169 = scmp.eq.s32.totalorder %s21, 1
    %p170 = por %p168, %p169
    %p172 = scmp.ne.s32.totalorder %s157, %s171
    %p173 = scmp.eq.s32.totalorder %s21, 0
    %p174 = por %p172, %p173
    %s175 = ssub.s32 %s22, %s34
    %s176 = ssub.s32 %s23, %s30
    %s177 = sor.u32 %s175, %s176
    %p178 = scmp.eq.s32.totalorder %s177, 0
    %s180 = sadd.s32 %s179, 1
    %s181 = scalar_select %p178, %s179, %s180
    %p184 = pneg %p178
    %p185 = scmp.eq.s32.totalorder %s15, 1
    %p186 = por %p184, %p185
    %p187 = scmp.ne.s32.totalorder %s179, %s182
    %p188 = scmp.eq.s32.totalorder %s15, 0
    %p189 = por %p187, %p188
    %p190 = scmp.ne.s32.totalorder %s179, %s182
    %p191 = scmp.eq.s32.totalorder %s20, 1
    %p192 = por %p190, %p191
    %p193 = scmp.ne.s32.totalorder %s182, %s183
    %p194 = scmp.eq.s32.totalorder %s20, 0
    %p195 = por %p193, %p194
    %p196 = scmp.ne.s32.totalorder %s182, %s183
    %p197 = scmp.eq.s32.totalorder %s21, 1
    %p198 = por %p196, %p197
    %p200 = scmp.ne.s32.totalorder %s183, %s199
    %p201 = scmp.eq.s32.totalorder %s21, 0
    %p202 = por %p200, %p201
    %s203 = ssub.s32 %s22, %s34
    %p204 = scmp.eq.s32.totalorder %s203, 0
    %s206 = sadd.s32 %s205, 1
    %s207 = scalar_select %p204, %s205, %s206
    %p210 = pneg %p204
    %p211 = scmp.eq.s32.totalorder %s15, 1
    %p212 = por %p210, %p211
    %p213 = scmp.ne.s32.totalorder %s205, %s208
    %p214 = scmp.eq.s32.totalorder %s15, 0
    %p215 = por %p213, %p214
    %p216 = scmp.ne.s32.totalorder %s205, %s208
    %p217 = scmp.eq.s32.totalorder %s20, 1
    %p218 = por %p216, %p217
    %p219 = scmp.ne.s32.totalorder %s208, %s209
    %p220 = scmp.eq.s32.totalorder %s20, 0
    %p221 = por %p219, %p220
    %p222 = scmp.ne.s32.totalorder %s208, %s209
    %p223 = scmp.eq.s32.totalorder %s21, 1
    %p224 = por %p222, %p223
    %p226 = scmp.ne.s32.totalorder %s209, %s225
    %p227 = scmp.eq.s32.totalorder %s21, 0
    %p228 = por %p226, %p227
    %s229 = ssub.s32 %s22, %s34
    %p230 = scmp.eq.s32.totalorder %s229, 0
    %s232 = sadd.s32 %s231, 1
    %s233 = scalar_select %p230, %s231, %s232
    %p236 = pneg %p230
    %p237 = scmp.eq.s32.totalorder %s15, 1
    %p238 = por %p236, %p237
    %p239 = scmp.ne.s32.totalorder %s231, %s234
    %p240 = scmp.eq.s32.totalorder %s15, 0
    %p241 = por %p239, %p240
    %p242 = scmp.ne.s32.totalorder %s231, %s234
    %p243 = scmp.eq.s32.totalorder %s20, 1
    %p244 = por %p242, %p243
    %p245 = scmp.ne.s32.totalorder %s234, %s235
    %p246 = scmp.eq.s32.totalorder %s20, 0
    %p247 = por %p245, %p246
    %p248 = scmp.ne.s32.totalorder %s234, %s235
    %p249 = scmp.eq.s32.totalorder %s21, 1
    %p250 = por %p248, %p249
    %p252 = scmp.ne.s32.totalorder %s235, %s251
    %p253 = scmp.eq.s32.totalorder %s21, 0
    %p254 = por %p252, %p253
    %p255 = scmp.le.s32.totalorder 1, %s15
    %p256 = scmp.lt.s32.totalorder %s15, 3
    %p257 = pnand %p255, %p256
    %p258 = pneg %p257
    // Predicated region
    $region9: #{_encode_impl.9} parent=5 // pred_check
      _
    $region10: #{_encode_impl.9} parent=5 // pred_check_branch
      %260 = sbr.rel (%p257) target = $region12
    $region11: #{_encode_impl.9} parent=5 // pred_region
      %s261 = ssub.s32 %s15, 1
      // Predicated region
      $region13: #{_encode_impl.9} parent=11 // pred_check
        %p262 = pneg %p104
      $region14: #{_encode_impl.9} parent=11 // pred_check_branch
        %264 = sbr.rel (%p262) target = $region16
      $region15: #{_encode_impl.9} parent=11 // pred_region
        _
      $region16: #{_encode_impl.9} parent=11 // pred_fallthru
        _
      // Predicated region
      $region17: #{_encode_impl.9} parent=11 // pred_check
        %p265 = pneg %p125
      $region18: #{_encode_impl.9} parent=11 // pred_check_branch
        %267 = sbr.rel (%p265) target = $region20
      $region19: #{_encode_impl.9} parent=11 // pred_region
        _
      $region20: #{_encode_impl.9} parent=11 // pred_fallthru
        _
      // Predicated region
      $region21: #{_encode_impl.9} parent=11 // pred_check
        %p268 = pneg %p146
      $region22: #{_encode_impl.9} parent=11 // pred_check_branch
        %270 = sbr.rel (%p268) target = $region24
      $region23: #{_encode_impl.9} parent=11 // pred_region
        _
      $region24: #{_encode_impl.9} parent=11 // pred_fallthru
        _
      // Predicated region
      $region25: #{_encode_impl.9} parent=11 // pred_check
        %p271 = pneg %p167
      $region26: #{_encode_impl.9} parent=11 // pred_check_branch
        %273 = sbr.rel (%p271) target = $region28
      $region27: #{_encode_impl.9} parent=11 // pred_region
        _
      $region28: #{_encode_impl.9} parent=11 // pred_fallthru
        _
    $region12: #{_encode_impl.9} parent=5 // pred_fallthru
      _
    %p274 = scmp.lt.s32.totalorder %s15, 2
    // Predicated region
    $region29: #{_encode_impl.9} parent=5 // pred_check
      %p275 = pneg %p274
    $region30: #{_encode_impl.9} parent=5 // pred_check_branch
      %277 = sbr.rel (%p275) target = $region32
    $region31: #{_encode_impl.9} parent=5 // pred_region
      // Predicated region
      $region33: #{_encode_impl.9} parent=31 // pred_check
        %p278 = pneg %p49
      $region34: #{_encode_impl.9} parent=31 // pred_check_branch
        %280 = sbr.rel (%p278) target = $region36
      $region35: #{_encode_impl.9} parent=31 // pred_region
        %p281 = scmp.lt.s32.totalorder %s22, 1
        %s282 = scalar_select %p281, %s22, 1
        %p283 = scmp.lt.s32.totalorder %s23, 0
        %s284 = scalar_select %p283, %s23, 0
        %s285 = sadd.s32 %s284, %s282
        %s286 = smul.addr %s285, 8
        %s287 = scalar_lea.vmem %s0, %s286
      $region36: #{_encode_impl.9} parent=31 // pred_fallthru
        _
      // Predicated region
      $region37: #{_encode_impl.9} parent=31 // pred_check
        %p288 = pneg %p77
      $region38: #{_encode_impl.9} parent=31 // pred_check_branch
        %290 = sbr.rel (%p288) target = $region40
      $region39: #{_encode_impl.9} parent=31 // pred_region
        %p291 = scmp.lt.s32.totalorder %s22, 1
        %s292 = scalar_select %p291, %s22, 1
        %p293 = scmp.lt.s32.totalorder %s23, 0
        %s294 = scalar_select %p293, %s23, 0
        %s295 = sadd.s32 %s294, %s292
        %s296 = smul.addr %s295, 8
        %s297 = scalar_lea.vmem %s1, %s296
      $region40: #{_encode_impl.9} parent=31 // pred_fallthru
        _
    $region32: #{_encode_impl.9} parent=5 // pred_fallthru
      _
    %p298 = scmp.le.s32.totalorder 1, %s15
    %p299 = scmp.lt.s32.totalorder %s15, 3
    %p300 = pnand %p298, %p299
    %p301 = pneg %p300
    // Predicated region
    $region41: #{_encode_impl.9} parent=5 // pred_check
      _
    $region42: #{_encode_impl.9} parent=5 // pred_check_branch
      %303 = sbr.rel (%p300) target = $region44
    $region43: #{_encode_impl.9} parent=5 // pred_region
      %s304 = ssub.s32 %s15, 1
      %p305 = scmp.lt.s32.totalorder %s24, 1
      %s306 = scalar_select %p305, %s24, 1
      %p307 = scmp.lt.s32.totalorder %s25, 0
      %s308 = scalar_select %p307, %s25, 0
      %s309 = sadd.s32 %s308, %s306
      %s310 = smul.addr %s309, 8
      %s311 = scalar_lea.vmem %s0, %s310
      %p312 = pneg %p55
      %p313 = pneg %p52
      %p314 = scmp.lt.s32.totalorder %s24, 1
      %s315 = scalar_select %p314, %s24, 1
      %p316 = scmp.lt.s32.totalorder %s25, 0
      %s317 = scalar_select %p316, %s25, 0
      %s318 = sadd.s32 %s317, %s315
      %s319 = smul.addr %s318, 8
      %s320 = scalar_lea.vmem %s1, %s319
      %p321 = pneg %p83
      %p322 = pneg %p80
      %p323 = pneg %p104
      %p324 = pneg %p101
      %p325 = pneg %p125
      %p326 = pneg %p122
      %p327 = pneg %p146
      %p328 = pneg %p143
      %p329 = pneg %p167
      %p330 = pneg %p164
      %p331 = pneg %p195
      %p332 = pneg %p192
      %p333 = scmp.lt.s32.totalorder %s24, 1
      %s334 = scalar_select %p333, %s24, 1
      %p335 = scmp.lt.s32.totalorder %s25, 0
      %s336 = scalar_select %p335, %s25, 0
      %s337 = sadd.s32 %s336, %s334
      %s338 = smul.addr %s337, 8
      %s339 = scalar_lea.vmem %s6, %s338
      %p340 = pneg %p221
      %p341 = pneg %p218
      %p342 = scmp.lt.s32.totalorder %s24, 1
      %s343 = scalar_select %p342, %s24, 1
      %s344 = scalar_lea.vmem %s7, %s343
      %p345 = pneg %p247
      %p346 = pneg %p244
      %p347 = scmp.lt.s32.totalorder %s24, 1
      %s348 = scalar_select %p347, %s24, 1
      %s349 = scalar_lea.vmem %s8, %s348
      %p350 = scmp.lt.s32.totalorder %s24, 1
      %s351 = scalar_select %p350, %s24, 1
      %p352 = scmp.lt.s32.totalorder %s25, 0
      %s353 = scalar_select %p352, %s25, 0
      %s354 = sadd.s32 %s353, %s351
      %s355 = smul.addr %s354, 8
      %s356 = scalar_lea.vmem %s0, %s355
      %p357 = scmp.lt.s32.totalorder %s24, 1
      %s358 = scalar_select %p357, %s24, 1
      %p359 = scmp.lt.s32.totalorder %s25, 0
      %s360 = scalar_select %p359, %s25, 0
      %s361 = sadd.s32 %s360, %s358
      %s362 = smul.addr %s361, 8
      %s363 = scalar_lea.vmem %s1, %s362
      %p364 = scmp.lt.s32.totalorder %s24, 1
      %s365 = scalar_select %p364, %s24, 1
      %p366 = scmp.lt.s32.totalorder %s25, 0
      %s367 = scalar_select %p366, %s25, 0
      %s368 = sadd.s32 %s367, %s365
      %s369 = smul.addr %s368, 8
      %s370 = scalar_lea.vmem %s6, %s369
      %p371 = scmp.lt.s32.totalorder %s24, 1
      %s372 = scalar_select %p371, %s24, 1
      %s373 = scalar_lea.vmem %s7, %s372
      %p374 = scmp.lt.s32.totalorder %s24, 1
      %s375 = scalar_select %p374, %s24, 1
      %s376 = scalar_lea.vmem %s8, %s375
      %v377 = vld [vmem:[%s356] sm:$0xff]
      %v378 = vld [vmem:[%s363] sm:$0xff]
      %v379 = vld [vmem:[%s2] sm:$0xff]
      %v380 = vld [vmem:[%s3] sm:$0xff]
      %382 = vset.pattern.permute.xlu0 0
      %383 = vperm.xlu0 %382, %v380
      %v384 = vpop.permute.xlu0 %383
      %vm386 = vcmask 64512
      %v388 = vsel %vm386, %v379, 0
      %390 = vmatpush.msra.mxu0 0.0
      %391 = vmatpush.msra.mxu0 0.0
      %392 = vmatpush.msra.mxu0 0.0
      %393 = vmatpush.msra.mxu0 0.0
      %394 = vmatpush.msra.mxu0 0.0
      %395 = vmatpush.msra.mxu0 0.0
      %396 = vmatpush.msra.mxu0 0.0
      %397 = vmatpush.msra.mxu0 0.0
      %398 = vmatpush.msra.mxu0 0.0
      %399 = vmatpush.msra.mxu0 0.0
      %400 = vmatpush.msra.mxu0 0.0
      %401 = vmatpush.msra.mxu0 0.0
      %402 = vmatpush.msra.mxu0 0.0
      %403 = vmatpush.msra.mxu0 0.0
      %404 = vmatpush.msra.mxu0 0.0
      %405 = vmatpush.msra.mxu0 %v378
      %406 = vmatmul.f32.gmra.mxu0 %v388
      %v407 = vpop.f32.mrf.mxu0
      %v408 = vadd.f32 %v384, %v407
      %409 = vdwg.mxu0
      %v410 = vld [vmem:[%s4] sm:$0xff]
      %v411 = vld [vmem:[%s5] sm:$0xff]
      %413 = vset.pattern.permute.xlu0 0
      %414 = vperm.xlu0 %413, %v411
      %v415 = vpop.permute.xlu0 %414
      %v418 = vsel %vm386, %v410, 0
      %420 = vmatpush.msra.mxu0 0.0
      %421 = vmatpush.msra.mxu0 0.0
      %422 = vmatpush.msra.mxu0 0.0
      %423 = vmatpush.msra.mxu0 0.0
      %424 = vmatpush.msra.mxu0 0.0
      %425 = vmatpush.msra.mxu0 0.0
      %426 = vmatpush.msra.mxu0 0.0
      %427 = vmatpush.msra.mxu0 0.0
      %428 = vmatpush.msra.mxu0 0.0
      %429 = vmatpush.msra.mxu0 0.0
      %430 = vmatpush.msra.mxu0 0.0
      %431 = vmatpush.msra.mxu0 0.0
      %432 = vmatpush.msra.mxu0 0.0
      %433 = vmatpush.msra.mxu0 0.0
      %434 = vmatpush.msra.mxu0 0.0
      %435 = vmatpush.msra.mxu0 %v378
      %436 = vmatmul.f32.gmra.mxu0 %v418
      %v437 = vpop.f32.mrf.mxu0
      %v438 = vadd.f32 %v415, %v437
      %439 = vdwg.mxu0
      %v440 = vtanh.pop %v408
      %v441 = vmul.f32 %v440, 0.5
      %v442 = vmul.f32 %v441, 1.442695
      %v443 = vpow.pop %v442
      %v444 = vmul.f32 %v377, %v443
      %v445 = vadd.f32 %v444, %v438
      %vm446 = vcmask 130048
      %447 = vst.msk [vmem:[%s370] sm:$0xff] %vm446, %v445
      %v448 = vsel %vm446, %v441, 0.0
      %449 = vadd.xlane.f32.xlu0 %v448
      %v450 = vpop.xlane.xlu0 %449
      %v451 = vrot.slane %v450, 4
      %v452 = vadd.f32 %v450, %v451
      %v453 = vrot.slane %v452, 2
      %v454 = vadd.f32 %v452, %v453
      %v455 = vrot.slane %v454, 1
      %v456 = vadd.f32 %v454, %v455
      %s457 = vtos %v456
      %v458 = vmul.f32 %v445, %v445
      %vm459 = vcmask 125952
      %v460 = vsel %vm459, %v458, 0.0
      %461 = vadd.xlane.f32.xlu0 %v460
      %v462 = vpop.xlane.xlu0 %461
      %v463 = vrot.slane %v462, 4
      %v464 = vadd.f32 %v462, %v463
      %v465 = vrot.slane %v464, 2
      %v466 = vadd.f32 %v464, %v465
      %v467 = vrot.slane %v466, 1
      %v468 = vadd.f32 %v466, %v467
      %s469 = vtos %v468
      %s470 = smul.f32 %s469, -0.5
      %s471 = ssub.f32 %s470, 58.812065
      %p472 = scmp.eq.s32.totalorder %s25, 0
      // Predicated region
      $region45: #{_encode_impl.9} parent=43 // pred_check
        %p473 = pneg %p472
      $region46: #{_encode_impl.9} parent=43 // pred_check_branch
        %475 = sbr.rel (%p473) target = $region48
      $region47: #{_encode_impl.9} parent=43 // pred_region
        %vm476 = vcmask 0
        %477 = vst.msk [vmem:[%s373] sm:$0x1] %vm476, 0.0
        %478 = vst.msk [vmem:[%s376] sm:$0x1] %vm476, 0.0
      $region48: #{_encode_impl.9} parent=43 // pred_fallthru
        _
      %v479 = vld [vmem:[%s373] sm:$0x1]
      %v480 = vstv %s457
      %v481 = vadd.f32 %v479, %v480
      %vm482 = vcmask 0
      %483 = vst.msk [vmem:[%s373] sm:$0x1] %vm482, %v481
      %v484 = vld [vmem:[%s376] sm:$0x1]
      %v485 = vstv %s471
      %v486 = vadd.f32 %v484, %v485
      %487 = vst.msk [vmem:[%s376] sm:$0x1] %vm482, %v486
      %p488 = scmp.lt.s32.totalorder %s24, 1
      %s489 = scalar_select %p488, %s24, 1
      %p490 = scmp.lt.s32.totalorder %s25, 0
      %s491 = scalar_select %p490, %s25, 0
      %s492 = sadd.s32 %s491, %s489
      %s493 = smul.addr %s492, 8
      %s494 = scalar_lea.vmem %s6, %s493
      %p495 = scmp.lt.s32.totalorder %s24, 1
      %s496 = scalar_select %p495, %s24, 1
      %s497 = scalar_lea.vmem %s7, %s496
      %p498 = scmp.lt.s32.totalorder %s24, 1
      %s499 = scalar_select %p498, %s24, 1
      %s500 = scalar_lea.vmem %s8, %s499
      // Predicated region
      $region49: #{_encode_impl.9} parent=43 // pred_check
        %p501 = pneg %p192
      $region50: #{_encode_impl.9} parent=43 // pred_check_branch
        %503 = sbr.rel (%p501) target = $region52
      $region51: #{_encode_impl.9} parent=43 // pred_region
        _
      $region52: #{_encode_impl.9} parent=43 // pred_fallthru
        _
      // Predicated region
      $region53: #{_encode_impl.9} parent=43 // pred_check
        %p504 = pneg %p218
      $region54: #{_encode_impl.9} parent=43 // pred_check_branch
        %506 = sbr.rel (%p504) target = $region56
      $region55: #{_encode_impl.9} parent=43 // pred_region
        _
      $region56: #{_encode_impl.9} parent=43 // pred_fallthru
        _
      // Predicated region
      $region57: #{_encode_impl.9} parent=43 // pred_check
        %p507 = pneg %p244
      $region58: #{_encode_impl.9} parent=43 // pred_check_branch
        %509 = sbr.rel (%p507) target = $region60
      $region59: #{_encode_impl.9} parent=43 // pred_region
        _
      $region60: #{_encode_impl.9} parent=43 // pred_fallthru
        _
    $region44: #{_encode_impl.9} parent=5 // pred_fallthru
      _
    %p510 = scmp.le.s32.totalorder 2, %s15
    // Predicated region
    $region61: #{_encode_impl.9} parent=5 // pred_check
      %p511 = pneg %p510
    $region62: #{_encode_impl.9} parent=5 // pred_check_branch
      %513 = sbr.rel (%p511) target = $region64
    $region63: #{_encode_impl.9} parent=5 // pred_region
      %s514 = ssub.s32 %s15, 2
      // Predicated region
      $region65: #{_encode_impl.9} parent=63 // pred_check
        %p515 = pneg %p198
      $region66: #{_encode_impl.9} parent=63 // pred_check_branch
        %517 = sbr.rel (%p515) target = $region68
      $region67: #{_encode_impl.9} parent=63 // pred_region
        %p518 = scmp.lt.s32.totalorder %s26, 1
        %s519 = scalar_select %p518, %s26, 1
        %p520 = scmp.lt.s32.totalorder %s27, 0
        %s521 = scalar_select %p520, %s27, 0
        %s522 = sadd.s32 %s521, %s519
        %s523 = smul.addr %s522, 8
        %s524 = scalar_lea.vmem %s6, %s523
      $region68: #{_encode_impl.9} parent=63 // pred_fallthru
        _
      // Predicated region
      $region69: #{_encode_impl.9} parent=63 // pred_check
        %p525 = pneg %p224
      $region70: #{_encode_impl.9} parent=63 // pred_check_branch
        %527 = sbr.rel (%p525) target = $region72
      $region71: #{_encode_impl.9} parent=63 // pred_region
        %p528 = scmp.lt.s32.totalorder %s26, 1
        %s529 = scalar_select %p528, %s26, 1
        %s530 = scalar_lea.vmem %s7, %s529
      $region72: #{_encode_impl.9} parent=63 // pred_fallthru
        _
      // Predicated region
      $region73: #{_encode_impl.9} parent=63 // pred_check
        %p531 = pneg %p250
      $region74: #{_encode_impl.9} parent=63 // pred_check_branch
        %533 = sbr.rel (%p531) target = $region76
      $region75: #{_encode_impl.9} parent=63 // pred_region
        %p534 = scmp.lt.s32.totalorder %s26, 1
        %s535 = scalar_select %p534, %s26, 1
        %s536 = scalar_lea.vmem %s8, %s535
      $region76: #{_encode_impl.9} parent=63 // pred_fallthru
        _
    $region64: #{_encode_impl.9} parent=5 // pred_fallthru
      _
  $region6: #{_encode_impl.9} parent=0 // loop_footer
    %s19 = sadd.s32 1, %s15
  $region7: #{_encode_impl.9} parent=0 // loop_footer_branch
    %14 = sbr.rel target = $region3
  $region8: #{_encode_impl.9} parent=0 // loop_exit
    _

// kernel: _encode_impl.8
$region0: #{_encode_impl.8}
  #allocation0 [shape = 'u32[]', space=smem, size = 0x4, offset = 0x4, fixed_abs, tag = 'smem constant byte address 0x4 - core index']
  #allocation1 [shape = 'u32[72,128]{1,0:T(1,128)}', space=vmem, size = 0x9000, scoped, tag = 'internal scratch']
  %s0 = inlined_call_operand.vmem [shape: f32[2,16,4], index: 0, kind: input, shape index: {}]
  %s1 = inlined_call_operand.vmem [shape: f32[2,64,4], index: 1, kind: input, shape index: {}]
  %s2 = inlined_call_operand.vmem [shape: f32[16,64], index: 2, kind: input, shape index: {}]
  %s3 = inlined_call_operand.vmem [shape: f32[16,1], index: 3, kind: input, shape index: {}]
  %s4 = inlined_call_operand.vmem [shape: f32[16,64], index: 4, kind: input, shape index: {}]
  %s5 = inlined_call_operand.vmem [shape: f32[16,1], index: 5, kind: input, shape index: {}]
  %s6 = inlined_call_operand.vmem [shape: f32[2,16,4], index: 6, kind: output, shape index: {0}]
  %s7 = inlined_call_operand.vmem [shape: f32[2,1,1], index: 7, kind: output, shape index: {1}]
  %s8 = inlined_call_operand.vmem [shape: f32[2,1,1], index: 8, kind: output, shape index: {2}]
  %9 = xla_tuple %s6, %s7, %s8
  %s10 = sld [smem:[#allocation0]]
  $region77: #{_encode_impl.8} parent=0
    _
  %s12 = ssub.s32 1, %s10
  %s13 = scalar_select 0, %s12, %s10
  loop: start=0, step=1, limit=4
  $region2: #{_encode_impl.8} parent=0 // loop_pre_header
    _
  $region3: #{_encode_impl.8} parent=0 // loop_header
    %s15 = sphi 0, %s19
    %p16 = scmp.ge.s32.totalorder %s15, 4
    %s22 = sphi 0, %s34
    %s23 = sphi 0, %s30
    %s24 = sphi 0, %s22
    %s25 = sphi 0, %s23
    %s26 = sphi 0, %s24
    %s27 = sphi 0, %s25
    %s39 = sphi 0, %s41
    %s42 = sphi 0, %s39
    %s43 = sphi 0, %s42
    %s59 = sphi 0, %s43
    %s67 = sphi 0, %s69
    %s70 = sphi 0, %s67
    %s71 = sphi 0, %s70
    %s87 = sphi 0, %s71
    %s91 = sphi 0, %s91
    %s93 = sphi 0, %s91
    %s94 = sphi 0, %s93
    %s108 = sphi 0, %s94
    %s112 = sphi 0, %s112
    %s114 = sphi 0, %s112
    %s115 = sphi 0, %s114
    %s129 = sphi 0, %s115
    %s133 = sphi 0, %s133
    %s135 = sphi 0, %s133
    %s136 = sphi 0, %s135
    %s150 = sphi 0, %s136
    %s154 = sphi 0, %s154
    %s156 = sphi 0, %s154
    %s157 = sphi 0, %s156
    %s171 = sphi 0, %s157
    %s179 = sphi 0, %s181
    %s182 = sphi 0, %s179
    %s183 = sphi 0, %s182
    %s199 = sphi 0, %s183
    %s205 = sphi 0, %s207
    %s208 = sphi 0, %s205
    %s209 = sphi 0, %s208
    %s225 = sphi 0, %s209
    %s231 = sphi 0, %s233
    %s234 = sphi 0, %s231
    %s235 = sphi 0, %s234
    %s251 = sphi 0, %s235
  $region4: #{_encode_impl.8} parent=0 // loop_header_branch
    %18 = sbr.rel (%p16) target = $region8
  $region5: #{_encode_impl.8} parent=0 // loop_body
    %s20 = ssub.s32 %s15, 1
    %s21 = ssub.s32 %s15, 2
    %s28 = sadd.s32 1, %s23
    %p29 = scmp.ge.s32.totalorder %s28, 1
    %s30 = scalar_select %p29, 0, %s28
    %s31 = sadd.s32 1, %s22
    %s32 = scalar_select %p29, %s31, %s22
    %p33 = scmp.ge.s32.totalorder %s32, 2
    %s34 = scalar_select %p33, 0, %s32
    %s35 = ssub.s32 %s22, %s34
    %s36 = ssub.s32 %s23, %s30
    %s37 = sor.u32 %s35, %s36
    %p38 = scmp.eq.s32.totalorder %s37, 0
    %s40 = sadd.s32 %s39, 1
    %s41 = scalar_select %p38, %s39, %s40
    %p44 = pneg %p38
    %p45 = scmp.eq.s32.totalorder %s15, 1
    %p46 = por %p44, %p45
    %p47 = scmp.ne.s32.totalorder %s39, %s42
    %p48 = scmp.eq.s32.totalorder %s15, 0
    %p49 = por %p47, %p48
    %p50 = scmp.ne.s32.totalorder %s39, %s42
    %p51 = scmp.eq.s32.totalorder %s20, 1
    %p52 = por %p50, %p51
    %p53 = scmp.ne.s32.totalorder %s42, %s43
    %p54 = scmp.eq.s32.totalorder %s20, 0
    %p55 = por %p53, %p54
    %p56 = scmp.ne.s32.totalorder %s42, %s43
    %p57 = scmp.eq.s32.totalorder %s21, 1
    %p58 = por %p56, %p57
    %p60 = scmp.ne.s32.totalorder %s43, %s59
    %p61 = scmp.eq.s32.totalorder %s21, 0
    %p62 = por %p60, %p61
    %s63 = ssub.s32 %s22, %s34
    %s64 = ssub.s32 %s23, %s30
    %s65 = sor.u32 %s63, %s64
    %p66 = scmp.eq.s32.totalorder %s65, 0
    %s68 = sadd.s32 %s67, 1
    %s69 = scalar_select %p66, %s67, %s68
    %p72 = pneg %p66
    %p73 = scmp.eq.s32.totalorder %s15, 1
    %p74 = por %p72, %p73
    %p75 = scmp.ne.s32.totalorder %s67, %s70
    %p76 = scmp.eq.s32.totalorder %s15, 0
    %p77 = por %p75, %p76
    %p78 = scmp.ne.s32.totalorder %s67, %s70
    %p79 = scmp.eq.s32.totalorder %s20, 1
    %p80 = por %p78, %p79
    %p81 = scmp.ne.s32.totalorder %s70, %s71
    %p82 = scmp.eq.s32.totalorder %s20, 0
    %p83 = por %p81, %p82
    %p84 = scmp.ne.s32.totalorder %s70, %s71
    %p85 = scmp.eq.s32.totalorder %s21, 1
    %p86 = por %p84, %p85
    %p88 = scmp.ne.s32.totalorder %s71, %s87
    %p89 = scmp.eq.s32.totalorder %s21, 0
    %p90 = por %p88, %p89
    %s92 = sadd.s32 %s91, 1
    %p95 = scmp.eq.s32.totalorder %s15, 1
    %p96 = scmp.ne.s32.totalorder %s91, %s93
    %p97 = scmp.eq.s32.totalorder %s15, 0
    %p98 = por %p96, %p97
    %p99 = scmp.ne.s32.totalorder %s91, %s93
    %p100 = scmp.eq.s32.totalorder %s20, 1
    %p101 = por %p99, %p100
    %p102 = scmp.ne.s32.totalorder %s93, %s94
    %p103 = scmp.eq.s32.totalorder %s20, 0
    %p104 = por %p102, %p103
    %p105 = scmp.ne.s32.totalorder %s93, %s94
    %p106 = scmp.eq.s32.totalorder %s21, 1
    %p107 = por %p105, %p106
    %p109 = scmp.ne.s32.totalorder %s94, %s108
    %p110 = scmp.eq.s32.totalorder %s21, 0
    %p111 = por %p109, %p110
    %s113 = sadd.s32 %s112, 1
    %p116 = scmp.eq.s32.totalorder %s15, 1
    %p117 = scmp.ne.s32.totalorder %s112, %s114
    %p118 = scmp.eq.s32.totalorder %s15, 0
    %p119 = por %p117, %p118
    %p120 = scmp.ne.s32.totalorder %s112, %s114
    %p121 = scmp.eq.s32.totalorder %s20, 1
    %p122 = por %p120, %p121
    %p123 = scmp.ne.s32.totalorder %s114, %s115
    %p124 = scmp.eq.s32.totalorder %s20, 0
    %p125 = por %p123, %p124
    %p126 = scmp.ne.s32.totalorder %s114, %s115
    %p127 = scmp.eq.s32.totalorder %s21, 1
    %p128 = por %p126, %p127
    %p130 = scmp.ne.s32.totalorder %s115, %s129
    %p131 = scmp.eq.s32.totalorder %s21, 0
    %p132 = por %p130, %p131
    %s134 = sadd.s32 %s133, 1
    %p137 = scmp.eq.s32.totalorder %s15, 1
    %p138 = scmp.ne.s32.totalorder %s133, %s135
    %p139 = scmp.eq.s32.totalorder %s15, 0
    %p140 = por %p138, %p139
    %p141 = scmp.ne.s32.totalorder %s133, %s135
    %p142 = scmp.eq.s32.totalorder %s20, 1
    %p143 = por %p141, %p142
    %p144 = scmp.ne.s32.totalorder %s135, %s136
    %p145 = scmp.eq.s32.totalorder %s20, 0
    %p146 = por %p144, %p145
    %p147 = scmp.ne.s32.totalorder %s135, %s136
    %p148 = scmp.eq.s32.totalorder %s21, 1
    %p149 = por %p147, %p148
    %p151 = scmp.ne.s32.totalorder %s136, %s150
    %p152 = scmp.eq.s32.totalorder %s21, 0
    %p153 = por %p151, %p152
    %s155 = sadd.s32 %s154, 1
    %p158 = scmp.eq.s32.totalorder %s15, 1
    %p159 = scmp.ne.s32.totalorder %s154, %s156
    %p160 = scmp.eq.s32.totalorder %s15, 0
    %p161 = por %p159, %p160
    %p162 = scmp.ne.s32.totalorder %s154, %s156
    %p163 = scmp.eq.s32.totalorder %s20, 1
    %p164 = por %p162, %p163
    %p165 = scmp.ne.s32.totalorder %s156, %s157
    %p166 = scmp.eq.s32.totalorder %s20, 0
    %p167 = por %p165, %p166
    %p168 = scmp.ne.s32.totalorder %s156, %s157
    %p169 = scmp.eq.s32.totalorder %s21, 1
    %p170 = por %p168, %p169
    %p172 = scmp.ne.s32.totalorder %s157, %s171
    %p173 = scmp.eq.s32.totalorder %s21, 0
    %p174 = por %p172, %p173
    %s175 = ssub.s32 %s22, %s34
    %s176 = ssub.s32 %s23, %s30
    %s177 = sor.u32 %s175, %s176
    %p178 = scmp.eq.s32.totalorder %s177, 0
    %s180 = sadd.s32 %s179, 1
    %s181 = scalar_select %p178, %s179, %s180
    %p184 = pneg %p178
    %p185 = scmp.eq.s32.totalorder %s15, 1
    %p186 = por %p184, %p185
    %p187 = scmp.ne.s32.totalorder %s179, %s182
    %p188 = scmp.eq.s32.totalorder %s15, 0
    %p189 = por %p187, %p188
    %p190 = scmp.ne.s32.totalorder %s179, %s182
    %p191 = scmp.eq.s32.totalorder %s20, 1
    %p192 = por %p190, %p191
    %p193 = scmp.ne.s32.totalorder %s182, %s183
    %p194 = scmp.eq.s32.totalorder %s20, 0
    %p195 = por %p193, %p194
    %p196 = scmp.ne.s32.totalorder %s182, %s183
    %p197 = scmp.eq.s32.totalorder %s21, 1
    %p198 = por %p196, %p197
    %p200 = scmp.ne.s32.totalorder %s183, %s199
    %p201 = scmp.eq.s32.totalorder %s21, 0
    %p202 = por %p200, %p201
    %s203 = ssub.s32 %s22, %s34
    %p204 = scmp.eq.s32.totalorder %s203, 0
    %s206 = sadd.s32 %s205, 1
    %s207 = scalar_select %p204, %s205, %s206
    %p210 = pneg %p204
    %p211 = scmp.eq.s32.totalorder %s15, 1
    %p212 = por %p210, %p211
    %p213 = scmp.ne.s32.totalorder %s205, %s208
    %p214 = scmp.eq.s32.totalorder %s15, 0
    %p215 = por %p213, %p214
    %p216 = scmp.ne.s32.totalorder %s205, %s208
    %p217 = scmp.eq.s32.totalorder %s20, 1
    %p218 = por %p216, %p217
    %p219 = scmp.ne.s32.totalorder %s208, %s209
    %p220 = scmp.eq.s32.totalorder %s20, 0
    %p221 = por %p219, %p220
    %p222 = scmp.ne.s32.totalorder %s208, %s209
    %p223 = scmp.eq.s32.totalorder %s21, 1
    %p224 = por %p222, %p223
    %p226 = scmp.ne.s32.totalorder %s209, %s225
    %p227 = scmp.eq.s32.totalorder %s21, 0
    %p228 = por %p226, %p227
    %s229 = ssub.s32 %s22, %s34
    %p230 = scmp.eq.s32.totalorder %s229, 0
    %s232 = sadd.s32 %s231, 1
    %s233 = scalar_select %p230, %s231, %s232
    %p236 = pneg %p230
    %p237 = scmp.eq.s32.totalorder %s15, 1
    %p238 = por %p236, %p237
    %p239 = scmp.ne.s32.totalorder %s231, %s234
    %p240 = scmp.eq.s32.totalorder %s15, 0
    %p241 = por %p239, %p240
    %p242 = scmp.ne.s32.totalorder %s231, %s234
    %p243 = scmp.eq.s32.totalorder %s20, 1
    %p244 = por %p242, %p243
    %p245 = scmp.ne.s32.totalorder %s234, %s235
    %p246 = scmp.eq.s32.totalorder %s20, 0
    %p247 = por %p245, %p246
    %p248 = scmp.ne.s32.totalorder %s234, %s235
    %p249 = scmp.eq.s32.totalorder %s21, 1
    %p250 = por %p248, %p249
    %p252 = scmp.ne.s32.totalorder %s235, %s251
    %p253 = scmp.eq.s32.totalorder %s21, 0
    %p254 = por %p252, %p253
    %p255 = scmp.le.s32.totalorder 1, %s15
    %p256 = scmp.lt.s32.totalorder %s15, 3
    %p257 = pnand %p255, %p256
    %p258 = pneg %p257
    // Predicated region
    $region9: #{_encode_impl.8} parent=5 // pred_check
      _
    $region10: #{_encode_impl.8} parent=5 // pred_check_branch
      %260 = sbr.rel (%p257) target = $region12
    $region11: #{_encode_impl.8} parent=5 // pred_region
      %s261 = ssub.s32 %s15, 1
      // Predicated region
      $region13: #{_encode_impl.8} parent=11 // pred_check
        %p262 = pneg %p104
      $region14: #{_encode_impl.8} parent=11 // pred_check_branch
        %264 = sbr.rel (%p262) target = $region16
      $region15: #{_encode_impl.8} parent=11 // pred_region
        _
      $region16: #{_encode_impl.8} parent=11 // pred_fallthru
        _
      // Predicated region
      $region17: #{_encode_impl.8} parent=11 // pred_check
        %p265 = pneg %p125
      $region18: #{_encode_impl.8} parent=11 // pred_check_branch
        %267 = sbr.rel (%p265) target = $region20
      $region19: #{_encode_impl.8} parent=11 // pred_region
        _
      $region20: #{_encode_impl.8} parent=11 // pred_fallthru
        _
      // Predicated region
      $region21: #{_encode_impl.8} parent=11 // pred_check
        %p268 = pneg %p146
      $region22: #{_encode_impl.8} parent=11 // pred_check_branch
        %270 = sbr.rel (%p268) target = $region24
      $region23: #{_encode_impl.8} parent=11 // pred_region
        _
      $region24: #{_encode_impl.8} parent=11 // pred_fallthru
        _
      // Predicated region
      $region25: #{_encode_impl.8} parent=11 // pred_check
        %p271 = pneg %p167
      $region26: #{_encode_impl.8} parent=11 // pred_check_branch
        %273 = sbr.rel (%p271) target = $region28
      $region27: #{_encode_impl.8} parent=11 // pred_region
        _
      $region28: #{_encode_impl.8} parent=11 // pred_fallthru
        _
    $region12: #{_encode_impl.8} parent=5 // pred_fallthru
      _
    %p274 = scmp.lt.s32.totalorder %s15, 2
    // Predicated region
    $region29: #{_encode_impl.8} parent=5 // pred_check
      %p275 = pneg %p274
    $region30: #{_encode_impl.8} parent=5 // pred_check_branch
      %277 = sbr.rel (%p275) target = $region32
    $region31: #{_encode_impl.8} parent=5 // pred_region
      // Predicated region
      $region33: #{_encode_impl.8} parent=31 // pred_check
        %p278 = pneg %p49
      $region34: #{_encode_impl.8} parent=31 // pred_check_branch
        %280 = sbr.rel (%p278) target = $region36
      $region35: #{_encode_impl.8} parent=31 // pred_region
        %p281 = scmp.lt.s32.totalorder %s22, 1
        %s282 = scalar_select %p281, %s22, 1
        %p283 = scmp.lt.s32.totalorder %s23, 0
        %s284 = scalar_select %p283, %s23, 0
        %s285 = smul.addr %s282, 2
        %s286 = sadd.s32 %s284, %s285
        %s287 = smul.addr %s286, 8
        %s288 = scalar_lea.vmem %s0, %s287
      $region36: #{_encode_impl.8} parent=31 // pred_fallthru
        _
      // Predicated region
      $region37: #{_encode_impl.8} parent=31 // pred_check
        %p289 = pneg %p77
      $region38: #{_encode_impl.8} parent=31 // pred_check_branch
        %291 = sbr.rel (%p289) target = $region40
      $region39: #{_encode_impl.8} parent=31 // pred_region
        %p292 = scmp.lt.s32.totalorder %s22, 1
        %s293 = scalar_select %p292, %s22, 1
        %p294 = scmp.lt.s32.totalorder %s23, 0
        %s295 = scalar_select %p294, %s23, 0
        %s296 = smul.addr %s293, 8
        %s297 = sadd.s32 %s295, %s296
        %s298 = smul.addr %s297, 8
        %s299 = scalar_lea.vmem %s1, %s298
      $region40: #{_encode_impl.8} parent=31 // pred_fallthru
        _
    $region32: #{_encode_impl.8} parent=5 // pred_fallthru
      _
    %p300 = scmp.le.s32.totalorder 1, %s15
    %p301 = scmp.lt.s32.totalorder %s15, 3
    %p302 = pnand %p300, %p301
    %p303 = pneg %p302
    // Predicated region
    $region41: #{_encode_impl.8} parent=5 // pred_check
      _
    $region42: #{_encode_impl.8} parent=5 // pred_check_branch
      %305 = sbr.rel (%p302) target = $region44
    $region43: #{_encode_impl.8} parent=5 // pred_region
      %s306 = ssub.s32 %s15, 1
      %p307 = scmp.lt.s32.totalorder %s24, 1
      %s308 = scalar_select %p307, %s24, 1
      %p309 = scmp.lt.s32.totalorder %s25, 0
      %s310 = scalar_select %p309, %s25, 0
      %s311 = smul.addr %s308, 2
      %s312 = sadd.s32 %s310, %s311
      %s313 = smul.addr %s312, 8
      %s314 = scalar_lea.vmem %s0, %s313
      %p315 = pneg %p55
      %p316 = pneg %p52
      %p317 = scmp.lt.s32.totalorder %s24, 1
      %s318 = scalar_select %p317, %s24, 1
      %p319 = scmp.lt.s32.totalorder %s25, 0
      %s320 = scalar_select %p319, %s25, 0
      %s321 = smul.addr %s318, 8
      %s322 = sadd.s32 %s320, %s321
      %s323 = smul.addr %s322, 8
      %s324 = scalar_lea.vmem %s1, %s323
      %p325 = pneg %p83
      %p326 = pneg %p80
      %p327 = pneg %p104
      %p328 = pneg %p101
      %p329 = pneg %p125
      %p330 = pneg %p122
      %p331 = pneg %p146
      %p332 = pneg %p143
      %p333 = pneg %p167
      %p334 = pneg %p164
      %p335 = pneg %p195
      %p336 = pneg %p192
      %p337 = scmp.lt.s32.totalorder %s24, 1
      %s338 = scalar_select %p337, %s24, 1
      %p339 = scmp.lt.s32.totalorder %s25, 0
      %s340 = scalar_select %p339, %s25, 0
      %s341 = smul.addr %s338, 2
      %s342 = sadd.s32 %s340, %s341
      %s343 = smul.addr %s342, 8
      %s344 = scalar_lea.vmem %s6, %s343
      %p345 = pneg %p221
      %p346 = pneg %p218
      %p347 = scmp.lt.s32.totalorder %s24, 1
      %s348 = scalar_select %p347, %s24, 1
      %s349 = scalar_lea.vmem %s7, %s348
      %p350 = pneg %p247
      %p351 = pneg %p244
      %p352 = scmp.lt.s32.totalorder %s24, 1
      %s353 = scalar_select %p352, %s24, 1
      %s354 = scalar_lea.vmem %s8, %s353
      %p355 = scmp.lt.s32.totalorder %s24, 1
      %s356 = scalar_select %p355, %s24, 1
      %p357 = scmp.lt.s32.totalorder %s25, 0
      %s358 = scalar_select %p357, %s25, 0
      %s359 = smul.addr %s356, 2
      %s360 = sadd.s32 %s358, %s359
      %s361 = smul.addr %s360, 8
      %s362 = scalar_lea.vmem %s0, %s361
      %p363 = scmp.lt.s32.totalorder %s24, 1
      %s364 = scalar_select %p363, %s24, 1
      %p365 = scmp.lt.s32.totalorder %s25, 0
      %s366 = scalar_select %p365, %s25, 0
      %s367 = smul.addr %s364, 8
      %s368 = sadd.s32 %s366, %s367
      %s369 = smul.addr %s368, 8
      %s370 = scalar_lea.vmem %s1, %s369
      %p371 = scmp.lt.s32.totalorder %s24, 1
      %s372 = scalar_select %p371, %s24, 1
      %p373 = scmp.lt.s32.totalorder %s25, 0
      %s374 = scalar_select %p373, %s25, 0
      %s375 = smul.addr %s372, 2
      %s376 = sadd.s32 %s374, %s375
      %s377 = smul.addr %s376, 8
      %s378 = scalar_lea.vmem %s6, %s377
      %p379 = scmp.lt.s32.totalorder %s24, 1
      %s380 = scalar_select %p379, %s24, 1
      %s381 = scalar_lea.vmem %s7, %s380
      %p382 = scmp.lt.s32.totalorder %s24, 1
      %s383 = scalar_select %p382, %s24, 1
      %s384 = scalar_lea.vmem %s8, %s383
      %v385 = vld [vmem:[%s362] sm:$0xff]
      %v386 = vld [vmem:[%s362 + $0x8] sm:$0xff]
      %v387 = vld [vmem:[%s370] sm:$0xff]
      %v388 = vld [vmem:[%s370 + $0x8] sm:$0xff]
      %v389 = vld [vmem:[%s370 + $0x10] sm:$0xff]
      %v390 = vld [vmem:[%s370 + $0x18] sm:$0xff]
      %v391 = vld [vmem:[%s370 + $0x20] sm:$0xff]
      %v392 = vld [vmem:[%s370 + $0x28] sm:$0xff]
      %v393 = vld [vmem:[%s370 + $0x30] sm:$0xff]
      %v394 = vld [vmem:[%s370 + $0x38] sm:$0xff]
      %v395 = vld [vmem:[%s2] sm:$0xff]
      %v396 = vld [vmem:[%s2 + $0x8] sm:$0xff]
      %v397 = vld [vmem:[%s3] sm:$0xff]
      %v398 = vld [vmem:[%s3 + $0x8] sm:$0xff]
      %400 = vset.pattern.permute.xlu0 0
      %401 = vperm.xlu0 %400, %v397
      %v402 = vpop.permute.xlu0 %401
      %405 = vset.pattern.permute.xlu0 0
      %406 = vperm.xlu0 %405, %v398
      %v407 = vpop.permute.xlu0 %406
      %vm409 = vcmask 523264
      %v411 = vsel %vm409, %v395, 0
      %v414 = vsel %vm409, %v396, 0
      %416 = vmatpush.msra.mxu0 0.0
      %417 = vmatpush.msra.mxu0 0.0
      %418 = vmatpush.msra.mxu0 0.0
      %419 = vmatpush.msra.mxu0 0.0
      %420 = vmatpush.msra.mxu0 0.0
      %421 = vmatpush.msra.mxu0 0.0
      %422 = vmatpush.msra.mxu0 0.0
      %423 = vmatpush.msra.mxu0 0.0
      %424 = vmatpush.msra.mxu0 %v394
      %425 = vmatpush.msra.mxu0 %v393
      %426 = vmatpush.msra.mxu0 %v392
      %427 = vmatpush.msra.mxu0 %v391
      %428 = vmatpush.msra.mxu0 %v390
      %429 = vmatpush.msra.mxu0 %v389
      %430 = vmatpush.msra.mxu0 %v388
      %431 = vmatpush.msra.mxu0 %v387
      %432 = vmatmul.f32.gmra.mxu0 %v411
      %v433 = vpop.f32.mrf.mxu0
      %v434 = vadd.f32 %v402, %v433
      %435 = vmatmul.f32.gmra.mxu0 %v414
      %v436 = vpop.f32.mrf.mxu0
      %v437 = vadd.f32 %v407, %v436
      %438 = vdwg.mxu0
      %v439 = vld [vmem:[%s4] sm:$0xff]
      %v440 = vld [vmem:[%s4 + $0x8] sm:$0xff]
      %v441 = vld [vmem:[%s5] sm:$0xff]
      %v442 = vld [vmem:[%s5 + $0x8] sm:$0xff]
      %444 = vset.pattern.permute.xlu0 0
      %445 = vperm.xlu0 %444, %v441
      %v446 = vpop.permute.xlu0 %445
      %449 = vset.pattern.permute.xlu0 0
      %450 = vperm.xlu0 %449, %v442
      %v451 = vpop.permute.xlu0 %450
      %v454 = vsel %vm409, %v439, 0
      %v457 = vsel %vm409, %v440, 0
      %459 = vmatpush.msra.mxu0 0.0
      %460 = vmatpush.msra.mxu0 0.0
      %461 = vmatpush.msra.mxu0 0.0
      %462 = vmatpush.msra.mxu0 0.0
      %463 = vmatpush.msra.mxu0 0.0
      %464 = vmatpush.msra.mxu0 0.0
      %465 = vmatpush.msra.mxu0 0.0
      %466 = vmatpush.msra.mxu0 0.0
      %467 = vmatpush.msra.mxu0 %v394
      %468 = vmatpush.msra.mxu0 %v393
      %469 = vmatpush.msra.mxu0 %v392
      %470 = vmatpush.msra.mxu0 %v391
      %471 = vmatpush.msra.mxu0 %v390
      %472 = vmatpush.msra.mxu0 %v389
      %473 = vmatpush.msra.mxu0 %v388
      %474 = vmatpush.msra.mxu0 %v387
      %475 = vmatmul.f32.gmra.mxu0 %v454
      %v476 = vpop.f32.mrf.mxu0
      %v477 = vadd.f32 %v446, %v476
      %478 = vmatmul.f32.gmra.mxu0 %v457
      %v479 = vpop.f32.mrf.mxu0
      %v480 = vadd.f32 %v451, %v479
      %481 = vdwg.mxu0
      %v482 = vtanh.pop %v434
      %v483 = vtanh.pop %v437
      %v484 = vmul.f32 %v482, 0.5
      %v485 = vmul.f32 %v483, 0.5
      %v486 = vmul.f32 %v484, 1.442695
      %v487 = vpow.pop %v486
      %v488 = vmul.f32 %v485, 1.442695
      %v489 = vpow.pop %v488
      %v490 = vmul.f32 %v385, %v487
      %v491 = vmul.f32 %v386, %v489
      %v492 = vadd.f32 %v490, %v477
      %v493 = vadd.f32 %v491, %v480
      %vm494 = vcmask 31744
      %495 = vst.msk [vmem:[%s378] sm:$0xff] %vm494, %v492
      %496 = vst.msk [vmem:[%s378 + $0x8] sm:$0xff] %vm494, %v493
      %v497 = vsel %vm494, %v484, 0.0
      %v498 = vsel %vm494, %v485, 0.0
      %v499 = vadd.f32 %v497, %v498
      %500 = vadd.xlane.f32.xlu0 %v499
      %v501 = vpop.xlane.xlu0 %500
      %v502 = vrot.slane %v501, 4
      %v503 = vadd.f32 %v501, %v502
      %v504 = vrot.slane %v503, 2
      %v505 = vadd.f32 %v503, %v504
      %v506 = vrot.slane %v505, 1
      %v507 = vadd.f32 %v505, %v506
      %s508 = vtos %v507
      %v509 = vmul.f32 %v492, %v492
      %v510 = vmul.f32 %v493, %v493
      %v511 = vsel %vm494, %v509, 0.0
      %v512 = vsel %vm494, %v510, 0.0
      %v513 = vadd.f32 %v511, %v512
      %514 = vadd.xlane.f32.xlu0 %v513
      %v515 = vpop.xlane.xlu0 %514
      %v516 = vrot.slane %v515, 4
      %v517 = vadd.f32 %v515, %v516
      %v518 = vrot.slane %v517, 2
      %v519 = vadd.f32 %v517, %v518
      %v520 = vrot.slane %v519, 1
      %v521 = vadd.f32 %v519, %v520
      %s522 = vtos %v521
      %s523 = smul.f32 %s522, -0.5
      %s524 = ssub.f32 %s523, 58.812065
      %p525 = scmp.eq.s32.totalorder %s25, 0
      // Predicated region
      $region45: #{_encode_impl.8} parent=43 // pred_check
        %p526 = pneg %p525
      $region46: #{_encode_impl.8} parent=43 // pred_check_branch
        %528 = sbr.rel (%p526) target = $region48
      $region47: #{_encode_impl.8} parent=43 // pred_region
        %vm529 = vcmask 0
        %530 = vst.msk [vmem:[%s381] sm:$0x1] %vm529, 0.0
        %531 = vst.msk [vmem:[%s384] sm:$0x1] %vm529, 0.0
      $region48: #{_encode_impl.8} parent=43 // pred_fallthru
        _
      %v532 = vld [vmem:[%s381] sm:$0x1]
      %v533 = vstv %s508
      %v534 = vadd.f32 %v532, %v533
      %vm535 = vcmask 0
      %536 = vst.msk [vmem:[%s381] sm:$0x1] %vm535, %v534
      %v537 = vld [vmem:[%s384] sm:$0x1]
      %v538 = vstv %s524
      %v539 = vadd.f32 %v537, %v538
      %540 = vst.msk [vmem:[%s384] sm:$0x1] %vm535, %v539
      %p541 = scmp.lt.s32.totalorder %s24, 1
      %s542 = scalar_select %p541, %s24, 1
      %p543 = scmp.lt.s32.totalorder %s25, 0
      %s544 = scalar_select %p543, %s25, 0
      %s545 = smul.addr %s542, 2
      %s546 = sadd.s32 %s544, %s545
      %s547 = smul.addr %s546, 8
      %s548 = scalar_lea.vmem %s6, %s547
      %p549 = scmp.lt.s32.totalorder %s24, 1
      %s550 = scalar_select %p549, %s24, 1
      %s551 = scalar_lea.vmem %s7, %s550
      %p552 = scmp.lt.s32.totalorder %s24, 1
      %s553 = scalar_select %p552, %s24, 1
      %s554 = scalar_lea.vmem %s8, %s553
      // Predicated region
      $region49: #{_encode_impl.8} parent=43 // pred_check
        %p555 = pneg %p192
      $region50: #{_encode_impl.8} parent=43 // pred_check_branch
        %557 = sbr.rel (%p555) target = $region52
      $region51: #{_encode_impl.8} parent=43 // pred_region
        _
      $region52: #{_encode_impl.8} parent=43 // pred_fallthru
        _
      // Predicated region
      $region53: #{_encode_impl.8} parent=43 // pred_check
        %p558 = pneg %p218
      $region54: #{_encode_impl.8} parent=43 // pred_check_branch
        %560 = sbr.rel (%p558) target = $region56
      $region55: #{_encode_impl.8} parent=43 // pred_region
        _
      $region56: #{_encode_impl.8} parent=43 // pred_fallthru
        _
      // Predicated region
      $region57: #{_encode_impl.8} parent=43 // pred_check
        %p561 = pneg %p244
      $region58: #{_encode_impl.8} parent=43 // pred_check_branch
        %563 = sbr.rel (%p561) target = $region60
      $region59: #{_encode_impl.8} parent=43 // pred_region
        _
      $region60: #{_encode_impl.8} parent=43 // pred_fallthru
        _
    $region44: #{_encode_impl.8} parent=5 // pred_fallthru
      _
    %p564 = scmp.le.s32.totalorder 2, %s15
    // Predicated region
    $region61: #{_encode_impl.8} parent=5 // pred_check
      %p565 = pneg %p564
    $region62: #{_encode_impl.8} parent=5 // pred_check_branch
      %567 = sbr.rel (%p565) target = $region64
    $region63: #{_encode_impl.8} parent=5 // pred_region
      %s568 = ssub.s32 %s15, 2
      // Predicated region
      $region65: #{_encode_impl.8} parent=63 // pred_check
        %p569 = pneg %p198
      $region66: #{_encode_impl.8} parent=63 // pred_check_branch
        %571 = sbr.rel (%p569) target = $region68
      $region67: #{_encode_impl.8} parent=63 // pred_region
        %p572 = scmp.lt.s32.totalorder %s26, 1
        %s573 = scalar_select %p572, %s26, 1
        %p574 = scmp.lt.s32.totalorder %s27, 0
        %s575 = scalar_select %p574, %s27, 0
        %s576 = smul.addr %s573, 2
        %s577 = sadd.s32 %s575, %s576
        %s578 = smul.addr %s577, 8
        %s579 = scalar_lea.vmem %s6, %s578
      $region68: #{_encode_impl.8} parent=63 // pred_fallthru
        _
      // Predicated region
      $region69: #{_encode_impl.8} parent=63 // pred_check
        %p580 = pneg %p224
      $region70: #{_encode_impl.8} parent=63 // pred_check_branch
        %582 = sbr.rel (%p580) target = $region72
      $region71: #{_encode_impl.8} parent=63 // pred_region
        %p583 = scmp.lt.s32.totalorder %s26, 1
        %s584 = scalar_select %p583, %s26, 1
        %s585 = scalar_lea.vmem %s7, %s584
      $region72: #{_encode_impl.8} parent=63 // pred_fallthru
        _
      // Predicated region
      $region73: #{_encode_impl.8} parent=63 // pred_check
        %p586 = pneg %p250
      $region74: #{_encode_impl.8} parent=63 // pred_check_branch
        %588 = sbr.rel (%p586) target = $region76
      $region75: #{_encode_impl.8} parent=63 // pred_region
        %p589 = scmp.lt.s32.totalorder %s26, 1
        %s590 = scalar_select %p589, %s26, 1
        %s591 = scalar_lea.vmem %s8, %s590
      $region76: #{_encode_impl.8} parent=63 // pred_fallthru
        _
    $region64: #{_encode_impl.8} parent=5 // pred_fallthru
      _
  $region6: #{_encode_impl.8} parent=0 // loop_footer
    %s19 = sadd.s32 1, %s15
  $region7: #{_encode_impl.8} parent=0 // loop_footer_branch
    %14 = sbr.rel target = $region3
  $region8: #{_encode_impl.8} parent=0 // loop_exit
    _

// kernel: _encode_impl.11
$region0: #{_encode_impl.11}
  #allocation0 [shape = 'u32[]', space=smem, size = 0x4, offset = 0x4, fixed_abs, tag = 'smem constant byte address 0x4 - core index']
  #allocation1 [shape = 'u32[72,128]{1,0:T(1,128)}', space=vmem, size = 0x9000, scoped, tag = 'internal scratch']
  %s0 = inlined_call_operand.vmem [shape: f32[2,32,4], index: 0, kind: input, shape index: {}]
  %s1 = inlined_call_operand.vmem [shape: f32[2,32,4], index: 1, kind: input, shape index: {}]
  %s2 = inlined_call_operand.vmem [shape: f32[32,32], index: 2, kind: input, shape index: {}]
  %s3 = inlined_call_operand.vmem [shape: f32[32,1], index: 3, kind: input, shape index: {}]
  %s4 = inlined_call_operand.vmem [shape: f32[32,32], index: 4, kind: input, shape index: {}]
  %s5 = inlined_call_operand.vmem [shape: f32[32,1], index: 5, kind: input, shape index: {}]
  %s6 = inlined_call_operand.vmem [shape: f32[2,32,4], index: 6, kind: output, shape index: {0}]
  %s7 = inlined_call_operand.vmem [shape: f32[2,1,1], index: 7, kind: output, shape index: {1}]
  %s8 = inlined_call_operand.vmem [shape: f32[2,1,1], index: 8, kind: output, shape index: {2}]
  %9 = xla_tuple %s6, %s7, %s8
  %s10 = sld [smem:[#allocation0]]
  $region77: #{_encode_impl.11} parent=0
    _
  %s12 = ssub.s32 1, %s10
  %s13 = scalar_select 0, %s12, %s10
  loop: start=0, step=1, limit=4
  $region2: #{_encode_impl.11} parent=0 // loop_pre_header
    _
  $region3: #{_encode_impl.11} parent=0 // loop_header
    %s15 = sphi 0, %s19
    %p16 = scmp.ge.s32.totalorder %s15, 4
    %s22 = sphi 0, %s34
    %s23 = sphi 0, %s30
    %s24 = sphi 0, %s22
    %s25 = sphi 0, %s23
    %s26 = sphi 0, %s24
    %s27 = sphi 0, %s25
    %s39 = sphi 0, %s41
    %s42 = sphi 0, %s39
    %s43 = sphi 0, %s42
    %s59 = sphi 0, %s43
    %s67 = sphi 0, %s69
    %s70 = sphi 0, %s67
    %s71 = sphi 0, %s70
    %s87 = sphi 0, %s71
    %s91 = sphi 0, %s91
    %s93 = sphi 0, %s91
    %s94 = sphi 0, %s93
    %s108 = sphi 0, %s94
    %s112 = sphi 0, %s112
    %s114 = sphi 0, %s112
    %s115 = sphi 0, %s114
    %s129 = sphi 0, %s115
    %s133 = sphi 0, %s133
    %s135 = sphi 0, %s133
    %s136 = sphi 0, %s135
    %s150 = sphi 0, %s136
    %s154 = sphi 0, %s154
    %s156 = sphi 0, %s154
    %s157 = sphi 0, %s156
    %s171 = sphi 0, %s157
    %s179 = sphi 0, %s181
    %s182 = sphi 0, %s179
    %s183 = sphi 0, %s182
    %s199 = sphi 0, %s183
    %s205 = sphi 0, %s207
    %s208 = sphi 0, %s205
    %s209 = sphi 0, %s208
    %s225 = sphi 0, %s209
    %s231 = sphi 0, %s233
    %s234 = sphi 0, %s231
    %s235 = sphi 0, %s234
    %s251 = sphi 0, %s235
  $region4: #{_encode_impl.11} parent=0 // loop_header_branch
    %18 = sbr.rel (%p16) target = $region8
  $region5: #{_encode_impl.11} parent=0 // loop_body
    %s20 = ssub.s32 %s15, 1
    %s21 = ssub.s32 %s15, 2
    %s28 = sadd.s32 1, %s23
    %p29 = scmp.ge.s32.totalorder %s28, 1
    %s30 = scalar_select %p29, 0, %s28
    %s31 = sadd.s32 1, %s22
    %s32 = scalar_select %p29, %s31, %s22
    %p33 = scmp.ge.s32.totalorder %s32, 2
    %s34 = scalar_select %p33, 0, %s32
    %s35 = ssub.s32 %s22, %s34
    %s36 = ssub.s32 %s23, %s30
    %s37 = sor.u32 %s35, %s36
    %p38 = scmp.eq.s32.totalorder %s37, 0
    %s40 = sadd.s32 %s39, 1
    %s41 = scalar_select %p38, %s39, %s40
    %p44 = pneg %p38
    %p45 = scmp.eq.s32.totalorder %s15, 1
    %p46 = por %p44, %p45
    %p47 = scmp.ne.s32.totalorder %s39, %s42
    %p48 = scmp.eq.s32.totalorder %s15, 0
    %p49 = por %p47, %p48
    %p50 = scmp.ne.s32.totalorder %s39, %s42
    %p51 = scmp.eq.s32.totalorder %s20, 1
    %p52 = por %p50, %p51
    %p53 = scmp.ne.s32.totalorder %s42, %s43
    %p54 = scmp.eq.s32.totalorder %s20, 0
    %p55 = por %p53, %p54
    %p56 = scmp.ne.s32.totalorder %s42, %s43
    %p57 = scmp.eq.s32.totalorder %s21, 1
    %p58 = por %p56, %p57
    %p60 = scmp.ne.s32.totalorder %s43, %s59
    %p61 = scmp.eq.s32.totalorder %s21, 0
    %p62 = por %p60, %p61
    %s63 = ssub.s32 %s22, %s34
    %s64 = ssub.s32 %s23, %s30
    %s65 = sor.u32 %s63, %s64
    %p66 = scmp.eq.s32.totalorder %s65, 0
    %s68 = sadd.s32 %s67, 1
    %s69 = scalar_select %p66, %s67, %s68
    %p72 = pneg %p66
    %p73 = scmp.eq.s32.totalorder %s15, 1
    %p74 = por %p72, %p73
    %p75 = scmp.ne.s32.totalorder %s67, %s70
    %p76 = scmp.eq.s32.totalorder %s15, 0
    %p77 = por %p75, %p76
    %p78 = scmp.ne.s32.totalorder %s67, %s70
    %p79 = scmp.eq.s32.totalorder %s20, 1
    %p80 = por %p78, %p79
    %p81 = scmp.ne.s32.totalorder %s70, %s71
    %p82 = scmp.eq.s32.totalorder %s20, 0
    %p83 = por %p81, %p82
    %p84 = scmp.ne.s32.totalorder %s70, %s71
    %p85 = scmp.eq.s32.totalorder %s21, 1
    %p86 = por %p84, %p85
    %p88 = scmp.ne.s32.totalorder %s71, %s87
    %p89 = scmp.eq.s32.totalorder %s21, 0
    %p90 = por %p88, %p89
    %s92 = sadd.s32 %s91, 1
    %p95 = scmp.eq.s32.totalorder %s15, 1
    %p96 = scmp.ne.s32.totalorder %s91, %s93
    %p97 = scmp.eq.s32.totalorder %s15, 0
    %p98 = por %p96, %p97
    %p99 = scmp.ne.s32.totalorder %s91, %s93
    %p100 = scmp.eq.s32.totalorder %s20, 1
    %p101 = por %p99, %p100
    %p102 = scmp.ne.s32.totalorder %s93, %s94
    %p103 = scmp.eq.s32.totalorder %s20, 0
    %p104 = por %p102, %p103
    %p105 = scmp.ne.s32.totalorder %s93, %s94
    %p106 = scmp.eq.s32.totalorder %s21, 1
    %p107 = por %p105, %p106
    %p109 = scmp.ne.s32.totalorder %s94, %s108
    %p110 = scmp.eq.s32.totalorder %s21, 0
    %p111 = por %p109, %p110
    %s113 = sadd.s32 %s112, 1
    %p116 = scmp.eq.s32.totalorder %s15, 1
    %p117 = scmp.ne.s32.totalorder %s112, %s114
    %p118 = scmp.eq.s32.totalorder %s15, 0
    %p119 = por %p117, %p118
    %p120 = scmp.ne.s32.totalorder %s112, %s114
    %p121 = scmp.eq.s32.totalorder %s20, 1
    %p122 = por %p120, %p121
    %p123 = scmp.ne.s32.totalorder %s114, %s115
    %p124 = scmp.eq.s32.totalorder %s20, 0
    %p125 = por %p123, %p124
    %p126 = scmp.ne.s32.totalorder %s114, %s115
    %p127 = scmp.eq.s32.totalorder %s21, 1
    %p128 = por %p126, %p127
    %p130 = scmp.ne.s32.totalorder %s115, %s129
    %p131 = scmp.eq.s32.totalorder %s21, 0
    %p132 = por %p130, %p131
    %s134 = sadd.s32 %s133, 1
    %p137 = scmp.eq.s32.totalorder %s15, 1
    %p138 = scmp.ne.s32.totalorder %s133, %s135
    %p139 = scmp.eq.s32.totalorder %s15, 0
    %p140 = por %p138, %p139
    %p141 = scmp.ne.s32.totalorder %s133, %s135
    %p142 = scmp.eq.s32.totalorder %s20, 1
    %p143 = por %p141, %p142
    %p144 = scmp.ne.s32.totalorder %s135, %s136
    %p145 = scmp.eq.s32.totalorder %s20, 0
    %p146 = por %p144, %p145
    %p147 = scmp.ne.s32.totalorder %s135, %s136
    %p148 = scmp.eq.s32.totalorder %s21, 1
    %p149 = por %p147, %p148
    %p151 = scmp.ne.s32.totalorder %s136, %s150
    %p152 = scmp.eq.s32.totalorder %s21, 0
    %p153 = por %p151, %p152
    %s155 = sadd.s32 %s154, 1
    %p158 = scmp.eq.s32.totalorder %s15, 1
    %p159 = scmp.ne.s32.totalorder %s154, %s156
    %p160 = scmp.eq.s32.totalorder %s15, 0
    %p161 = por %p159, %p160
    %p162 = scmp.ne.s32.totalorder %s154, %s156
    %p163 = scmp.eq.s32.totalorder %s20, 1
    %p164 = por %p162, %p163
    %p165 = scmp.ne.s32.totalorder %s156, %s157
    %p166 = scmp.eq.s32.totalorder %s20, 0
    %p167 = por %p165, %p166
    %p168 = scmp.ne.s32.totalorder %s156, %s157
    %p169 = scmp.eq.s32.totalorder %s21, 1
    %p170 = por %p168, %p169
    %p172 = scmp.ne.s32.totalorder %s157, %s171
    %p173 = scmp.eq.s32.totalorder %s21, 0
    %p174 = por %p172, %p173
    %s175 = ssub.s32 %s22, %s34
    %s176 = ssub.s32 %s23, %s30
    %s177 = sor.u32 %s175, %s176
    %p178 = scmp.eq.s32.totalorder %s177, 0
    %s180 = sadd.s32 %s179, 1
    %s181 = scalar_select %p178, %s179, %s180
    %p184 = pneg %p178
    %p185 = scmp.eq.s32.totalorder %s15, 1
    %p186 = por %p184, %p185
    %p187 = scmp.ne.s32.totalorder %s179, %s182
    %p188 = scmp.eq.s32.totalorder %s15, 0
    %p189 = por %p187, %p188
    %p190 = scmp.ne.s32.totalorder %s179, %s182
    %p191 = scmp.eq.s32.totalorder %s20, 1
    %p192 = por %p190, %p191
    %p193 = scmp.ne.s32.totalorder %s182, %s183
    %p194 = scmp.eq.s32.totalorder %s20, 0
    %p195 = por %p193, %p194
    %p196 = scmp.ne.s32.totalorder %s182, %s183
    %p197 = scmp.eq.s32.totalorder %s21, 1
    %p198 = por %p196, %p197
    %p200 = scmp.ne.s32.totalorder %s183, %s199
    %p201 = scmp.eq.s32.totalorder %s21, 0
    %p202 = por %p200, %p201
    %s203 = ssub.s32 %s22, %s34
    %p204 = scmp.eq.s32.totalorder %s203, 0
    %s206 = sadd.s32 %s205, 1
    %s207 = scalar_select %p204, %s205, %s206
    %p210 = pneg %p204
    %p211 = scmp.eq.s32.totalorder %s15, 1
    %p212 = por %p210, %p211
    %p213 = scmp.ne.s32.totalorder %s205, %s208
    %p214 = scmp.eq.s32.totalorder %s15, 0
    %p215 = por %p213, %p214
    %p216 = scmp.ne.s32.totalorder %s205, %s208
    %p217 = scmp.eq.s32.totalorder %s20, 1
    %p218 = por %p216, %p217
    %p219 = scmp.ne.s32.totalorder %s208, %s209
    %p220 = scmp.eq.s32.totalorder %s20, 0
    %p221 = por %p219, %p220
    %p222 = scmp.ne.s32.totalorder %s208, %s209
    %p223 = scmp.eq.s32.totalorder %s21, 1
    %p224 = por %p222, %p223
    %p226 = scmp.ne.s32.totalorder %s209, %s225
    %p227 = scmp.eq.s32.totalorder %s21, 0
    %p228 = por %p226, %p227
    %s229 = ssub.s32 %s22, %s34
    %p230 = scmp.eq.s32.totalorder %s229, 0
    %s232 = sadd.s32 %s231, 1
    %s233 = scalar_select %p230, %s231, %s232
    %p236 = pneg %p230
    %p237 = scmp.eq.s32.totalorder %s15, 1
    %p238 = por %p236, %p237
    %p239 = scmp.ne.s32.totalorder %s231, %s234
    %p240 = scmp.eq.s32.totalorder %s15, 0
    %p241 = por %p239, %p240
    %p242 = scmp.ne.s32.totalorder %s231, %s234
    %p243 = scmp.eq.s32.totalorder %s20, 1
    %p244 = por %p242, %p243
    %p245 = scmp.ne.s32.totalorder %s234, %s235
    %p246 = scmp.eq.s32.totalorder %s20, 0
    %p247 = por %p245, %p246
    %p248 = scmp.ne.s32.totalorder %s234, %s235
    %p249 = scmp.eq.s32.totalorder %s21, 1
    %p250 = por %p248, %p249
    %p252 = scmp.ne.s32.totalorder %s235, %s251
    %p253 = scmp.eq.s32.totalorder %s21, 0
    %p254 = por %p252, %p253
    %p255 = scmp.le.s32.totalorder 1, %s15
    %p256 = scmp.lt.s32.totalorder %s15, 3
    %p257 = pnand %p255, %p256
    %p258 = pneg %p257
    // Predicated region
    $region9: #{_encode_impl.11} parent=5 // pred_check
      _
    $region10: #{_encode_impl.11} parent=5 // pred_check_branch
      %260 = sbr.rel (%p257) target = $region12
    $region11: #{_encode_impl.11} parent=5 // pred_region
      %s261 = ssub.s32 %s15, 1
      // Predicated region
      $region13: #{_encode_impl.11} parent=11 // pred_check
        %p262 = pneg %p104
      $region14: #{_encode_impl.11} parent=11 // pred_check_branch
        %264 = sbr.rel (%p262) target = $region16
      $region15: #{_encode_impl.11} parent=11 // pred_region
        _
      $region16: #{_encode_impl.11} parent=11 // pred_fallthru
        _
      // Predicated region
      $region17: #{_encode_impl.11} parent=11 // pred_check
        %p265 = pneg %p125
      $region18: #{_encode_impl.11} parent=11 // pred_check_branch
        %267 = sbr.rel (%p265) target = $region20
      $region19: #{_encode_impl.11} parent=11 // pred_region
        _
      $region20: #{_encode_impl.11} parent=11 // pred_fallthru
        _
      // Predicated region
      $region21: #{_encode_impl.11} parent=11 // pred_check
        %p268 = pneg %p146
      $region22: #{_encode_impl.11} parent=11 // pred_check_branch
        %270 = sbr.rel (%p268) target = $region24
      $region23: #{_encode_impl.11} parent=11 // pred_region
        _
      $region24: #{_encode_impl.11} parent=11 // pred_fallthru
        _
      // Predicated region
      $region25: #{_encode_impl.11} parent=11 // pred_check
        %p271 = pneg %p167
      $region26: #{_encode_impl.11} parent=11 // pred_check_branch
        %273 = sbr.rel (%p271) target = $region28
      $region27: #{_encode_impl.11} parent=11 // pred_region
        _
      $region28: #{_encode_impl.11} parent=11 // pred_fallthru
        _
    $region12: #{_encode_impl.11} parent=5 // pred_fallthru
      _
    %p274 = scmp.lt.s32.totalorder %s15, 2
    // Predicated region
    $region29: #{_encode_impl.11} parent=5 // pred_check
      %p275 = pneg %p274
    $region30: #{_encode_impl.11} parent=5 // pred_check_branch
      %277 = sbr.rel (%p275) target = $region32
    $region31: #{_encode_impl.11} parent=5 // pred_region
      // Predicated region
      $region33: #{_encode_impl.11} parent=31 // pred_check
        %p278 = pneg %p49
      $region34: #{_encode_impl.11} parent=31 // pred_check_branch
        %280 = sbr.rel (%p278) target = $region36
      $region35: #{_encode_impl.11} parent=31 // pred_region
        %p281 = scmp.lt.s32.totalorder %s22, 1
        %s282 = scalar_select %p281, %s22, 1
        %p283 = scmp.lt.s32.totalorder %s23, 0
        %s284 = scalar_select %p283, %s23, 0
        %s285 = smul.addr %s282, 4
        %s286 = sadd.s32 %s284, %s285
        %s287 = smul.addr %s286, 8
        %s288 = scalar_lea.vmem %s0, %s287
      $region36: #{_encode_impl.11} parent=31 // pred_fallthru
        _
      // Predicated region
      $region37: #{_encode_impl.11} parent=31 // pred_check
        %p289 = pneg %p77
      $region38: #{_encode_impl.11} parent=31 // pred_check_branch
        %291 = sbr.rel (%p289) target = $region40
      $region39: #{_encode_impl.11} parent=31 // pred_region
        %p292 = scmp.lt.s32.totalorder %s22, 1
        %s293 = scalar_select %p292, %s22, 1
        %p294 = scmp.lt.s32.totalorder %s23, 0
        %s295 = scalar_select %p294, %s23, 0
        %s296 = smul.addr %s293, 4
        %s297 = sadd.s32 %s295, %s296
        %s298 = smul.addr %s297, 8
        %s299 = scalar_lea.vmem %s1, %s298
      $region40: #{_encode_impl.11} parent=31 // pred_fallthru
        _
    $region32: #{_encode_impl.11} parent=5 // pred_fallthru
      _
    %p300 = scmp.le.s32.totalorder 1, %s15
    %p301 = scmp.lt.s32.totalorder %s15, 3
    %p302 = pnand %p300, %p301
    %p303 = pneg %p302
    // Predicated region
    $region41: #{_encode_impl.11} parent=5 // pred_check
      _
    $region42: #{_encode_impl.11} parent=5 // pred_check_branch
      %305 = sbr.rel (%p302) target = $region44
    $region43: #{_encode_impl.11} parent=5 // pred_region
      %s306 = ssub.s32 %s15, 1
      %p307 = scmp.lt.s32.totalorder %s24, 1
      %s308 = scalar_select %p307, %s24, 1
      %p309 = scmp.lt.s32.totalorder %s25, 0
      %s310 = scalar_select %p309, %s25, 0
      %s311 = smul.addr %s308, 4
      %s312 = sadd.s32 %s310, %s311
      %s313 = smul.addr %s312, 8
      %s314 = scalar_lea.vmem %s0, %s313
      %p315 = pneg %p55
      %p316 = pneg %p52
      %p317 = scmp.lt.s32.totalorder %s24, 1
      %s318 = scalar_select %p317, %s24, 1
      %p319 = scmp.lt.s32.totalorder %s25, 0
      %s320 = scalar_select %p319, %s25, 0
      %s321 = smul.addr %s318, 4
      %s322 = sadd.s32 %s320, %s321
      %s323 = smul.addr %s322, 8
      %s324 = scalar_lea.vmem %s1, %s323
      %p325 = pneg %p83
      %p326 = pneg %p80
      %p327 = pneg %p104
      %p328 = pneg %p101
      %p329 = pneg %p125
      %p330 = pneg %p122
      %p331 = pneg %p146
      %p332 = pneg %p143
      %p333 = pneg %p167
      %p334 = pneg %p164
      %p335 = pneg %p195
      %p336 = pneg %p192
      %p337 = scmp.lt.s32.totalorder %s24, 1
      %s338 = scalar_select %p337, %s24, 1
      %p339 = scmp.lt.s32.totalorder %s25, 0
      %s340 = scalar_select %p339, %s25, 0
      %s341 = smul.addr %s338, 4
      %s342 = sadd.s32 %s340, %s341
      %s343 = smul.addr %s342, 8
      %s344 = scalar_lea.vmem %s6, %s343
      %p345 = pneg %p221
      %p346 = pneg %p218
      %p347 = scmp.lt.s32.totalorder %s24, 1
      %s348 = scalar_select %p347, %s24, 1
      %s349 = scalar_lea.vmem %s7, %s348
      %p350 = pneg %p247
      %p351 = pneg %p244
      %p352 = scmp.lt.s32.totalorder %s24, 1
      %s353 = scalar_select %p352, %s24, 1
      %s354 = scalar_lea.vmem %s8, %s353
      %p355 = scmp.lt.s32.totalorder %s24, 1
      %s356 = scalar_select %p355, %s24, 1
      %p357 = scmp.lt.s32.totalorder %s25, 0
      %s358 = scalar_select %p357, %s25, 0
      %s359 = smul.addr %s356, 4
      %s360 = sadd.s32 %s358, %s359
      %s361 = smul.addr %s360, 8
      %s362 = scalar_lea.vmem %s0, %s361
      %p363 = scmp.lt.s32.totalorder %s24, 1
      %s364 = scalar_select %p363, %s24, 1
      %p365 = scmp.lt.s32.totalorder %s25, 0
      %s366 = scalar_select %p365, %s25, 0
      %s367 = smul.addr %s364, 4
      %s368 = sadd.s32 %s366, %s367
      %s369 = smul.addr %s368, 8
      %s370 = scalar_lea.vmem %s1, %s369
      %p371 = scmp.lt.s32.totalorder %s24, 1
      %s372 = scalar_select %p371, %s24, 1
      %p373 = scmp.lt.s32.totalorder %s25, 0
      %s374 = scalar_select %p373, %s25, 0
      %s375 = smul.addr %s372, 4
      %s376 = sadd.s32 %s374, %s375
      %s377 = smul.addr %s376, 8
      %s378 = scalar_lea.vmem %s6, %s377
      %p379 = scmp.lt.s32.totalorder %s24, 1
      %s380 = scalar_select %p379, %s24, 1
      %s381 = scalar_lea.vmem %s7, %s380
      %p382 = scmp.lt.s32.totalorder %s24, 1
      %s383 = scalar_select %p382, %s24, 1
      %s384 = scalar_lea.vmem %s8, %s383
      %v385 = vld [vmem:[%s362] sm:$0xff]
      %v386 = vld [vmem:[%s362 + $0x8] sm:$0xff]
      %v387 = vld [vmem:[%s362 + $0x10] sm:$0xff]
      %v388 = vld [vmem:[%s362 + $0x18] sm:$0xff]
      %v389 = vld [vmem:[%s370] sm:$0xff]
      %v390 = vld [vmem:[%s370 + $0x8] sm:$0xff]
      %v391 = vld [vmem:[%s370 + $0x10] sm:$0xff]
      %v392 = vld [vmem:[%s370 + $0x18] sm:$0xff]
      %v393 = vld [vmem:[%s2] sm:$0xff]
      %v394 = vld [vmem:[%s2 + $0x8] sm:$0xff]
      %v395 = vld [vmem:[%s2 + $0x10] sm:$0xff]
      %v396 = vld [vmem:[%s2 + $0x18] sm:$0xff]
      %v397 = vld [vmem:[%s3] sm:$0xff]
      %v398 = vld [vmem:[%s3 + $0x8] sm:$0xff]
      %v399 = vld [vmem:[%s3 + $0x10] sm:$0xff]
      %v400 = vld [vmem:[%s3 + $0x18] sm:$0xff]
      %402 = vset.pattern.permute.xlu0 0
      %403 = vperm.xlu0 %402, %v397
      %v404 = vpop.permute.xlu0 %403
      %407 = vset.pattern.permute.xlu0 0
      %408 = vperm.xlu0 %407, %v398
      %v409 = vpop.permute.xlu0 %408
      %412 = vset.pattern.permute.xlu0 0
      %413 = vperm.xlu0 %412, %v399
      %v414 = vpop.permute.xlu0 %413
      %417 = vset.pattern.permute.xlu0 0
      %418 = vperm.xlu0 %417, %v400
      %v419 = vpop.permute.xlu0 %418
      %vm421 = vcmask 261120
      %v423 = vsel %vm421, %v393, 0
      %v426 = vsel %vm421, %v394, 0
      %v429 = vsel %vm421, %v395, 0
      %v432 = vsel %vm421, %v396, 0
      %434 = vmatpush.msra.mxu0 0.0
      %435 = vmatpush.msra.mxu0 0.0
      %436 = vmatpush.msra.mxu0 0.0
      %437 = vmatpush.msra.mxu0 0.0
      %438 = vmatpush.msra.mxu0 0.0
      %439 = vmatpush.msra.mxu0 0.0
      %440 = vmatpush.msra.mxu0 0.0
      %441 = vmatpush.msra.mxu0 0.0
      %442 = vmatpush.msra.mxu0 0.0
      %443 = vmatpush.msra.mxu0 0.0
      %444 = vmatpush.msra.mxu0 0.0
      %445 = vmatpush.msra.mxu0 0.0
      %446 = vmatpush.msra.mxu0 %v392
      %447 = vmatpush.msra.mxu0 %v391
      %448 = vmatpush.msra.mxu0 %v390
      %449 = vmatpush.msra.mxu0 %v389
      %450 = vmatmul.f32.gmra.mxu0 %v423
      %v451 = vpop.f32.mrf.mxu0
      %v452 = vadd.f32 %v404, %v451
      %453 = vmatmul.f32.gmra.mxu0 %v426
      %v454 = vpop.f32.mrf.mxu0
      %v455 = vadd.f32 %v409, %v454
      %456 = vmatmul.f32.gmra.mxu0 %v429
      %v457 = vpop.f32.mrf.mxu0
      %v458 = vadd.f32 %v414, %v457
      %459 = vmatmul.f32.gmra.mxu0 %v432
      %v460 = vpop.f32.mrf.mxu0
      %v461 = vadd.f32 %v419, %v460
      %462 = vdwg.mxu0
      %v463 = vld [vmem:[%s4] sm:$0xff]
      %v464 = vld [vmem:[%s4 + $0x8] sm:$0xff]
      %v465 = vld [vmem:[%s4 + $0x10] sm:$0xff]
      %v466 = vld [vmem:[%s4 + $0x18] sm:$0xff]
      %v467 = vld [vmem:[%s5] sm:$0xff]
      %v468 = vld [vmem:[%s5 + $0x8] sm:$0xff]
      %v469 = vld [vmem:[%s5 + $0x10] sm:$0xff]
      %v470 = vld [vmem:[%s5 + $0x18] sm:$0xff]
      %472 = vset.pattern.permute.xlu0 0
      %473 = vperm.xlu0 %472, %v467
      %v474 = vpop.permute.xlu0 %473
      %477 = vset.pattern.permute.xlu0 0
      %478 = vperm.xlu0 %477, %v468
      %v479 = vpop.permute.xlu0 %478
      %482 = vset.pattern.permute.xlu0 0
      %483 = vperm.xlu0 %482, %v469
      %v484 = vpop.permute.xlu0 %483
      %487 = vset.pattern.permute.xlu0 0
      %488 = vperm.xlu0 %487, %v470
      %v489 = vpop.permute.xlu0 %488
      %v492 = vsel %vm421, %v463, 0
      %v495 = vsel %vm421, %v464, 0
      %v498 = vsel %vm421, %v465, 0
      %v501 = vsel %vm421, %v466, 0
      %503 = vmatpush.msra.mxu0 0.0
      %504 = vmatpush.msra.mxu0 0.0
      %505 = vmatpush.msra.mxu0 0.0
      %506 = vmatpush.msra.mxu0 0.0
      %507 = vmatpush.msra.mxu0 0.0
      %508 = vmatpush.msra.mxu0 0.0
      %509 = vmatpush.msra.mxu0 0.0
      %510 = vmatpush.msra.mxu0 0.0
      %511 = vmatpush.msra.mxu0 0.0
      %512 = vmatpush.msra.mxu0 0.0
      %513 = vmatpush.msra.mxu0 0.0
      %514 = vmatpush.msra.mxu0 0.0
      %515 = vmatpush.msra.mxu0 %v392
      %516 = vmatpush.msra.mxu0 %v391
      %517 = vmatpush.msra.mxu0 %v390
      %518 = vmatpush.msra.mxu0 %v389
      %519 = vmatmul.f32.gmra.mxu0 %v492
      %v520 = vpop.f32.mrf.mxu0
      %v521 = vadd.f32 %v474, %v520
      %522 = vmatmul.f32.gmra.mxu0 %v495
      %v523 = vpop.f32.mrf.mxu0
      %v524 = vadd.f32 %v479, %v523
      %525 = vmatmul.f32.gmra.mxu0 %v498
      %v526 = vpop.f32.mrf.mxu0
      %v527 = vadd.f32 %v484, %v526
      %528 = vmatmul.f32.gmra.mxu0 %v501
      %v529 = vpop.f32.mrf.mxu0
      %v530 = vadd.f32 %v489, %v529
      %531 = vdwg.mxu0
      %v532 = vtanh.pop %v452
      %v533 = vtanh.pop %v455
      %v534 = vtanh.pop %v458
      %v535 = vtanh.pop %v461
      %v536 = vmul.f32 %v532, 0.5
      %v537 = vmul.f32 %v533, 0.5
      %v538 = vmul.f32 %v534, 0.5
      %v539 = vmul.f32 %v535, 0.5
      %v540 = vmul.f32 %v536, 1.442695
      %v541 = vpow.pop %v540
      %v542 = vmul.f32 %v537, 1.442695
      %v543 = vpow.pop %v542
      %v544 = vmul.f32 %v538, 1.442695
      %v545 = vpow.pop %v544
      %v546 = vmul.f32 %v539, 1.442695
      %v547 = vpow.pop %v546
      %v548 = vmul.f32 %v385, %v541
      %v549 = vmul.f32 %v386, %v543
      %v550 = vmul.f32 %v387, %v545
      %v551 = vmul.f32 %v388, %v547
      %v552 = vadd.f32 %v548, %v521
      %v553 = vadd.f32 %v549, %v524
      %v554 = vadd.f32 %v550, %v527
      %v555 = vadd.f32 %v551, %v530
      %vm556 = vcmask 31744
      %557 = vst.msk [vmem:[%s378] sm:$0xff] %vm556, %v552
      %558 = vst.msk [vmem:[%s378 + $0x8] sm:$0xff] %vm556, %v553
      %559 = vst.msk [vmem:[%s378 + $0x10] sm:$0xff] %vm556, %v554
      %560 = vst.msk [vmem:[%s378 + $0x18] sm:$0xff] %vm556, %v555
      %v561 = vsel %vm556, %v536, 0.0
      %v562 = vsel %vm556, %v537, 0.0
      %v563 = vadd.f32 %v561, %v562
      %v564 = vsel %vm556, %v538, 0.0
      %v565 = vadd.f32 %v563, %v564
      %v566 = vsel %vm556, %v539, 0.0
      %v567 = vadd.f32 %v565, %v566
      %568 = vadd.xlane.f32.xlu0 %v567
      %v569 = vpop.xlane.xlu0 %568
      %v570 = vrot.slane %v569, 4
      %v571 = vadd.f32 %v569, %v570
      %v572 = vrot.slane %v571, 2
      %v573 = vadd.f32 %v571, %v572
      %v574 = vrot.slane %v573, 1
      %v575 = vadd.f32 %v573, %v574
      %s576 = vtos %v575
      %v577 = vmul.f32 %v552, %v552
      %v578 = vmul.f32 %v553, %v553
      %v579 = vmul.f32 %v554, %v554
      %v580 = vmul.f32 %v555, %v555
      %v581 = vsel %vm556, %v577, 0.0
      %v582 = vsel %vm556, %v578, 0.0
      %v583 = vadd.f32 %v581, %v582
      %v584 = vsel %vm556, %v579, 0.0
      %v585 = vadd.f32 %v583, %v584
      %v586 = vsel %vm556, %v580, 0.0
      %v587 = vadd.f32 %v585, %v586
      %588 = vadd.xlane.f32.xlu0 %v587
      %v589 = vpop.xlane.xlu0 %588
      %v590 = vrot.slane %v589, 4
      %v591 = vadd.f32 %v589, %v590
      %v592 = vrot.slane %v591, 2
      %v593 = vadd.f32 %v591, %v592
      %v594 = vrot.slane %v593, 1
      %v595 = vadd.f32 %v593, %v594
      %s596 = vtos %v595
      %s597 = smul.f32 %s596, -0.5
      %s598 = ssub.f32 %s597, 117.62413
      %p599 = scmp.eq.s32.totalorder %s25, 0
      // Predicated region
      $region45: #{_encode_impl.11} parent=43 // pred_check
        %p600 = pneg %p599
      $region46: #{_encode_impl.11} parent=43 // pred_check_branch
        %602 = sbr.rel (%p600) target = $region48
      $region47: #{_encode_impl.11} parent=43 // pred_region
        %vm603 = vcmask 0
        %604 = vst.msk [vmem:[%s381] sm:$0x1] %vm603, 0.0
        %605 = vst.msk [vmem:[%s384] sm:$0x1] %vm603, 0.0
      $region48: #{_encode_impl.11} parent=43 // pred_fallthru
        _
      %v606 = vld [vmem:[%s381] sm:$0x1]
      %v607 = vstv %s576
      %v608 = vadd.f32 %v606, %v607
      %vm609 = vcmask 0
      %610 = vst.msk [vmem:[%s381] sm:$0x1] %vm609, %v608
      %v611 = vld [vmem:[%s384] sm:$0x1]
      %v612 = vstv %s598
      %v613 = vadd.f32 %v611, %v612
      %614 = vst.msk [vmem:[%s384] sm:$0x1] %vm609, %v613
      %p615 = scmp.lt.s32.totalorder %s24, 1
      %s616 = scalar_select %p615, %s24, 1
      %p617 = scmp.lt.s32.totalorder %s25, 0
      %s618 = scalar_select %p617, %s25, 0
      %s619 = smul.addr %s616, 4
      %s620 = sadd.s32 %s618, %s619
      %s621 = smul.addr %s620, 8
      %s622 = scalar_lea.vmem %s6, %s621
      %p623 = scmp.lt.s32.totalorder %s24, 1
      %s624 = scalar_select %p623, %s24, 1
      %s625 = scalar_lea.vmem %s7, %s624
      %p626 = scmp.lt.s32.totalorder %s24, 1
      %s627 = scalar_select %p626, %s24, 1
      %s628 = scalar_lea.vmem %s8, %s627
      // Predicated region
      $region49: #{_encode_impl.11} parent=43 // pred_check
        %p629 = pneg %p192
      $region50: #{_encode_impl.11} parent=43 // pred_check_branch
        %631 = sbr.rel (%p629) target = $region52
      $region51: #{_encode_impl.11} parent=43 // pred_region
        _
      $region52: #{_encode_impl.11} parent=43 // pred_fallthru
        _
      // Predicated region
      $region53: #{_encode_impl.11} parent=43 // pred_check
        %p632 = pneg %p218
      $region54: #{_encode_impl.11} parent=43 // pred_check_branch
        %634 = sbr.rel (%p632) target = $region56
      $region55: #{_encode_impl.11} parent=43 // pred_region
        _
      $region56: #{_encode_impl.11} parent=43 // pred_fallthru
        _
      // Predicated region
      $region57: #{_encode_impl.11} parent=43 // pred_check
        %p635 = pneg %p244
      $region58: #{_encode_impl.11} parent=43 // pred_check_branch
        %637 = sbr.rel (%p635) target = $region60
      $region59: #{_encode_impl.11} parent=43 // pred_region
        _
      $region60: #{_encode_impl.11} parent=43 // pred_fallthru
        _
    $region44: #{_encode_impl.11} parent=5 // pred_fallthru
      _
    %p638 = scmp.le.s32.totalorder 2, %s15
    // Predicated region
    $region61: #{_encode_impl.11} parent=5 // pred_check
      %p639 = pneg %p638
    $region62: #{_encode_impl.11} parent=5 // pred_check_branch
      %641 = sbr.rel (%p639) target = $region64
    $region63: #{_encode_impl.11} parent=5 // pred_region
      %s642 = ssub.s32 %s15, 2
      // Predicated region
      $region65: #{_encode_impl.11} parent=63 // pred_check
        %p643 = pneg %p198
      $region66: #{_encode_impl.11} parent=63 // pred_check_branch
        %645 = sbr.rel (%p643) target = $region68
      $region67: #{_encode_impl.11} parent=63 // pred_region
        %p646 = scmp.lt.s32.totalorder %s26, 1
        %s647 = scalar_select %p646, %s26, 1
        %p648 = scmp.lt.s32.totalorder %s27, 0
        %s649 = scalar_select %p648, %s27, 0
        %s650 = smul.addr %s647, 4
        %s651 = sadd.s32 %s649, %s650
        %s652 = smul.addr %s651, 8
        %s653 = scalar_lea.vmem %s6, %s652
      $region68: #{_encode_impl.11} parent=63 // pred_fallthru
        _
      // Predicated region
      $region69: #{_encode_impl.11} parent=63 // pred_check
        %p654 = pneg %p224
      $region70: #{_encode_impl.11} parent=63 // pred_check_branch
        %656 = sbr.rel (%p654) target = $region72
      $region71: #{_encode_impl.11} parent=63 // pred_region
        %p657 = scmp.lt.s32.totalorder %s26, 1
        %s658 = scalar_select %p657, %s26, 1
        %s659 = scalar_lea.vmem %s7, %s658
      $region72: #{_encode_impl.11} parent=63 // pred_fallthru
        _
      // Predicated region
      $region73: #{_encode_impl.11} parent=63 // pred_check
        %p660 = pneg %p250
      $region74: #{_encode_impl.11} parent=63 // pred_check_branch
        %662 = sbr.rel (%p660) target = $region76
      $region75: #{_encode_impl.11} parent=63 // pred_region
        %p663 = scmp.lt.s32.totalorder %s26, 1
        %s664 = scalar_select %p663, %s26, 1
        %s665 = scalar_lea.vmem %s8, %s664
      $region76: #{_encode_impl.11} parent=63 // pred_fallthru
        _
    $region64: #{_encode_impl.11} parent=5 // pred_fallthru
      _
  $region6: #{_encode_impl.11} parent=0 // loop_footer
    %s19 = sadd.s32 1, %s15
  $region7: #{_encode_impl.11} parent=0 // loop_footer_branch
    %14 = sbr.rel target = $region3
  $region8: #{_encode_impl.11} parent=0 // loop_exit
    _

</llo_original>
